<compile_context>
chip_gen: v7x
topology: tpu7x:2x2x1
jax: 0.10.0
libtpu: 0.0.40
codegen_flags: <defaults>
</compile_context>

<pallas_src>
import numpy as np
import jax
import jax.numpy as jnp
from jax.experimental import pallas as pl
from jax.experimental.pallas import tpu as pltpu


_EPS = 1e-7
_NUM_CLASSES = 10
_PADDED_CLASSES = 128          # lane-dense output width (multiple of 128)
# Distinct per-layer salts for the hash-based PRNG stream.
_LAYER_SALT = (0x243F6A88, 0x85A308D3, 0x13198A2E, 0x03707344)


def _round_up(n, m):
    return (n + m - 1) // m * m


def _hash_uniform(shape, base_u32):
    """Uniform [0,1) f32 noise from a portable integer hash (lowbias32).

    Pure iota / xor / shift / mul ops: lowers on Mosaic TPU and in interpret mode
    (no pltpu.prng_* / bitcast needed).  ~VPU work only, no HBM traffic.
    """
    rows = jax.lax.broadcasted_iota(jnp.int32, shape, 0)
    cols = jax.lax.broadcasted_iota(jnp.int32, shape, 1)
    lin = (rows * shape[1] + cols).astype(jnp.uint32)
    x = base_u32 + lin
    x = x ^ (x >> 16)
    x = x * jnp.uint32(0x7FEB352D)
    x = x ^ (x >> 15)
    x = x * jnp.uint32(0x846CA68B)
    x = x ^ (x >> 16)
    mant = (x >> 9).astype(jnp.int32)                       # 23 random bits < 2^23
    return mant.astype(jnp.float32) * jnp.float32(1.0 / (1 << 23))


def _keep_factor(u, c10):
    """ConcreteDropout retain factor (1 - drop_prob), temp = 0.1.

    drop_prob = sigmoid((logit(p) + logit(u)) / temp)
              = 1 / (1 + c10 * ((1-u+eps)/(u+eps))**10),  c10 = ((1-p+eps)/(p+eps))**10
    =>  keep  = c10*(1-u+eps)**10 / ((u+eps)**10 + c10*(1-u+eps)**10)
    One divide + a few muls (repeated squaring); no logs/exp/sigmoid per element.
    Underflow of either power collapses gracefully to keep=1 or keep=0.
    """
    a = u + _EPS
    b = 1.0 - u + _EPS
    a2 = a * a; a4 = a2 * a2; a8 = a4 * a4; a10 = a8 * a2
    b2 = b * b; b4 = b2 * b2; b8 = b4 * b4; b10 = b8 * b2
    cb = c10 * b10
    return cb / (a10 + cb)


def _net_kernel(seed_ref, c10_ref, x_ref,
                w1_ref, b1_ref, w2_ref, b2_ref,
                w3_ref, b3_ref, w4_ref, b4_ref,
                o_ref):
    tile = pl.program_id(0)
    base = (seed_ref[0].astype(jnp.uint32)
            + tile.astype(jnp.uint32) * jnp.uint32(0x9E3779B9))

    def dropped(h, layer):
        # h: f32 (or bf16 input tile); mask math in f32, output cast bf16 for MXU.
        u = _hash_uniform(h.shape, base + jnp.uint32(_LAYER_SALT[layer]))
        keep = _keep_factor(u, c10_ref[layer])
        # NOTE: the 1/(1-p) rescale is pre-folded into the weights in the wrapper.
        return (h * keep).astype(jnp.bfloat16)

    def linear(h_bf16, w_ref, b_ref):
        y = jnp.dot(h_bf16, w_ref[...], preferred_element_type=jnp.float32)
        return y + b_ref[...]

    h = x_ref[...]                                                  # bf16 (bB, 784)
    h = jnp.maximum(linear(dropped(h, 0), w1_ref, b1_ref), 0.0)
    h = jnp.maximum(linear(dropped(h, 1), w2_ref, b2_ref), 0.0)
    h = jnp.maximum(linear(dropped(h, 2), w3_ref, b3_ref), 0.0)
    logits = linear(dropped(h, 3), w4_ref, b4_ref)                  # (bB, 128) f32

    # Numerically-stable softmax over the 10 real classes; padded lanes masked.
    col = jax.lax.broadcasted_iota(jnp.int32, logits.shape, 1)
    logits = jnp.where(col < _NUM_CLASSES, logits, -1e30)
    m = jnp.max(logits, axis=1, keepdims=True)
    e = jnp.exp(logits - m)
    o_ref[...] = (e / jnp.sum(e, axis=1, keepdims=True)).astype(o_ref.dtype)


def init_params(key):
    """Synthetic init matching the module's shapes (784->512->512->512->10).

    p_logit init: uniform(init_min, init_max) with init_min == init_max == logit(0.1).
    """
    dims = [(784, 512), (512, 512), (512, 512), (512, _NUM_CLASSES)]
    p_logit_init = float(np.log(0.1) - np.log(1.0 - 0.1))          # logit(0.1)
    ws, bs = [], []
    for i, (d_in, d_out) in enumerate(dims):
        kw, kb = jax.random.split(jax.random.fold_in(key, i))
        bound = 1.0 / np.sqrt(d_in)
        ws.append(jax.random.uniform(kw, (d_in, d_out), jnp.float32, -bound, bound))
        bs.append(jax.random.uniform(kb, (1, d_out), jnp.float32, -bound, bound))
    p_logits = jnp.full((4,), p_logit_init, dtype=jnp.float32)
    return ws, bs, p_logits


def net_forward(x, params, seed):
    """Full Net forward.  x: anything reshapeable to [-1, 784]."""
    ws, bs, p_logits = params
    x = x.reshape(-1, 784)
    B = x.shape[0]

    # --- per-layer ConcreteDropout scalars, computed ONCE in the wrapper ---
    p = jax.nn.sigmoid(p_logits)                                    # (4,)
    c10 = (((1.0 - p + _EPS) / (p + _EPS)) ** 10).astype(jnp.float32)
    inv_retain = 1.0 / (1.0 - p)                                    # (4,)

    # Fold the retain rescale into the weights: (x*mask/(1-p)) @ W == (x*mask) @ (W/(1-p)).
    ws_k = [(w * inv_retain[i]).astype(jnp.bfloat16) for i, w in enumerate(ws)]
    bs_k = [b.astype(jnp.float32) for b in bs]
    pad = _PADDED_CLASSES - ws_k[-1].shape[1]                       # lane-pad last layer
    ws_k[-1] = jnp.pad(ws_k[-1], ((0, 0), (0, pad)))
    bs_k[-1] = jnp.pad(bs_k[-1], ((0, 0), (0, pad)))

    # bf16 input DMA (matmul consumes bf16 anyway; halves input HBM traffic).
    x = x.astype(jnp.bfloat16)

    # Batch tiling: <=256 rows/tile; >=2 grid steps for medium batches so both
    # v7x TensorCores get work; min 8 sublanes.
    if B >= 512:
        block_b = 256
    elif B >= 16:
        block_b = _round_up((B + 1) // 2, 8)
    else:
        block_b = _round_up(max(B, 1), 8)
    Bp = _round_up(B, block_b)
    if Bp != B:
        x = jnp.pad(x, ((0, Bp - B), (0, 0)))

    seed_arr = jnp.asarray([seed], dtype=jnp.int32)

    smem = pl.BlockSpec(memory_space=pltpu.MemorySpace.SMEM)

    def resident(a):
        # Full-array block with constant index_map -> stays VMEM-resident across grid.
        return pl.BlockSpec(a.shape, lambda i: (0, 0))

    out = pl.pallas_call(
        _net_kernel,
        out_shape=jax.ShapeDtypeStruct((Bp, _PADDED_CLASSES), jnp.float32),
        grid=(Bp // block_b,),
        in_specs=[
            smem,                                              # seed (1,) int32
            smem,                                              # c10  (4,) f32
            pl.BlockSpec((block_b, 784), lambda i: (i, 0)),    # x tile (bf16)
            resident(ws_k[0]), resident(bs_k[0]),              # layer 1
            resident(ws_k[1]), resident(bs_k[1]),              # layer 2
            resident(ws_k[2]), resident(bs_k[2]),              # layer 3
            resident(ws_k[3]), resident(bs_k[3]),              # layer 4 (padded to 128)
        ],
        out_specs=pl.BlockSpec((block_b, _PADDED_CLASSES), lambda i: (i, 0)),
        compiler_params=pltpu.CompilerParams(
            dimension_semantics=("parallel",)),
    )(seed_arr, c10, x,
      ws_k[0], bs_k[0], ws_k[1], bs_k[1], ws_k[2], bs_k[2], ws_k[3], bs_k[3])

    return out[:B, :_NUM_CLASSES]


# TODO(synk): regularisation_loss() (training-time regularizer) is not part of the
# forward pass and is not implemented as a kernel.

if __name__ == "__main__":
    key = jax.random.PRNGKey(0)
    k_x, k_params = jax.random.split(key)

    batch = 2
    x = jax.random.normal(k_x, (batch, 1, 28, 28), dtype=jnp.float32)
    params = init_params(k_params)

    out = net_forward(x, params, seed=1234)
    out = jax.block_until_ready(out)

    assert out.shape == (batch, _NUM_CLASSES)
    assert bool(jnp.all(jnp.isfinite(out)))
    # softmax rows sum to 1
    assert bool(jnp.all(jnp.abs(jnp.sum(out, axis=1) - 1.0) < 1e-3))
    print("KERNEL_OK")
</pallas_src>

<mosaic_0001>
module attributes {stable_mosaic.version = 11 : i64} {
  func.func @_net_kernel(%arg0: i32, %arg1: memref<1xi32, #tpu.memory_space<smem>>, %arg2: memref<4xf32, #tpu.memory_space<smem>>, %arg3: memref<8x784xbf16, #tpu.memory_space<vmem>>, %arg4: memref<784x512xbf16, #tpu.memory_space<vmem>>, %arg5: memref<1x512xf32, #tpu.memory_space<vmem>>, %arg6: memref<512x512xbf16, #tpu.memory_space<vmem>>, %arg7: memref<1x512xf32, #tpu.memory_space<vmem>>, %arg8: memref<512x512xbf16, #tpu.memory_space<vmem>>, %arg9: memref<1x512xf32, #tpu.memory_space<vmem>>, %arg10: memref<512x128xbf16, #tpu.memory_space<vmem>>, %arg11: memref<1x128xf32, #tpu.memory_space<vmem>>, %arg12: memref<8x128xf32, #tpu.memory_space<vmem>>) attributes {dimension_semantics = [#tpu.dimension_semantics<parallel>], iteration_bounds = array<i64: 1>, scalar_prefetch = 0 : i64, scratch_operands = 0 : i64, tpu.core_type = #tpu.core_type<tc>, window_params = [{transform_indices = @transform_0, window_bounds = array<i64: 1>}, {transform_indices = @transform_1, window_bounds = array<i64: 4>}, {transform_indices = @transform_2, window_bounds = array<i64: 8, 784>}, {pipeline_mode = #tpu.pipeline_mode<synchronous>, transform_indices = @transform_3, window_bounds = array<i64: 784, 512>}, {pipeline_mode = #tpu.pipeline_mode<synchronous>, transform_indices = @transform_4, window_bounds = array<i64: 1, 512>}, {pipeline_mode = #tpu.pipeline_mode<synchronous>, transform_indices = @transform_5, window_bounds = array<i64: 512, 512>}, {pipeline_mode = #tpu.pipeline_mode<synchronous>, transform_indices = @transform_6, window_bounds = array<i64: 1, 512>}, {pipeline_mode = #tpu.pipeline_mode<synchronous>, transform_indices = @transform_7, window_bounds = array<i64: 512, 512>}, {pipeline_mode = #tpu.pipeline_mode<synchronous>, transform_indices = @transform_8, window_bounds = array<i64: 1, 512>}, {pipeline_mode = #tpu.pipeline_mode<synchronous>, transform_indices = @transform_9, window_bounds = array<i64: 512, 128>}, {pipeline_mode = #tpu.pipeline_mode<synchronous>, transform_indices = @transform_10, window_bounds = array<i64: 1, 128>}, {transform_indices = @transform_11, window_bounds = array<i64: 8, 128>}]} {
    %c0 = arith.constant 0 : index
    %0 = memref.load %arg1[%c0] : memref<1xi32, #tpu.memory_space<smem>>
    %c-1640531527_i32 = arith.constant -1640531527 : i32
    %1 = arith.muli %arg0, %c-1640531527_i32 : i32
    %2 = arith.addi %0, %1 : i32
    %c0_0 = arith.constant 0 : index
    %c0_1 = arith.constant 0 : index
    %3 = vector.load %arg3[%c0_0, %c0_1] : memref<8x784xbf16, #tpu.memory_space<vmem>>, vector<8x784xbf16>
    %c608135816_i32 = arith.constant 608135816 : i32
    %4 = arith.addi %2, %c608135816_i32 : i32
    %5 = tpu.iota {dimensions = array<i32: 0>} : vector<8x784xi32>
    %6 = tpu.iota {dimensions = array<i32: 1>} : vector<8x784xi32>
    %c784_i32 = arith.constant 784 : i32
    %7 = vector.broadcast %c784_i32 : i32 to vector<8x784xi32>
    %8 = arith.muli %5, %7 : vector<8x784xi32>
    %9 = arith.addi %8, %6 : vector<8x784xi32>
    %10 = vector.broadcast %4 : i32 to vector<8x784xi32>
    %11 = arith.addi %10, %9 : vector<8x784xi32>
    %c16_i32 = arith.constant 16 : i32
    %12 = vector.broadcast %c16_i32 : i32 to vector<8x784xi32>
    %13 = arith.shrui %11, %12 : vector<8x784xi32>
    %14 = arith.xori %11, %13 : vector<8x784xi32>
    %c2146121005_i32 = arith.constant 2146121005 : i32
    %15 = vector.broadcast %c2146121005_i32 : i32 to vector<8x784xi32>
    %16 = arith.muli %14, %15 : vector<8x784xi32>
    %c15_i32 = arith.constant 15 : i32
    %17 = vector.broadcast %c15_i32 : i32 to vector<8x784xi32>
    %18 = arith.shrui %16, %17 : vector<8x784xi32>
    %19 = arith.xori %16, %18 : vector<8x784xi32>
    %c-2073254261_i32 = arith.constant -2073254261 : i32
    %20 = vector.broadcast %c-2073254261_i32 : i32 to vector<8x784xi32>
    %21 = arith.muli %19, %20 : vector<8x784xi32>
    %c16_i32_2 = arith.constant 16 : i32
    %22 = vector.broadcast %c16_i32_2 : i32 to vector<8x784xi32>
    %23 = arith.shrui %21, %22 : vector<8x784xi32>
    %24 = arith.xori %21, %23 : vector<8x784xi32>
    %c9_i32 = arith.constant 9 : i32
    %25 = vector.broadcast %c9_i32 : i32 to vector<8x784xi32>
    %26 = arith.shrui %24, %25 : vector<8x784xi32>
    %27 = arith.sitofp %26 : vector<8x784xi32> to vector<8x784xf32>
    %cst = arith.constant 1.1920929E-7 : f32
    %28 = vector.broadcast %cst : f32 to vector<8x784xf32>
    %29 = arith.mulf %27, %28 : vector<8x784xf32>
    %c0_3 = arith.constant 0 : index
    %30 = memref.load %arg2[%c0_3] : memref<4xf32, #tpu.memory_space<smem>>
    %cst_4 = arith.constant 1.000000e-07 : f32
    %31 = vector.broadcast %cst_4 : f32 to vector<8x784xf32>
    %32 = arith.addf %29, %31 : vector<8x784xf32>
    %cst_5 = arith.constant 1.000000e+00 : f32
    %33 = vector.broadcast %cst_5 : f32 to vector<8x784xf32>
    %34 = arith.subf %33, %29 : vector<8x784xf32>
    %cst_6 = arith.constant 1.000000e-07 : f32
    %35 = vector.broadcast %cst_6 : f32 to vector<8x784xf32>
    %36 = arith.addf %34, %35 : vector<8x784xf32>
    %37 = arith.mulf %32, %32 : vector<8x784xf32>
    %38 = arith.mulf %37, %37 : vector<8x784xf32>
    %39 = arith.mulf %38, %38 : vector<8x784xf32>
    %40 = arith.mulf %39, %37 : vector<8x784xf32>
    %41 = arith.mulf %36, %36 : vector<8x784xf32>
    %42 = arith.mulf %41, %41 : vector<8x784xf32>
    %43 = arith.mulf %42, %42 : vector<8x784xf32>
    %44 = arith.mulf %43, %41 : vector<8x784xf32>
    %45 = vector.broadcast %30 : f32 to vector<8x784xf32>
    %46 = arith.mulf %45, %44 : vector<8x784xf32>
    %47 = arith.addf %40, %46 : vector<8x784xf32>
    %48 = arith.divf %46, %47 : vector<8x784xf32>
    %49 = arith.extf %3 : vector<8x784xbf16> to vector<8x784xf32>
    %50 = arith.mulf %49, %48 : vector<8x784xf32>
    %51 = arith.truncf %50 : vector<8x784xf32> to vector<8x784xbf16>
    %c0_7 = arith.constant 0 : index
    %c0_8 = arith.constant 0 : index
    %52 = vector.load %arg4[%c0_7, %c0_8] : memref<784x512xbf16, #tpu.memory_space<vmem>>, vector<784x512xbf16>
    %cst_9 = arith.constant dense<0.000000e+00> : vector<8x512xf32>
    %53 = tpu.matmul %51, %52, %cst_9 {dimension_numbers = #tpu.dot_dimension_numbers<[1], [0], [0], [1], [0, 0, 1, 1], [], []>} : vector<8x784xbf16>, vector<784x512xbf16>, vector<8x512xf32> -> vector<8x512xf32>
    %c0_10 = arith.constant 0 : index
    %c0_11 = arith.constant 0 : index
    %54 = vector.load %arg5[%c0_10, %c0_11] : memref<1x512xf32, #tpu.memory_space<vmem>>, vector<1x512xf32>
    %55 = vector.broadcast %54 : vector<1x512xf32> to vector<8x512xf32>
    %56 = arith.addf %53, %55 : vector<8x512xf32>
    %cst_12 = arith.constant 0.000000e+00 : f32
    %57 = vector.broadcast %cst_12 : f32 to vector<8x512xf32>
    %58 = arith.maximumf %56, %57 : vector<8x512xf32>
    %c-2052912941_i32 = arith.constant -2052912941 : i32
    %59 = arith.addi %2, %c-2052912941_i32 : i32
    %60 = tpu.iota {dimensions = array<i32: 0>} : vector<8x512xi32>
    %61 = tpu.iota {dimensions = array<i32: 1>} : vector<8x512xi32>
    %c512_i32 = arith.constant 512 : i32
    %62 = vector.broadcast %c512_i32 : i32 to vector<8x512xi32>
    %63 = arith.muli %60, %62 : vector<8x512xi32>
    %64 = arith.addi %63, %61 : vector<8x512xi32>
    %65 = vector.broadcast %59 : i32 to vector<8x512xi32>
    %66 = arith.addi %65, %64 : vector<8x512xi32>
    %c16_i32_13 = arith.constant 16 : i32
    %67 = vector.broadcast %c16_i32_13 : i32 to vector<8x512xi32>
    %68 = arith.shrui %66, %67 : vector<8x512xi32>
    %69 = arith.xori %66, %68 : vector<8x512xi32>
    %c2146121005_i32_14 = arith.constant 2146121005 : i32
    %70 = vector.broadcast %c2146121005_i32_14 : i32 to vector<8x512xi32>
    %71 = arith.muli %69, %70 : vector<8x512xi32>
    %c15_i32_15 = arith.constant 15 : i32
    %72 = vector.broadcast %c15_i32_15 : i32 to vector<8x512xi32>
    %73 = arith.shrui %71, %72 : vector<8x512xi32>
    %74 = arith.xori %71, %73 : vector<8x512xi32>
    %c-2073254261_i32_16 = arith.constant -2073254261 : i32
    %75 = vector.broadcast %c-2073254261_i32_16 : i32 to vector<8x512xi32>
    %76 = arith.muli %74, %75 : vector<8x512xi32>
    %c16_i32_17 = arith.constant 16 : i32
    %77 = vector.broadcast %c16_i32_17 : i32 to vector<8x512xi32>
    %78 = arith.shrui %76, %77 : vector<8x512xi32>
    %79 = arith.xori %76, %78 : vector<8x512xi32>
    %c9_i32_18 = arith.constant 9 : i32
    %80 = vector.broadcast %c9_i32_18 : i32 to vector<8x512xi32>
    %81 = arith.shrui %79, %80 : vector<8x512xi32>
    %82 = arith.sitofp %81 : vector<8x512xi32> to vector<8x512xf32>
    %cst_19 = arith.constant 1.1920929E-7 : f32
    %83 = vector.broadcast %cst_19 : f32 to vector<8x512xf32>
    %84 = arith.mulf %82, %83 : vector<8x512xf32>
    %c1 = arith.constant 1 : index
    %85 = memref.load %arg2[%c1] : memref<4xf32, #tpu.memory_space<smem>>
    %cst_20 = arith.constant 1.000000e-07 : f32
    %86 = vector.broadcast %cst_20 : f32 to vector<8x512xf32>
    %87 = arith.addf %84, %86 : vector<8x512xf32>
    %cst_21 = arith.constant 1.000000e+00 : f32
    %88 = vector.broadcast %cst_21 : f32 to vector<8x512xf32>
    %89 = arith.subf %88, %84 : vector<8x512xf32>
    %cst_22 = arith.constant 1.000000e-07 : f32
    %90 = vector.broadcast %cst_22 : f32 to vector<8x512xf32>
    %91 = arith.addf %89, %90 : vector<8x512xf32>
    %92 = arith.mulf %87, %87 : vector<8x512xf32>
    %93 = arith.mulf %92, %92 : vector<8x512xf32>
    %94 = arith.mulf %93, %93 : vector<8x512xf32>
    %95 = arith.mulf %94, %92 : vector<8x512xf32>
    %96 = arith.mulf %91, %91 : vector<8x512xf32>
    %97 = arith.mulf %96, %96 : vector<8x512xf32>
    %98 = arith.mulf %97, %97 : vector<8x512xf32>
    %99 = arith.mulf %98, %96 : vector<8x512xf32>
    %100 = vector.broadcast %85 : f32 to vector<8x512xf32>
    %101 = arith.mulf %100, %99 : vector<8x512xf32>
    %102 = arith.addf %95, %101 : vector<8x512xf32>
    %103 = arith.divf %101, %102 : vector<8x512xf32>
    %104 = arith.mulf %58, %103 : vector<8x512xf32>
    %105 = arith.truncf %104 : vector<8x512xf32> to vector<8x512xbf16>
    %c0_23 = arith.constant 0 : index
    %c0_24 = arith.constant 0 : index
    %106 = vector.load %arg6[%c0_23, %c0_24] : memref<512x512xbf16, #tpu.memory_space<vmem>>, vector<512x512xbf16>
    %cst_25 = arith.constant dense<0.000000e+00> : vector<8x512xf32>
    %107 = tpu.matmul %105, %106, %cst_25 {dimension_numbers = #tpu.dot_dimension_numbers<[1], [0], [0], [1], [0, 0, 1, 1], [], []>} : vector<8x512xbf16>, vector<512x512xbf16>, vector<8x512xf32> -> vector<8x512xf32>
    %c0_26 = arith.constant 0 : index
    %c0_27 = arith.constant 0 : index
    %108 = vector.load %arg7[%c0_26, %c0_27] : memref<1x512xf32, #tpu.memory_space<vmem>>, vector<1x512xf32>
    %109 = vector.broadcast %108 : vector<1x512xf32> to vector<8x512xf32>
    %110 = arith.addf %107, %109 : vector<8x512xf32>
    %cst_28 = arith.constant 0.000000e+00 : f32
    %111 = vector.broadcast %cst_28 : f32 to vector<8x512xf32>
    %112 = arith.maximumf %110, %111 : vector<8x512xf32>
    %c320440878_i32 = arith.constant 320440878 : i32
    %113 = arith.addi %2, %c320440878_i32 : i32
    %114 = tpu.iota {dimensions = array<i32: 0>} : vector<8x512xi32>
    %115 = tpu.iota {dimensions = array<i32: 1>} : vector<8x512xi32>
    %c512_i32_29 = arith.constant 512 : i32
    %116 = vector.broadcast %c512_i32_29 : i32 to vector<8x512xi32>
    %117 = arith.muli %114, %116 : vector<8x512xi32>
    %118 = arith.addi %117, %115 : vector<8x512xi32>
    %119 = vector.broadcast %113 : i32 to vector<8x512xi32>
    %120 = arith.addi %119, %118 : vector<8x512xi32>
    %c16_i32_30 = arith.constant 16 : i32
    %121 = vector.broadcast %c16_i32_30 : i32 to vector<8x512xi32>
    %122 = arith.shrui %120, %121 : vector<8x512xi32>
    %123 = arith.xori %120, %122 : vector<8x512xi32>
    %c2146121005_i32_31 = arith.constant 2146121005 : i32
    %124 = vector.broadcast %c2146121005_i32_31 : i32 to vector<8x512xi32>
    %125 = arith.muli %123, %124 : vector<8x512xi32>
    %c15_i32_32 = arith.constant 15 : i32
    %126 = vector.broadcast %c15_i32_32 : i32 to vector<8x512xi32>
    %127 = arith.shrui %125, %126 : vector<8x512xi32>
    %128 = arith.xori %125, %127 : vector<8x512xi32>
    %c-2073254261_i32_33 = arith.constant -2073254261 : i32
    %129 = vector.broadcast %c-2073254261_i32_33 : i32 to vector<8x512xi32>
    %130 = arith.muli %128, %129 : vector<8x512xi32>
    %c16_i32_34 = arith.constant 16 : i32
    %131 = vector.broadcast %c16_i32_34 : i32 to vector<8x512xi32>
    %132 = arith.shrui %130, %131 : vector<8x512xi32>
    %133 = arith.xori %130, %132 : vector<8x512xi32>
    %c9_i32_35 = arith.constant 9 : i32
    %134 = vector.broadcast %c9_i32_35 : i32 to vector<8x512xi32>
    %135 = arith.shrui %133, %134 : vector<8x512xi32>
    %136 = arith.sitofp %135 : vector<8x512xi32> to vector<8x512xf32>
    %cst_36 = arith.constant 1.1920929E-7 : f32
    %137 = vector.broadcast %cst_36 : f32 to vector<8x512xf32>
    %138 = arith.mulf %136, %137 : vector<8x512xf32>
    %c2 = arith.constant 2 : index
    %139 = memref.load %arg2[%c2] : memref<4xf32, #tpu.memory_space<smem>>
    %cst_37 = arith.constant 1.000000e-07 : f32
    %140 = vector.broadcast %cst_37 : f32 to vector<8x512xf32>
    %141 = arith.addf %138, %140 : vector<8x512xf32>
    %cst_38 = arith.constant 1.000000e+00 : f32
    %142 = vector.broadcast %cst_38 : f32 to vector<8x512xf32>
    %143 = arith.subf %142, %138 : vector<8x512xf32>
    %cst_39 = arith.constant 1.000000e-07 : f32
    %144 = vector.broadcast %cst_39 : f32 to vector<8x512xf32>
    %145 = arith.addf %143, %144 : vector<8x512xf32>
    %146 = arith.mulf %141, %141 : vector<8x512xf32>
    %147 = arith.mulf %146, %146 : vector<8x512xf32>
    %148 = arith.mulf %147, %147 : vector<8x512xf32>
    %149 = arith.mulf %148, %146 : vector<8x512xf32>
    %150 = arith.mulf %145, %145 : vector<8x512xf32>
    %151 = arith.mulf %150, %150 : vector<8x512xf32>
    %152 = arith.mulf %151, %151 : vector<8x512xf32>
    %153 = arith.mulf %152, %150 : vector<8x512xf32>
    %154 = vector.broadcast %139 : f32 to vector<8x512xf32>
    %155 = arith.mulf %154, %153 : vector<8x512xf32>
    %156 = arith.addf %149, %155 : vector<8x512xf32>
    %157 = arith.divf %155, %156 : vector<8x512xf32>
    %158 = arith.mulf %112, %157 : vector<8x512xf32>
    %159 = arith.truncf %158 : vector<8x512xf32> to vector<8x512xbf16>
    %c0_40 = arith.constant 0 : index
    %c0_41 = arith.constant 0 : index
    %160 = vector.load %arg8[%c0_40, %c0_41] : memref<512x512xbf16, #tpu.memory_space<vmem>>, vector<512x512xbf16>
    %cst_42 = arith.constant dense<0.000000e+00> : vector<8x512xf32>
    %161 = tpu.matmul %159, %160, %cst_42 {dimension_numbers = #tpu.dot_dimension_numbers<[1], [0], [0], [1], [0, 0, 1, 1], [], []>} : vector<8x512xbf16>, vector<512x512xbf16>, vector<8x512xf32> -> vector<8x512xf32>
    %c0_43 = arith.constant 0 : index
    %c0_44 = arith.constant 0 : index
    %162 = vector.load %arg9[%c0_43, %c0_44] : memref<1x512xf32, #tpu.memory_space<vmem>>, vector<1x512xf32>
    %163 = vector.broadcast %162 : vector<1x512xf32> to vector<8x512xf32>
    %164 = arith.addf %161, %163 : vector<8x512xf32>
    %cst_45 = arith.constant 0.000000e+00 : f32
    %165 = vector.broadcast %cst_45 : f32 to vector<8x512xf32>
    %166 = arith.maximumf %164, %165 : vector<8x512xf32>
    %c57701188_i32 = arith.constant 57701188 : i32
    %167 = arith.addi %2, %c57701188_i32 : i32
    %168 = tpu.iota {dimensions = array<i32: 0>} : vector<8x512xi32>
    %169 = tpu.iota {dimensions = array<i32: 1>} : vector<8x512xi32>
    %c512_i32_46 = arith.constant 512 : i32
    %170 = vector.broadcast %c512_i32_46 : i32 to vector<8x512xi32>
    %171 = arith.muli %168, %170 : vector<8x512xi32>
    %172 = arith.addi %171, %169 : vector<8x512xi32>
    %173 = vector.broadcast %167 : i32 to vector<8x512xi32>
    %174 = arith.addi %173, %172 : vector<8x512xi32>
    %c16_i32_47 = arith.constant 16 : i32
    %175 = vector.broadcast %c16_i32_47 : i32 to vector<8x512xi32>
    %176 = arith.shrui %174, %175 : vector<8x512xi32>
    %177 = arith.xori %174, %176 : vector<8x512xi32>
    %c2146121005_i32_48 = arith.constant 2146121005 : i32
    %178 = vector.broadcast %c2146121005_i32_48 : i32 to vector<8x512xi32>
    %179 = arith.muli %177, %178 : vector<8x512xi32>
    %c15_i32_49 = arith.constant 15 : i32
    %180 = vector.broadcast %c15_i32_49 : i32 to vector<8x512xi32>
    %181 = arith.shrui %179, %180 : vector<8x512xi32>
    %182 = arith.xori %179, %181 : vector<8x512xi32>
    %c-2073254261_i32_50 = arith.constant -2073254261 : i32
    %183 = vector.broadcast %c-2073254261_i32_50 : i32 to vector<8x512xi32>
    %184 = arith.muli %182, %183 : vector<8x512xi32>
    %c16_i32_51 = arith.constant 16 : i32
    %185 = vector.broadcast %c16_i32_51 : i32 to vector<8x512xi32>
    %186 = arith.shrui %184, %185 : vector<8x512xi32>
    %187 = arith.xori %184, %186 : vector<8x512xi32>
    %c9_i32_52 = arith.constant 9 : i32
    %188 = vector.broadcast %c9_i32_52 : i32 to vector<8x512xi32>
    %189 = arith.shrui %187, %188 : vector<8x512xi32>
    %190 = arith.sitofp %189 : vector<8x512xi32> to vector<8x512xf32>
    %cst_53 = arith.constant 1.1920929E-7 : f32
    %191 = vector.broadcast %cst_53 : f32 to vector<8x512xf32>
    %192 = arith.mulf %190, %191 : vector<8x512xf32>
    %c3 = arith.constant 3 : index
    %193 = memref.load %arg2[%c3] : memref<4xf32, #tpu.memory_space<smem>>
    %cst_54 = arith.constant 1.000000e-07 : f32
    %194 = vector.broadcast %cst_54 : f32 to vector<8x512xf32>
    %195 = arith.addf %192, %194 : vector<8x512xf32>
    %cst_55 = arith.constant 1.000000e+00 : f32
    %196 = vector.broadcast %cst_55 : f32 to vector<8x512xf32>
    %197 = arith.subf %196, %192 : vector<8x512xf32>
    %cst_56 = arith.constant 1.000000e-07 : f32
    %198 = vector.broadcast %cst_56 : f32 to vector<8x512xf32>
    %199 = arith.addf %197, %198 : vector<8x512xf32>
    %200 = arith.mulf %195, %195 : vector<8x512xf32>
    %201 = arith.mulf %200, %200 : vector<8x512xf32>
    %202 = arith.mulf %201, %201 : vector<8x512xf32>
    %203 = arith.mulf %202, %200 : vector<8x512xf32>
    %204 = arith.mulf %199, %199 : vector<8x512xf32>
    %205 = arith.mulf %204, %204 : vector<8x512xf32>
    %206 = arith.mulf %205, %205 : vector<8x512xf32>
    %207 = arith.mulf %206, %204 : vector<8x512xf32>
    %208 = vector.broadcast %193 : f32 to vector<8x512xf32>
    %209 = arith.mulf %208, %207 : vector<8x512xf32>
    %210 = arith.addf %203, %209 : vector<8x512xf32>
    %211 = arith.divf %209, %210 : vector<8x512xf32>
    %212 = arith.mulf %166, %211 : vector<8x512xf32>
    %213 = arith.truncf %212 : vector<8x512xf32> to vector<8x512xbf16>
    %c0_57 = arith.constant 0 : index
    %c0_58 = arith.constant 0 : index
    %214 = vector.load %arg10[%c0_57, %c0_58] : memref<512x128xbf16, #tpu.memory_space<vmem>>, vector<512x128xbf16>
    %cst_59 = arith.constant dense<0.000000e+00> : vector<8x128xf32>
    %215 = tpu.matmul %213, %214, %cst_59 {dimension_numbers = #tpu.dot_dimension_numbers<[1], [0], [0], [1], [0, 0, 1, 1], [], []>} : vector<8x512xbf16>, vector<512x128xbf16>, vector<8x128xf32> -> vector<8x128xf32>
    %c0_60 = arith.constant 0 : index
    %c0_61 = arith.constant 0 : index
    %216 = vector.load %arg11[%c0_60, %c0_61] : memref<1x128xf32, #tpu.memory_space<vmem>>, vector<1x128xf32>
    %217 = vector.broadcast %216 : vector<1x128xf32> to vector<8x128xf32>
    %218 = arith.addf %215, %217 : vector<8x128xf32>
    %219 = tpu.iota {dimensions = array<i32: 1>} : vector<8x128xi32>
    %c10_i32 = arith.constant 10 : i32
    %220 = vector.broadcast %c10_i32 : i32 to vector<8x128xi32>
    %221 = arith.cmpi slt, %219, %220 : vector<8x128xi32>
    %cst_62 = arith.constant -1.000000e+30 : f32
    %222 = vector.broadcast %cst_62 : f32 to vector<8x128xf32>
    %223 = arith.select %221, %218, %222 : vector<8x128xi1>, vector<8x128xf32>
    %cst_63 = arith.constant dense<0xFF800000> : vector<8xf32>
    %224 = vector.multi_reduction <maximumf>, %223, %cst_63 [1] : vector<8x128xf32> to vector<8xf32>
    %225 = vector.shape_cast %224 : vector<8xf32> to vector<8x1xf32>
    %226 = vector.broadcast %225 : vector<8x1xf32> to vector<8x128xf32>
    %227 = arith.subf %223, %226 : vector<8x128xf32>
    %228 = math.exp %227 : vector<8x128xf32>
    %cst_64 = arith.constant dense<0.000000e+00> : vector<8xf32>
    %229 = vector.multi_reduction <add>, %228, %cst_64 [1] : vector<8x128xf32> to vector<8xf32>
    %230 = vector.shape_cast %229 : vector<8xf32> to vector<8x1xf32>
    %231 = vector.broadcast %230 : vector<8x1xf32> to vector<8x128xf32>
    %232 = arith.divf %228, %231 : vector<8x128xf32>
    %c0_65 = arith.constant 0 : index
    %c0_66 = arith.constant 0 : index
    %233 = vector.load %arg12[%c0_65, %c0_66] : memref<8x128xf32, #tpu.memory_space<vmem>>, vector<8x128xf32>
    tpu.vector_store %arg12[%c0_65, %c0_66], %232 {strides = array<i32>} : memref<8x128xf32, #tpu.memory_space<vmem>>, vector<8x128xf32>,
    return
  }
  func.func @transform_0(%arg0: i32) -> i32 {
    %c0_i32 = arith.constant 0 : i32
    %c0_i32_0 = arith.constant 0 : i32
    return %c0_i32 : i32
  }
  func.func @transform_1(%arg0: i32) -> i32 {
    %c0_i32 = arith.constant 0 : i32
    %c0_i32_0 = arith.constant 0 : i32
    return %c0_i32 : i32
  }
  func.func @transform_2(%arg0: i32) -> (i32, i32) {
    %c0_i32 = arith.constant 0 : i32
    %c0_i32_0 = arith.constant 0 : i32
    return %arg0, %c0_i32 : i32, i32
  }
  func.func @transform_3(%arg0: i32) -> (i32, i32) {
    %c0_i32 = arith.constant 0 : i32
    %c0_i32_0 = arith.constant 0 : i32
    %c0_i32_1 = arith.constant 0 : i32
    return %c0_i32, %c0_i32_0 : i32, i32
  }
  func.func @transform_4(%arg0: i32) -> (i32, i32) {
    %c0_i32 = arith.constant 0 : i32
    %c0_i32_0 = arith.constant 0 : i32
    %c0_i32_1 = arith.constant 0 : i32
    return %c0_i32, %c0_i32_0 : i32, i32
  }
  func.func @transform_5(%arg0: i32) -> (i32, i32) {
    %c0_i32 = arith.constant 0 : i32
    %c0_i32_0 = arith.constant 0 : i32
    %c0_i32_1 = arith.constant 0 : i32
    return %c0_i32, %c0_i32_0 : i32, i32
  }
  func.func @transform_6(%arg0: i32) -> (i32, i32) {
    %c0_i32 = arith.constant 0 : i32
    %c0_i32_0 = arith.constant 0 : i32
    %c0_i32_1 = arith.constant 0 : i32
    return %c0_i32, %c0_i32_0 : i32, i32
  }
  func.func @transform_7(%arg0: i32) -> (i32, i32) {
    %c0_i32 = arith.constant 0 : i32
    %c0_i32_0 = arith.constant 0 : i32
    %c0_i32_1 = arith.constant 0 : i32
    return %c0_i32, %c0_i32_0 : i32, i32
  }
  func.func @transform_8(%arg0: i32) -> (i32, i32) {
    %c0_i32 = arith.constant 0 : i32
    %c0_i32_0 = arith.constant 0 : i32
    %c0_i32_1 = arith.constant 0 : i32
    return %c0_i32, %c0_i32_0 : i32, i32
  }
  func.func @transform_9(%arg0: i32) -> (i32, i32) {
    %c0_i32 = arith.constant 0 : i32
    %c0_i32_0 = arith.constant 0 : i32
    %c0_i32_1 = arith.constant 0 : i32
    return %c0_i32, %c0_i32_0 : i32, i32
  }
  func.func @transform_10(%arg0: i32) -> (i32, i32) {
    %c0_i32 = arith.constant 0 : i32
    %c0_i32_0 = arith.constant 0 : i32
    %c0_i32_1 = arith.constant 0 : i32
    return %c0_i32, %c0_i32_0 : i32, i32
  }
  func.func @transform_11(%arg0: i32) -> (i32, i32) {
    %c0_i32 = arith.constant 0 : i32
    %c0_i32_0 = arith.constant 0 : i32
    return %arg0, %c0_i32 : i32, i32
  }
}

</mosaic_0001>

<llo_original>
// kernel: tpu_custom_call.1
$region0: #{tpu_custom_call.1}
  #allocation0 [shape = 'u32[]', space=smem, size = 0x4, offset = 0x4, fixed_abs, tag = 'smem constant byte address 0x4 - core index']
  #allocation1 [shape = 'u32[144,128]{1,0:T(1,128)}', space=vmem, size = 0x12000, scoped, tag = 'internal scratch']
  #allocation2 [shape = 's32[1]{0:T(128)S(6)}', space=smem, size = 0x200, scoped, tag = 'scoped memory for tpu_custom_call.1']
  %s0 = inlined_call_operand.<no memory space> [shape: s32[1], index: 0, kind: input, shape index: {}]
  %s1 = inlined_call_operand.vmem [shape: f32[4], index: 1, kind: input, shape index: {}]
  %s2 = inlined_call_operand.hbm [shape: bf16[8,784], index: 2, kind: input, shape index: {}]
  %s3 = inlined_call_operand.hbm [shape: bf16[784,512], index: 3, kind: input, shape index: {}]
  %s4 = inlined_call_operand.vmem [shape: f32[1,512], index: 4, kind: input, shape index: {}]
  %s5 = inlined_call_operand.hbm [shape: bf16[512,512], index: 5, kind: input, shape index: {}]
  %s6 = inlined_call_operand.vmem [shape: f32[1,512], index: 6, kind: input, shape index: {}]
  %s7 = inlined_call_operand.hbm [shape: bf16[512,512], index: 7, kind: input, shape index: {}]
  %s8 = inlined_call_operand.vmem [shape: f32[1,512], index: 8, kind: input, shape index: {}]
  %s9 = inlined_call_operand.hbm [shape: bf16[512,128], index: 9, kind: input, shape index: {}]
  %s10 = inlined_call_operand.vmem [shape: f32[1,128], index: 10, kind: input, shape index: {}]
  %s11 = inlined_call_operand.hbm [shape: f32[8,128], index: 11, kind: output, shape index: {}]
  %s12 = sld [smem:[#allocation0]]
  $region78: #{tpu_custom_call.1} parent=0
    _
  %s14 = ssub.s32 1, %s12
  %s15 = scalar_select 0, %s14, %s12
  %16 = sst [smem:[#allocation2]] %s0
  $region1: #{tpu_custom_call.1} parent=0
    #allocation3 [shape = 'u8[512]{0}', space=smem, size = 0x200, scoped, tag = 'input window, operand 1, single buffered']
    #allocation4 [shape = 's32[1]{0}', space=sflag, size = 0x4, scoped, tag = 'scoped memory for tpu_custom_call.1']
    #allocation5 [shape = 's32[1]{0}', space=sflag, size = 0x4, scoped, tag = 'scoped memory for tpu_custom_call.1']
    #allocation6 [shape = 's32[1]{0}', space=sflag, size = 0x4, scoped, tag = 'scoped memory for tpu_custom_call.1']
    #allocation7 [shape = 'u8[14336]{0}', space=vmem, size = 0x3800, scoped, tag = 'input window, operand 2, single buffered']
    #allocation8 [shape = 'u8[802816]{0}', space=vmem, size = 0xc4000, scoped, tag = 'input window, operand 3, single buffered']
    #allocation9 [shape = 's32[1]{0}', space=sflag, size = 0x4, scoped, tag = 'scoped memory for tpu_custom_call.1']
    #allocation10 [shape = 'u8[524288]{0}', space=vmem, size = 0x80000, scoped, tag = 'input window, operand 5, single buffered']
    #allocation11 [shape = 'u8[524288]{0}', space=vmem, size = 0x80000, scoped, tag = 'input window, operand 7, single buffered']
    #allocation12 [shape = 's32[1]{0}', space=sflag, size = 0x4, scoped, tag = 'scoped memory for tpu_custom_call.1']
    #allocation13 [shape = 'u8[131072]{0}', space=vmem, size = 0x20000, scoped, tag = 'input window, operand 9, single buffered']
    #allocation14 [shape = 'u8[4096]{0}', space=vmem, size = 0x1000, scoped, tag = 'output window, operand 0, single buffered']
    %17 = vsyncpa [#allocation6], 0
    %18 = vsyncpa [#allocation4], 0
    %19 = vsyncpa [#allocation9], 0
    %20 = vsyncpa [#allocation12], 0
    %21 = vsyncpa [#allocation5], 0
    // Predicated region
    $region2: #{tpu_custom_call.1} parent=1 // pred_check
      _
    $region3: #{tpu_custom_call.1} parent=1 // pred_check_branch
      %23 = sbr.rel (0) target = $region5
    $region4: #{tpu_custom_call.1} parent=1 // pred_region
      _
    $region5: #{tpu_custom_call.1} parent=1 // pred_fallthru
      _
    // Predicated region
    $region6: #{tpu_custom_call.1} parent=1 // pred_check
      _
    $region7: #{tpu_custom_call.1} parent=1 // pred_check_branch
      %25 = sbr.rel (0) target = $region9
    $region8: #{tpu_custom_call.1} parent=1 // pred_region
      %s27 = ssub.s32 16, 16
      %28 = vsyncadd [#allocation6], %s27
      %s30 = sshll.u32 %s1, 4
      %s31 = int_to_ptr.vmem [resolvable:$true] %s30
      %33 = dma.vmem_to_smem %s31, 16, [#allocation3], [#allocation6]
    $region9: #{tpu_custom_call.1} parent=1 // pred_fallthru
      _
    // Predicated region
    $region10: #{tpu_custom_call.1} parent=1 // pred_check
      _
    $region11: #{tpu_custom_call.1} parent=1 // pred_check_branch
      %35 = sbr.rel (0) target = $region13
    $region12: #{tpu_custom_call.1} parent=1 // pred_region
      %s37 = ssub.s32 448, 448
      %38 = vsyncadd [#allocation4], %s37
      %s40 = sshll.u32 [#allocation7], 4
      %s41 = int_to_ptr.vmem [resolvable:$true] %s40
      %43 = dma.hbm_to_vmem [thread:$0]  %s2, 448, %s41, [#allocation4]
    $region13: #{tpu_custom_call.1} parent=1 // pred_fallthru
      _
    // Predicated region
    $region14: #{tpu_custom_call.1} parent=1 // pred_check
      _
    $region15: #{tpu_custom_call.1} parent=1 // pred_check_branch
      %45 = sbr.rel (0) target = $region17
    $region16: #{tpu_custom_call.1} parent=1 // pred_region
      %s47 = ssub.s32 25088, 25088
      %48 = vsyncadd [#allocation9], %s47
      %s49 = sshll.u32 [#allocation8], 4
      %s50 = int_to_ptr.vmem [resolvable:$true] %s49
      %55 = dma.hbm_to_vmem [thread:$0]  %s3, 25088, %s50, [#allocation9], 256, 256, 16
    $region17: #{tpu_custom_call.1} parent=1 // pred_fallthru
      _
    // Predicated region
    $region18: #{tpu_custom_call.1} parent=1 // pred_check
      _
    $region19: #{tpu_custom_call.1} parent=1 // pred_check_branch
      %57 = sbr.rel (0) target = $region21
    $region20: #{tpu_custom_call.1} parent=1 // pred_region
      _
    $region21: #{tpu_custom_call.1} parent=1 // pred_fallthru
      _
    // Predicated region
    $region22: #{tpu_custom_call.1} parent=1 // pred_check
      _
    $region23: #{tpu_custom_call.1} parent=1 // pred_check_branch
      %59 = sbr.rel (0) target = $region25
    $region24: #{tpu_custom_call.1} parent=1 // pred_region
      %s61 = ssub.s32 16384, 16384
      %62 = vsyncadd [#allocation9], %s61
      %s63 = sshll.u32 [#allocation10], 4
      %s64 = int_to_ptr.vmem [resolvable:$true] %s63
      %69 = dma.hbm_to_vmem [thread:$0]  %s5, 16384, %s64, [#allocation9], 256, 256, 16
    $region25: #{tpu_custom_call.1} parent=1 // pred_fallthru
      _
    // Predicated region
    $region26: #{tpu_custom_call.1} parent=1 // pred_check
      _
    $region27: #{tpu_custom_call.1} parent=1 // pred_check_branch
      %71 = sbr.rel (0) target = $region29
    $region28: #{tpu_custom_call.1} parent=1 // pred_region
      _
    $region29: #{tpu_custom_call.1} parent=1 // pred_fallthru
      _
    // Predicated region
    $region30: #{tpu_custom_call.1} parent=1 // pred_check
      _
    $region31: #{tpu_custom_call.1} parent=1 // pred_check_branch
      %73 = sbr.rel (0) target = $region33
    $region32: #{tpu_custom_call.1} parent=1 // pred_region
      %s75 = ssub.s32 16384, 16384
      %76 = vsyncadd [#allocation12], %s75
      %s77 = sshll.u32 [#allocation11], 4
      %s78 = int_to_ptr.vmem [resolvable:$true] %s77
      %83 = dma.hbm_to_vmem [thread:$0]  %s7, 16384, %s78, [#allocation12], 256, 256, 16
    $region33: #{tpu_custom_call.1} parent=1 // pred_fallthru
      _
    // Predicated region
    $region34: #{tpu_custom_call.1} parent=1 // pred_check
      _
    $region35: #{tpu_custom_call.1} parent=1 // pred_check_branch
      %85 = sbr.rel (0) target = $region37
    $region36: #{tpu_custom_call.1} parent=1 // pred_region
      _
    $region37: #{tpu_custom_call.1} parent=1 // pred_fallthru
      _
    // Predicated region
    $region38: #{tpu_custom_call.1} parent=1 // pred_check
      _
    $region39: #{tpu_custom_call.1} parent=1 // pred_check_branch
      %87 = sbr.rel (0) target = $region41
    $region40: #{tpu_custom_call.1} parent=1 // pred_region
      %s89 = ssub.s32 4096, 4096
      %90 = vsyncadd [#allocation12], %s89
      %s91 = sshll.u32 [#allocation13], 4
      %s92 = int_to_ptr.vmem [resolvable:$true] %s91
      %97 = dma.hbm_to_vmem [thread:$0]  %s9, 4096, %s92, [#allocation12], 64, 64, 4
    $region41: #{tpu_custom_call.1} parent=1 // pred_fallthru
      _
    // Predicated region
    $region42: #{tpu_custom_call.1} parent=1 // pred_check
      _
    $region43: #{tpu_custom_call.1} parent=1 // pred_check_branch
      %99 = sbr.rel (0) target = $region45
    $region44: #{tpu_custom_call.1} parent=1 // pred_region
      _
    $region45: #{tpu_custom_call.1} parent=1 // pred_fallthru
      _
    // Predicated region
    $region46: #{tpu_custom_call.1} parent=1 // pred_check
      _
    $region47: #{tpu_custom_call.1} parent=1 // pred_check_branch
      %101 = sbr.rel (0) target = $region49
    $region48: #{tpu_custom_call.1} parent=1 // pred_region
      %102 = dma.done [#allocation6], 16
    $region49: #{tpu_custom_call.1} parent=1 // pred_fallthru
      _
    // Predicated region
    $region50: #{tpu_custom_call.1} parent=1 // pred_check
      _
    $region51: #{tpu_custom_call.1} parent=1 // pred_check_branch
      %104 = sbr.rel (0) target = $region53
    $region52: #{tpu_custom_call.1} parent=1 // pred_region
      %105 = dma.done [#allocation4], 448
    $region53: #{tpu_custom_call.1} parent=1 // pred_fallthru
      _
    // Predicated region
    $region54: #{tpu_custom_call.1} parent=1 // pred_check
      _
    $region55: #{tpu_custom_call.1} parent=1 // pred_check_branch
      %107 = sbr.rel (0) target = $region57
    $region56: #{tpu_custom_call.1} parent=1 // pred_region
      %108 = dma.done [#allocation9], 25088
    $region57: #{tpu_custom_call.1} parent=1 // pred_fallthru
      _
    // Predicated region
    $region58: #{tpu_custom_call.1} parent=1 // pred_check
      _
    $region59: #{tpu_custom_call.1} parent=1 // pred_check_branch
      %110 = sbr.rel (0) target = $region61
    $region60: #{tpu_custom_call.1} parent=1 // pred_region
      %111 = dma.done [#allocation9], 16384
    $region61: #{tpu_custom_call.1} parent=1 // pred_fallthru
      _
    // Predicated region
    $region62: #{tpu_custom_call.1} parent=1 // pred_check
      _
    $region63: #{tpu_custom_call.1} parent=1 // pred_check_branch
      %113 = sbr.rel (0) target = $region65
    $region64: #{tpu_custom_call.1} parent=1 // pred_region
      %114 = dma.done [#allocation12], 16384
    $region65: #{tpu_custom_call.1} parent=1 // pred_fallthru
      _
    // Predicated region
    $region66: #{tpu_custom_call.1} parent=1 // pred_check
      _
    $region67: #{tpu_custom_call.1} parent=1 // pred_check_branch
      %116 = sbr.rel (0) target = $region69
    $region68: #{tpu_custom_call.1} parent=1 // pred_region
      %117 = dma.done [#allocation12], 4096
    $region69: #{tpu_custom_call.1} parent=1 // pred_fallthru
      _
    %118 = sfence
    %s120 = sld [smem:[#allocation2]]
    %s121 = smul.u32 0, 2654435769
    %s122 = sadd.s32 %s120, %s121
    %v123 = vld [vmem:[#allocation7] sm:$0xff]
    %v124 = vld [vmem:[#allocation7 + $0x8] sm:$0xff]
    %v125 = vld [vmem:[#allocation7 + $0x10] sm:$0xff]
    %v126 = vld [vmem:[#allocation7 + $0x18] sm:$0xf]
    %s127 = sadd.s32 %s122, 608135816
    %v128 = vlaneseq
    %v129 = vshrl.u32 %v128, 7
    %v130 = vlaneseq
    %v131 = vand.u32 %v130, 127
    %v132 = vadd.s32 %v131, 128
    %v133 = vadd.s32 %v131, 256
    %v134 = vadd.s32 %v131, 384
    %v135 = vadd.s32 %v131, 512
    %v136 = vadd.s32 %v131, 640
    %v137 = vadd.s32 %v131, 768
    %v138 = vmul.u32 %v129, 784
    %v139 = vadd.s32 %v138, %v131
    %v140 = vadd.s32 %v138, %v132
    %v141 = vadd.s32 %v138, %v133
    %v142 = vadd.s32 %v138, %v134
    %v143 = vadd.s32 %v138, %v135
    %v144 = vadd.s32 %v138, %v136
    %v145 = vadd.s32 %v138, %v137
    %v146 = vstv %s127
    %v147 = vadd.s32 %v146, %v139
    %v148 = vadd.s32 %v146, %v140
    %v149 = vadd.s32 %v146, %v141
    %v150 = vadd.s32 %v146, %v142
    %v151 = vadd.s32 %v146, %v143
    %v152 = vadd.s32 %v146, %v144
    %v153 = vadd.s32 %v146, %v145
    %v154 = vshrl.u32 %v147, 16
    %v155 = vshrl.u32 %v148, 16
    %v156 = vshrl.u32 %v149, 16
    %v157 = vshrl.u32 %v150, 16
    %v158 = vshrl.u32 %v151, 16
    %v159 = vshrl.u32 %v152, 16
    %v160 = vshrl.u32 %v153, 16
    %v161 = vxor.u32 %v147, %v154
    %v162 = vxor.u32 %v148, %v155
    %v163 = vxor.u32 %v149, %v156
    %v164 = vxor.u32 %v150, %v157
    %v165 = vxor.u32 %v151, %v158
    %v166 = vxor.u32 %v152, %v159
    %v167 = vxor.u32 %v153, %v160
    %v168 = vmul.u32 %v161, 2146121005
    %v169 = vmul.u32 %v162, 2146121005
    %v170 = vmul.u32 %v163, 2146121005
    %v171 = vmul.u32 %v164, 2146121005
    %v172 = vmul.u32 %v165, 2146121005
    %v173 = vmul.u32 %v166, 2146121005
    %v174 = vmul.u32 %v167, 2146121005
    %v175 = vshrl.u32 %v168, 15
    %v176 = vshrl.u32 %v169, 15
    %v177 = vshrl.u32 %v170, 15
    %v178 = vshrl.u32 %v171, 15
    %v179 = vshrl.u32 %v172, 15
    %v180 = vshrl.u32 %v173, 15
    %v181 = vshrl.u32 %v174, 15
    %v182 = vxor.u32 %v168, %v175
    %v183 = vxor.u32 %v169, %v176
    %v184 = vxor.u32 %v170, %v177
    %v185 = vxor.u32 %v171, %v178
    %v186 = vxor.u32 %v172, %v179
    %v187 = vxor.u32 %v173, %v180
    %v188 = vxor.u32 %v174, %v181
    %v189 = vmul.u32 %v182, 2221713035
    %v190 = vmul.u32 %v183, 2221713035
    %v191 = vmul.u32 %v184, 2221713035
    %v192 = vmul.u32 %v185, 2221713035
    %v193 = vmul.u32 %v186, 2221713035
    %v194 = vmul.u32 %v187, 2221713035
    %v195 = vmul.u32 %v188, 2221713035
    %v196 = vshrl.u32 %v189, 16
    %v197 = vshrl.u32 %v190, 16
    %v198 = vshrl.u32 %v191, 16
    %v199 = vshrl.u32 %v192, 16
    %v200 = vshrl.u32 %v193, 16
    %v201 = vshrl.u32 %v194, 16
    %v202 = vshrl.u32 %v195, 16
    %v203 = vxor.u32 %v189, %v196
    %v204 = vxor.u32 %v190, %v197
    %v205 = vxor.u32 %v191, %v198
    %v206 = vxor.u32 %v192, %v199
    %v207 = vxor.u32 %v193, %v200
    %v208 = vxor.u32 %v194, %v201
    %v209 = vxor.u32 %v195, %v202
    %v210 = vshrl.u32 %v203, 9
    %v211 = vshrl.u32 %v204, 9
    %v212 = vshrl.u32 %v205, 9
    %v213 = vshrl.u32 %v206, 9
    %v214 = vshrl.u32 %v207, 9
    %v215 = vshrl.u32 %v208, 9
    %v216 = vshrl.u32 %v209, 9
    %v217 = vcvt.s32.f32 %v210
    %v218 = vcvt.s32.f32 %v211
    %v219 = vcvt.s32.f32 %v212
    %v220 = vcvt.s32.f32 %v213
    %v221 = vcvt.s32.f32 %v214
    %v222 = vcvt.s32.f32 %v215
    %v223 = vcvt.s32.f32 %v216
    %v224 = vmul.f32 %v217, 1.1920929e-07
    %v225 = vmul.f32 %v218, 1.1920929e-07
    %v226 = vmul.f32 %v219, 1.1920929e-07
    %v227 = vmul.f32 %v220, 1.1920929e-07
    %v228 = vmul.f32 %v221, 1.1920929e-07
    %v229 = vmul.f32 %v222, 1.1920929e-07
    %v230 = vmul.f32 %v223, 1.1920929e-07
    %s231 = sld [smem:[#allocation3]]
    %v232 = vadd.f32 %v224, 1e-07
    %v233 = vadd.f32 %v225, 1e-07
    %v234 = vadd.f32 %v226, 1e-07
    %v235 = vadd.f32 %v227, 1e-07
    %v236 = vadd.f32 %v228, 1e-07
    %v237 = vadd.f32 %v229, 1e-07
    %v238 = vadd.f32 %v230, 1e-07
    %v239 = vsub.f32 1.0, %v224
    %v240 = vsub.f32 1.0, %v225
    %v241 = vsub.f32 1.0, %v226
    %v242 = vsub.f32 1.0, %v227
    %v243 = vsub.f32 1.0, %v228
    %v244 = vsub.f32 1.0, %v229
    %v245 = vsub.f32 1.0, %v230
    %v246 = vadd.f32 %v239, 1e-07
    %v247 = vadd.f32 %v240, 1e-07
    %v248 = vadd.f32 %v241, 1e-07
    %v249 = vadd.f32 %v242, 1e-07
    %v250 = vadd.f32 %v243, 1e-07
    %v251 = vadd.f32 %v244, 1e-07
    %v252 = vadd.f32 %v245, 1e-07
    %v253 = vmul.f32 %v232, %v232
    %v254 = vmul.f32 %v233, %v233
    %v255 = vmul.f32 %v234, %v234
    %v256 = vmul.f32 %v235, %v235
    %v257 = vmul.f32 %v236, %v236
    %v258 = vmul.f32 %v237, %v237
    %v259 = vmul.f32 %v238, %v238
    %v260 = vmul.f32 %v253, %v253
    %v261 = vmul.f32 %v254, %v254
    %v262 = vmul.f32 %v255, %v255
    %v263 = vmul.f32 %v256, %v256
    %v264 = vmul.f32 %v257, %v257
    %v265 = vmul.f32 %v258, %v258
    %v266 = vmul.f32 %v259, %v259
    %v267 = vmul.f32 %v260, %v260
    %v268 = vmul.f32 %v261, %v261
    %v269 = vmul.f32 %v262, %v262
    %v270 = vmul.f32 %v263, %v263
    %v271 = vmul.f32 %v264, %v264
    %v272 = vmul.f32 %v265, %v265
    %v273 = vmul.f32 %v266, %v266
    %v274 = vmul.f32 %v267, %v253
    %v275 = vmul.f32 %v268, %v254
    %v276 = vmul.f32 %v269, %v255
    %v277 = vmul.f32 %v270, %v256
    %v278 = vmul.f32 %v271, %v257
    %v279 = vmul.f32 %v272, %v258
    %v280 = vmul.f32 %v273, %v259
    %v281 = vmul.f32 %v246, %v246
    %v282 = vmul.f32 %v247, %v247
    %v283 = vmul.f32 %v248, %v248
    %v284 = vmul.f32 %v249, %v249
    %v285 = vmul.f32 %v250, %v250
    %v286 = vmul.f32 %v251, %v251
    %v287 = vmul.f32 %v252, %v252
    %v288 = vmul.f32 %v281, %v281
    %v289 = vmul.f32 %v282, %v282
    %v290 = vmul.f32 %v283, %v283
    %v291 = vmul.f32 %v284, %v284
    %v292 = vmul.f32 %v285, %v285
    %v293 = vmul.f32 %v286, %v286
    %v294 = vmul.f32 %v287, %v287
    %v295 = vmul.f32 %v288, %v288
    %v296 = vmul.f32 %v289, %v289
    %v297 = vmul.f32 %v290, %v290
    %v298 = vmul.f32 %v291, %v291
    %v299 = vmul.f32 %v292, %v292
    %v300 = vmul.f32 %v293, %v293
    %v301 = vmul.f32 %v294, %v294
    %v302 = vmul.f32 %v295, %v281
    %v303 = vmul.f32 %v296, %v282
    %v304 = vmul.f32 %v297, %v283
    %v305 = vmul.f32 %v298, %v284
    %v306 = vmul.f32 %v299, %v285
    %v307 = vmul.f32 %v300, %v286
    %v308 = vmul.f32 %v301, %v287
    %v309 = vstv %s231
    %v310 = vmul.f32 %v309, %v302
    %v311 = vmul.f32 %v309, %v303
    %v312 = vmul.f32 %v309, %v304
    %v313 = vmul.f32 %v309, %v305
    %v314 = vmul.f32 %v309, %v306
    %v315 = vmul.f32 %v309, %v307
    %v316 = vmul.f32 %v309, %v308
    %v317 = vadd.f32 %v274, %v310
    %v318 = vadd.f32 %v275, %v311
    %v319 = vadd.f32 %v276, %v312
    %v320 = vadd.f32 %v277, %v313
    %v321 = vadd.f32 %v278, %v314
    %v322 = vadd.f32 %v279, %v315
    %v323 = vadd.f32 %v280, %v316
    %v324 = vrcp.pop %v317
    %v325 = vmul.f32 %v310, %v324
    %v326 = vrcp.pop %v318
    %v327 = vmul.f32 %v311, %v326
    %v328 = vrcp.pop %v319
    %v329 = vmul.f32 %v312, %v328
    %v330 = vrcp.pop %v320
    %v331 = vmul.f32 %v313, %v330
    %v332 = vrcp.pop %v321
    %v333 = vmul.f32 %v314, %v332
    %v334 = vrcp.pop %v322
    %v335 = vmul.f32 %v315, %v334
    %v336 = vrcp.pop %v323
    %v337 = vmul.f32 %v316, %v336
    %v338 = vunpack.c.l.bf16 %v123
    %v339 = vunpack.c.h.bf16 %v123
    %v340 = vunpack.c.l.bf16 %v124
    %v341 = vunpack.c.h.bf16 %v124
    %v342 = vunpack.c.l.bf16 %v125
    %v343 = vunpack.c.h.bf16 %v125
    %v344 = vunpack.c.l.bf16 %v126
    %v345 = vmul.f32 %v338, %v325
    %v346 = vmul.f32 %v339, %v327
    %v347 = vmul.f32 %v340, %v329
    %v348 = vmul.f32 %v341, %v331
    %v349 = vmul.f32 %v342, %v333
    %v350 = vmul.f32 %v343, %v335
    %v351 = vmul.f32 %v344, %v337
    %v352 = vpack.c.bf16 %v345, %v345
    %v353 = vpack.c.bf16 %v346, %v346
    %v354 = vpack.c.bf16 %v347, %v347
    %v355 = vpack.c.bf16 %v348, %v348
    %v356 = vpack.c.bf16 %v349, %v349
    %v357 = vpack.c.bf16 %v350, %v350
    %v358 = vpack.c.bf16 %v351, %v351
    %v359 = vld [vmem:[#allocation8] sm:$0xff]
    %v360 = vld [vmem:[#allocation8 + $0x8] sm:$0xff]
    %v361 = vld [vmem:[#allocation8 + $0x10] sm:$0xff]
    %v362 = vld [vmem:[#allocation8 + $0x18] sm:$0xff]
    %v363 = vld [vmem:[#allocation8 + $0x20] sm:$0xff]
    %v364 = vld [vmem:[#allocation8 + $0x28] sm:$0xff]
    %v365 = vld [vmem:[#allocation8 + $0x30] sm:$0xff]
    %v366 = vld [vmem:[#allocation8 + $0x38] sm:$0xff]
    %v367 = vld [vmem:[#allocation8 + $0x40] sm:$0xff]
    %v368 = vld [vmem:[#allocation8 + $0x48] sm:$0xff]
    %v369 = vld [vmem:[#allocation8 + $0x50] sm:$0xff]
    %v370 = vld [vmem:[#allocation8 + $0x58] sm:$0xff]
    %v371 = vld [vmem:[#allocation8 + $0x60] sm:$0xff]
    %v372 = vld [vmem:[#allocation8 + $0x68] sm:$0xff]
    %v373 = vld [vmem:[#allocation8 + $0x70] sm:$0xff]
    %v374 = vld [vmem:[#allocation8 + $0x78] sm:$0xff]
    %v375 = vld [vmem:[#allocation8 + $0x80] sm:$0xff]
    %v376 = vld [vmem:[#allocation8 + $0x88] sm:$0xff]
    %v377 = vld [vmem:[#allocation8 + $0x90] sm:$0xff]
    %v378 = vld [vmem:[#allocation8 + $0x98] sm:$0xff]
    %v379 = vld [vmem:[#allocation8 + $0xa0] sm:$0xff]
    %v380 = vld [vmem:[#allocation8 + $0xa8] sm:$0xff]
    %v381 = vld [vmem:[#allocation8 + $0xb0] sm:$0xff]
    %v382 = vld [vmem:[#allocation8 + $0xb8] sm:$0xff]
    %v383 = vld [vmem:[#allocation8 + $0xc0] sm:$0xff]
    %v384 = vld [vmem:[#allocation8 + $0xc8] sm:$0xff]
    %v385 = vld [vmem:[#allocation8 + $0xd0] sm:$0xff]
    %v386 = vld [vmem:[#allocation8 + $0xd8] sm:$0xff]
    %v387 = vld [vmem:[#allocation8 + $0xe0] sm:$0xff]
    %v388 = vld [vmem:[#allocation8 + $0xe8] sm:$0xff]
    %v389 = vld [vmem:[#allocation8 + $0xf0] sm:$0xff]
    %v390 = vld [vmem:[#allocation8 + $0xf8] sm:$0xff]
    %v391 = vld [vmem:[#allocation8 + $0x100] sm:$0xff]
    %v392 = vld [vmem:[#allocation8 + $0x108] sm:$0xff]
    %v393 = vld [vmem:[#allocation8 + $0x110] sm:$0xff]
    %v394 = vld [vmem:[#allocation8 + $0x118] sm:$0xff]
    %v395 = vld [vmem:[#allocation8 + $0x120] sm:$0xff]
    %v396 = vld [vmem:[#allocation8 + $0x128] sm:$0xff]
    %v397 = vld [vmem:[#allocation8 + $0x130] sm:$0xff]
    %v398 = vld [vmem:[#allocation8 + $0x138] sm:$0xff]
    %v399 = vld [vmem:[#allocation8 + $0x140] sm:$0xff]
    %v400 = vld [vmem:[#allocation8 + $0x148] sm:$0xff]
    %v401 = vld [vmem:[#allocation8 + $0x150] sm:$0xff]
    %v402 = vld [vmem:[#allocation8 + $0x158] sm:$0xff]
    %v403 = vld [vmem:[#allocation8 + $0x160] sm:$0xff]
    %v404 = vld [vmem:[#allocation8 + $0x168] sm:$0xff]
    %v405 = vld [vmem:[#allocation8 + $0x170] sm:$0xff]
    %v406 = vld [vmem:[#allocation8 + $0x178] sm:$0xff]
    %v407 = vld [vmem:[#allocation8 + $0x180] sm:$0xff]
    %v408 = vld [vmem:[#allocation8 + $0x188] sm:$0xff]
    %v409 = vld [vmem:[#allocation8 + $0x190] sm:$0xff]
    %v410 = vld [vmem:[#allocation8 + $0x198] sm:$0xff]
    %v411 = vld [vmem:[#allocation8 + $0x1a0] sm:$0xff]
    %v412 = vld [vmem:[#allocation8 + $0x1a8] sm:$0xff]
    %v413 = vld [vmem:[#allocation8 + $0x1b0] sm:$0xff]
    %v414 = vld [vmem:[#allocation8 + $0x1b8] sm:$0xff]
    %v415 = vld [vmem:[#allocation8 + $0x1c0] sm:$0xff]
    %v416 = vld [vmem:[#allocation8 + $0x1c8] sm:$0xff]
    %v417 = vld [vmem:[#allocation8 + $0x1d0] sm:$0xff]
    %v418 = vld [vmem:[#allocation8 + $0x1d8] sm:$0xff]
    %v419 = vld [vmem:[#allocation8 + $0x1e0] sm:$0xff]
    %v420 = vld [vmem:[#allocation8 + $0x1e8] sm:$0xff]
    %v421 = vld [vmem:[#allocation8 + $0x1f0] sm:$0xff]
    %v422 = vld [vmem:[#allocation8 + $0x1f8] sm:$0xff]
    %v423 = vld [vmem:[#allocation8 + $0x200] sm:$0xff]
    %v424 = vld [vmem:[#allocation8 + $0x208] sm:$0xff]
    %v425 = vld [vmem:[#allocation8 + $0x210] sm:$0xff]
    %v426 = vld [vmem:[#allocation8 + $0x218] sm:$0xff]
    %v427 = vld [vmem:[#allocation8 + $0x220] sm:$0xff]
    %v428 = vld [vmem:[#allocation8 + $0x228] sm:$0xff]
    %v429 = vld [vmem:[#allocation8 + $0x230] sm:$0xff]
    %v430 = vld [vmem:[#allocation8 + $0x238] sm:$0xff]
    %v431 = vld [vmem:[#allocation8 + $0x240] sm:$0xff]
    %v432 = vld [vmem:[#allocation8 + $0x248] sm:$0xff]
    %v433 = vld [vmem:[#allocation8 + $0x250] sm:$0xff]
    %v434 = vld [vmem:[#allocation8 + $0x258] sm:$0xff]
    %v435 = vld [vmem:[#allocation8 + $0x260] sm:$0xff]
    %v436 = vld [vmem:[#allocation8 + $0x268] sm:$0xff]
    %v437 = vld [vmem:[#allocation8 + $0x270] sm:$0xff]
    %v438 = vld [vmem:[#allocation8 + $0x278] sm:$0xff]
    %v439 = vld [vmem:[#allocation8 + $0x280] sm:$0xff]
    %v440 = vld [vmem:[#allocation8 + $0x288] sm:$0xff]
    %v441 = vld [vmem:[#allocation8 + $0x290] sm:$0xff]
    %v442 = vld [vmem:[#allocation8 + $0x298] sm:$0xff]
    %v443 = vld [vmem:[#allocation8 + $0x2a0] sm:$0xff]
    %v444 = vld [vmem:[#allocation8 + $0x2a8] sm:$0xff]
    %v445 = vld [vmem:[#allocation8 + $0x2b0] sm:$0xff]
    %v446 = vld [vmem:[#allocation8 + $0x2b8] sm:$0xff]
    %v447 = vld [vmem:[#allocation8 + $0x2c0] sm:$0xff]
    %v448 = vld [vmem:[#allocation8 + $0x2c8] sm:$0xff]
    %v449 = vld [vmem:[#allocation8 + $0x2d0] sm:$0xff]
    %v450 = vld [vmem:[#allocation8 + $0x2d8] sm:$0xff]
    %v451 = vld [vmem:[#allocation8 + $0x2e0] sm:$0xff]
    %v452 = vld [vmem:[#allocation8 + $0x2e8] sm:$0xff]
    %v453 = vld [vmem:[#allocation8 + $0x2f0] sm:$0xff]
    %v454 = vld [vmem:[#allocation8 + $0x2f8] sm:$0xff]
    %v455 = vld [vmem:[#allocation8 + $0x300] sm:$0xff]
    %v456 = vld [vmem:[#allocation8 + $0x308] sm:$0xff]
    %v457 = vld [vmem:[#allocation8 + $0x310] sm:$0xff]
    %v458 = vld [vmem:[#allocation8 + $0x318] sm:$0xff]
    %v459 = vld [vmem:[#allocation8 + $0x320] sm:$0xff]
    %v460 = vld [vmem:[#allocation8 + $0x328] sm:$0xff]
    %v461 = vld [vmem:[#allocation8 + $0x330] sm:$0xff]
    %v462 = vld [vmem:[#allocation8 + $0x338] sm:$0xff]
    %v463 = vld [vmem:[#allocation8 + $0x340] sm:$0xff]
    %v464 = vld [vmem:[#allocation8 + $0x348] sm:$0xff]
    %v465 = vld [vmem:[#allocation8 + $0x350] sm:$0xff]
    %v466 = vld [vmem:[#allocation8 + $0x358] sm:$0xff]
    %v467 = vld [vmem:[#allocation8 + $0x360] sm:$0xff]
    %v468 = vld [vmem:[#allocation8 + $0x368] sm:$0xff]
    %v469 = vld [vmem:[#allocation8 + $0x370] sm:$0xff]
    %v470 = vld [vmem:[#allocation8 + $0x378] sm:$0xff]
    %v471 = vld [vmem:[#allocation8 + $0x380] sm:$0xff]
    %v472 = vld [vmem:[#allocation8 + $0x388] sm:$0xff]
    %v473 = vld [vmem:[#allocation8 + $0x390] sm:$0xff]
    %v474 = vld [vmem:[#allocation8 + $0x398] sm:$0xff]
    %v475 = vld [vmem:[#allocation8 + $0x3a0] sm:$0xff]
    %v476 = vld [vmem:[#allocation8 + $0x3a8] sm:$0xff]
    %v477 = vld [vmem:[#allocation8 + $0x3b0] sm:$0xff]
    %v478 = vld [vmem:[#allocation8 + $0x3b8] sm:$0xff]
    %v479 = vld [vmem:[#allocation8 + $0x3c0] sm:$0xff]
    %v480 = vld [vmem:[#allocation8 + $0x3c8] sm:$0xff]
    %v481 = vld [vmem:[#allocation8 + $0x3d0] sm:$0xff]
    %v482 = vld [vmem:[#allocation8 + $0x3d8] sm:$0xff]
    %v483 = vld [vmem:[#allocation8 + $0x3e0] sm:$0xff]
    %v484 = vld [vmem:[#allocation8 + $0x3e8] sm:$0xff]
    %v485 = vld [vmem:[#allocation8 + $0x3f0] sm:$0xff]
    %v486 = vld [vmem:[#allocation8 + $0x3f8] sm:$0xff]
    %v487 = vld [vmem:[#allocation8 + $0x400] sm:$0xff]
    %v488 = vld [vmem:[#allocation8 + $0x408] sm:$0xff]
    %v489 = vld [vmem:[#allocation8 + $0x410] sm:$0xff]
    %v490 = vld [vmem:[#allocation8 + $0x418] sm:$0xff]
    %v491 = vld [vmem:[#allocation8 + $0x420] sm:$0xff]
    %v492 = vld [vmem:[#allocation8 + $0x428] sm:$0xff]
    %v493 = vld [vmem:[#allocation8 + $0x430] sm:$0xff]
    %v494 = vld [vmem:[#allocation8 + $0x438] sm:$0xff]
    %v495 = vld [vmem:[#allocation8 + $0x440] sm:$0xff]
    %v496 = vld [vmem:[#allocation8 + $0x448] sm:$0xff]
    %v497 = vld [vmem:[#allocation8 + $0x450] sm:$0xff]
    %v498 = vld [vmem:[#allocation8 + $0x458] sm:$0xff]
    %v499 = vld [vmem:[#allocation8 + $0x460] sm:$0xff]
    %v500 = vld [vmem:[#allocation8 + $0x468] sm:$0xff]
    %v501 = vld [vmem:[#allocation8 + $0x470] sm:$0xff]
    %v502 = vld [vmem:[#allocation8 + $0x478] sm:$0xff]
    %v503 = vld [vmem:[#allocation8 + $0x480] sm:$0xff]
    %v504 = vld [vmem:[#allocation8 + $0x488] sm:$0xff]
    %v505 = vld [vmem:[#allocation8 + $0x490] sm:$0xff]
    %v506 = vld [vmem:[#allocation8 + $0x498] sm:$0xff]
    %v507 = vld [vmem:[#allocation8 + $0x4a0] sm:$0xff]
    %v508 = vld [vmem:[#allocation8 + $0x4a8] sm:$0xff]
    %v509 = vld [vmem:[#allocation8 + $0x4b0] sm:$0xff]
    %v510 = vld [vmem:[#allocation8 + $0x4b8] sm:$0xff]
    %v511 = vld [vmem:[#allocation8 + $0x4c0] sm:$0xff]
    %v512 = vld [vmem:[#allocation8 + $0x4c8] sm:$0xff]
    %v513 = vld [vmem:[#allocation8 + $0x4d0] sm:$0xff]
    %v514 = vld [vmem:[#allocation8 + $0x4d8] sm:$0xff]
    %v515 = vld [vmem:[#allocation8 + $0x4e0] sm:$0xff]
    %v516 = vld [vmem:[#allocation8 + $0x4e8] sm:$0xff]
    %v517 = vld [vmem:[#allocation8 + $0x4f0] sm:$0xff]
    %v518 = vld [vmem:[#allocation8 + $0x4f8] sm:$0xff]
    %v519 = vld [vmem:[#allocation8 + $0x500] sm:$0xff]
    %v520 = vld [vmem:[#allocation8 + $0x508] sm:$0xff]
    %v521 = vld [vmem:[#allocation8 + $0x510] sm:$0xff]
    %v522 = vld [vmem:[#allocation8 + $0x518] sm:$0xff]
    %v523 = vld [vmem:[#allocation8 + $0x520] sm:$0xff]
    %v524 = vld [vmem:[#allocation8 + $0x528] sm:$0xff]
    %v525 = vld [vmem:[#allocation8 + $0x530] sm:$0xff]
    %v526 = vld [vmem:[#allocation8 + $0x538] sm:$0xff]
    %v527 = vld [vmem:[#allocation8 + $0x540] sm:$0xff]
    %v528 = vld [vmem:[#allocation8 + $0x548] sm:$0xff]
    %v529 = vld [vmem:[#allocation8 + $0x550] sm:$0xff]
    %v530 = vld [vmem:[#allocation8 + $0x558] sm:$0xff]
    %v531 = vld [vmem:[#allocation8 + $0x560] sm:$0xff]
    %v532 = vld [vmem:[#allocation8 + $0x568] sm:$0xff]
    %v533 = vld [vmem:[#allocation8 + $0x570] sm:$0xff]
    %v534 = vld [vmem:[#allocation8 + $0x578] sm:$0xff]
    %v535 = vld [vmem:[#allocation8 + $0x580] sm:$0xff]
    %v536 = vld [vmem:[#allocation8 + $0x588] sm:$0xff]
    %v537 = vld [vmem:[#allocation8 + $0x590] sm:$0xff]
    %v538 = vld [vmem:[#allocation8 + $0x598] sm:$0xff]
    %v539 = vld [vmem:[#allocation8 + $0x5a0] sm:$0xff]
    %v540 = vld [vmem:[#allocation8 + $0x5a8] sm:$0xff]
    %v541 = vld [vmem:[#allocation8 + $0x5b0] sm:$0xff]
    %v542 = vld [vmem:[#allocation8 + $0x5b8] sm:$0xff]
    %v543 = vld [vmem:[#allocation8 + $0x5c0] sm:$0xff]
    %v544 = vld [vmem:[#allocation8 + $0x5c8] sm:$0xff]
    %v545 = vld [vmem:[#allocation8 + $0x5d0] sm:$0xff]
    %v546 = vld [vmem:[#allocation8 + $0x5d8] sm:$0xff]
    %v547 = vld [vmem:[#allocation8 + $0x5e0] sm:$0xff]
    %v548 = vld [vmem:[#allocation8 + $0x5e8] sm:$0xff]
    %v549 = vld [vmem:[#allocation8 + $0x5f0] sm:$0xff]
    %v550 = vld [vmem:[#allocation8 + $0x5f8] sm:$0xff]
    %v551 = vld [vmem:[#allocation8 + $0x600] sm:$0xff]
    %v552 = vld [vmem:[#allocation8 + $0x608] sm:$0xff]
    %v553 = vld [vmem:[#allocation8 + $0x610] sm:$0xff]
    %v554 = vld [vmem:[#allocation8 + $0x618] sm:$0xff]
    %v555 = vld [vmem:[%s4] sm:$0xf]
    %v557 = vlaneseq
    %v558 = vshrl.u32 %v557, 7
    %v559 = vsub.s32 0, %v558
    %v560 = vrot.slane %v555, %v559
    %v561 = vlaneseq
    %v562 = vshrl.u32 %v561, 7
    %v563 = vsub.s32 1, %v562
    %v564 = vrot.slane %v555, %v563
    %v565 = vlaneseq
    %v566 = vshrl.u32 %v565, 7
    %v567 = vsub.s32 2, %v566
    %v568 = vrot.slane %v555, %v567
    %v569 = vlaneseq
    %v570 = vshrl.u32 %v569, 7
    %v571 = vsub.s32 3, %v570
    %v572 = vrot.slane %v555, %v571
    %v773 = vunpack.c.l.b16 %v359
    %v774 = vunpack.c.h.b16 %v359
    %v775 = vunpack.c.l.b16 %v360
    %v776 = vunpack.c.h.b16 %v360
    %v777 = vunpack.c.l.b16 %v361
    %v778 = vunpack.c.h.b16 %v361
    %v779 = vunpack.c.l.b16 %v362
    %v780 = vunpack.c.h.b16 %v362
    %v781 = vunpack.c.l.b16 %v363
    %v782 = vunpack.c.h.b16 %v363
    %v783 = vunpack.c.l.b16 %v364
    %v784 = vunpack.c.h.b16 %v364
    %v785 = vunpack.c.l.b16 %v365
    %v786 = vunpack.c.h.b16 %v365
    %v787 = vunpack.c.l.b16 %v366
    %v788 = vunpack.c.h.b16 %v366
    %v789 = vunpack.c.l.b16 %v367
    %v790 = vunpack.c.h.b16 %v367
    %v791 = vunpack.c.l.b16 %v368
    %v792 = vunpack.c.h.b16 %v368
    %v793 = vunpack.c.l.b16 %v369
    %v794 = vunpack.c.h.b16 %v369
    %v795 = vunpack.c.l.b16 %v370
    %v796 = vunpack.c.h.b16 %v370
    %v797 = vunpack.c.l.b16 %v371
    %v798 = vunpack.c.h.b16 %v371
    %v799 = vunpack.c.l.b16 %v372
    %v800 = vunpack.c.h.b16 %v372
    %v801 = vunpack.c.l.b16 %v373
    %v802 = vunpack.c.h.b16 %v373
    %v803 = vunpack.c.l.b16 %v374
    %v804 = vunpack.c.h.b16 %v374
    %v805 = vunpack.c.l.b16 %v375
    %v806 = vunpack.c.h.b16 %v375
    %v807 = vunpack.c.l.b16 %v376
    %v808 = vunpack.c.h.b16 %v376
    %v809 = vunpack.c.l.b16 %v377
    %v810 = vunpack.c.h.b16 %v377
    %v811 = vunpack.c.l.b16 %v378
    %v812 = vunpack.c.h.b16 %v378
    %v813 = vunpack.c.l.b16 %v379
    %v814 = vunpack.c.h.b16 %v379
    %v815 = vunpack.c.l.b16 %v380
    %v816 = vunpack.c.h.b16 %v380
    %v817 = vunpack.c.l.b16 %v381
    %v818 = vunpack.c.h.b16 %v381
    %v819 = vunpack.c.l.b16 %v382
    %v820 = vunpack.c.h.b16 %v382
    %v821 = vunpack.c.l.b16 %v383
    %v822 = vunpack.c.h.b16 %v383
    %v823 = vunpack.c.l.b16 %v384
    %v824 = vunpack.c.h.b16 %v384
    %v825 = vunpack.c.l.b16 %v385
    %v826 = vunpack.c.h.b16 %v385
    %v827 = vunpack.c.l.b16 %v386
    %v828 = vunpack.c.h.b16 %v386
    %v829 = vunpack.c.l.b16 %v387
    %v830 = vunpack.c.h.b16 %v387
    %v831 = vunpack.c.l.b16 %v388
    %v832 = vunpack.c.h.b16 %v388
    %v833 = vunpack.c.l.b16 %v389
    %v834 = vunpack.c.h.b16 %v389
    %v835 = vunpack.c.l.b16 %v390
    %v836 = vunpack.c.h.b16 %v390
    %v837 = vunpack.c.l.b16 %v391
    %v838 = vunpack.c.h.b16 %v391
    %v839 = vunpack.c.l.b16 %v392
    %v840 = vunpack.c.h.b16 %v392
    %v841 = vunpack.c.l.b16 %v393
    %v842 = vunpack.c.h.b16 %v393
    %v843 = vunpack.c.l.b16 %v394
    %v844 = vunpack.c.h.b16 %v394
    %v845 = vunpack.c.l.b16 %v395
    %v846 = vunpack.c.h.b16 %v395
    %v847 = vunpack.c.l.b16 %v396
    %v848 = vunpack.c.h.b16 %v396
    %v849 = vunpack.c.l.b16 %v397
    %v850 = vunpack.c.h.b16 %v397
    %v851 = vunpack.c.l.b16 %v398
    %v852 = vunpack.c.h.b16 %v398
    %v853 = vunpack.c.l.b16 %v399
    %v854 = vunpack.c.h.b16 %v399
    %v855 = vunpack.c.l.b16 %v400
    %v856 = vunpack.c.h.b16 %v400
    %v857 = vunpack.c.l.b16 %v401
    %v858 = vunpack.c.h.b16 %v401
    %v859 = vunpack.c.l.b16 %v402
    %v860 = vunpack.c.h.b16 %v402
    %v861 = vunpack.c.l.b16 %v403
    %v862 = vunpack.c.h.b16 %v403
    %v863 = vunpack.c.l.b16 %v404
    %v864 = vunpack.c.h.b16 %v404
    %v865 = vunpack.c.l.b16 %v405
    %v866 = vunpack.c.h.b16 %v405
    %v867 = vunpack.c.l.b16 %v406
    %v868 = vunpack.c.h.b16 %v406
    %v869 = vunpack.c.l.b16 %v407
    %v870 = vunpack.c.h.b16 %v407
    %v871 = vunpack.c.l.b16 %v408
    %v872 = vunpack.c.h.b16 %v408
    %v873 = vunpack.c.l.b16 %v409
    %v874 = vunpack.c.h.b16 %v409
    %v875 = vunpack.c.l.b16 %v410
    %v876 = vunpack.c.h.b16 %v410
    %v877 = vunpack.c.l.b16 %v411
    %v878 = vunpack.c.h.b16 %v411
    %v879 = vunpack.c.l.b16 %v412
    %v880 = vunpack.c.h.b16 %v412
    %v881 = vunpack.c.l.b16 %v413
    %v882 = vunpack.c.h.b16 %v413
    %v883 = vunpack.c.l.b16 %v414
    %v884 = vunpack.c.h.b16 %v414
    %v885 = vunpack.c.l.b16 %v415
    %v886 = vunpack.c.h.b16 %v415
    %v887 = vunpack.c.l.b16 %v416
    %v888 = vunpack.c.h.b16 %v416
    %v889 = vunpack.c.l.b16 %v417
    %v890 = vunpack.c.h.b16 %v417
    %v891 = vunpack.c.l.b16 %v418
    %v892 = vunpack.c.h.b16 %v418
    %v893 = vunpack.c.l.b16 %v419
    %v894 = vunpack.c.h.b16 %v419
    %v895 = vunpack.c.l.b16 %v420
    %v896 = vunpack.c.h.b16 %v420
    %v897 = vunpack.c.l.b16 %v421
    %v898 = vunpack.c.h.b16 %v421
    %v899 = vunpack.c.l.b16 %v422
    %v900 = vunpack.c.h.b16 %v422
    %v901 = vunpack.c.l.b16 %v423
    %v902 = vunpack.c.h.b16 %v423
    %v903 = vunpack.c.l.b16 %v424
    %v904 = vunpack.c.h.b16 %v424
    %v905 = vunpack.c.l.b16 %v425
    %v906 = vunpack.c.h.b16 %v425
    %v907 = vunpack.c.l.b16 %v426
    %v908 = vunpack.c.h.b16 %v426
    %v909 = vunpack.c.l.b16 %v427
    %v910 = vunpack.c.h.b16 %v427
    %v911 = vunpack.c.l.b16 %v428
    %v912 = vunpack.c.h.b16 %v428
    %v913 = vunpack.c.l.b16 %v429
    %v914 = vunpack.c.h.b16 %v429
    %v915 = vunpack.c.l.b16 %v430
    %v916 = vunpack.c.h.b16 %v430
    %v917 = vunpack.c.l.b16 %v431
    %v918 = vunpack.c.h.b16 %v431
    %v919 = vunpack.c.l.b16 %v432
    %v920 = vunpack.c.h.b16 %v432
    %v921 = vunpack.c.l.b16 %v433
    %v922 = vunpack.c.h.b16 %v433
    %v923 = vunpack.c.l.b16 %v434
    %v924 = vunpack.c.h.b16 %v434
    %v925 = vunpack.c.l.b16 %v435
    %v926 = vunpack.c.h.b16 %v435
    %v927 = vunpack.c.l.b16 %v436
    %v928 = vunpack.c.h.b16 %v436
    %v929 = vunpack.c.l.b16 %v437
    %v930 = vunpack.c.h.b16 %v437
    %v931 = vunpack.c.l.b16 %v438
    %v932 = vunpack.c.h.b16 %v438
    %v933 = vunpack.c.l.b16 %v439
    %v934 = vunpack.c.h.b16 %v439
    %v935 = vunpack.c.l.b16 %v440
    %v936 = vunpack.c.h.b16 %v440
    %v937 = vunpack.c.l.b16 %v441
    %v938 = vunpack.c.h.b16 %v441
    %v939 = vunpack.c.l.b16 %v442
    %v940 = vunpack.c.h.b16 %v442
    %v941 = vunpack.c.l.b16 %v443
    %v942 = vunpack.c.h.b16 %v443
    %v943 = vunpack.c.l.b16 %v444
    %v944 = vunpack.c.h.b16 %v444
    %v945 = vunpack.c.l.b16 %v445
    %v946 = vunpack.c.h.b16 %v445
    %v947 = vunpack.c.l.b16 %v446
    %v948 = vunpack.c.h.b16 %v446
    %v949 = vunpack.c.l.b16 %v447
    %v950 = vunpack.c.h.b16 %v447
    %v951 = vunpack.c.l.b16 %v448
    %v952 = vunpack.c.h.b16 %v448
    %v953 = vunpack.c.l.b16 %v449
    %v954 = vunpack.c.h.b16 %v449
    %v955 = vunpack.c.l.b16 %v450
    %v956 = vunpack.c.h.b16 %v450
    %v957 = vunpack.c.l.b16 %v451
    %v958 = vunpack.c.h.b16 %v451
    %v959 = vunpack.c.l.b16 %v452
    %v960 = vunpack.c.h.b16 %v452
    %v961 = vunpack.c.l.b16 %v453
    %v962 = vunpack.c.h.b16 %v453
    %v963 = vunpack.c.l.b16 %v454
    %v964 = vunpack.c.h.b16 %v454
    %v965 = vunpack.c.l.b16 %v455
    %v966 = vunpack.c.h.b16 %v455
    %v967 = vunpack.c.l.b16 %v456
    %v968 = vunpack.c.h.b16 %v456
    %v969 = vunpack.c.l.b16 %v457
    %v970 = vunpack.c.h.b16 %v457
    %v971 = vunpack.c.l.b16 %v458
    %v972 = vunpack.c.h.b16 %v458
    %v973 = vunpack.c.l.b16 %v459
    %v974 = vunpack.c.h.b16 %v459
    %v975 = vunpack.c.l.b16 %v460
    %v976 = vunpack.c.h.b16 %v460
    %v977 = vunpack.c.l.b16 %v461
    %v978 = vunpack.c.h.b16 %v461
    %v979 = vunpack.c.l.b16 %v462
    %v980 = vunpack.c.h.b16 %v462
    %v981 = vunpack.c.l.b16 %v463
    %v982 = vunpack.c.h.b16 %v463
    %v983 = vunpack.c.l.b16 %v464
    %v984 = vunpack.c.h.b16 %v464
    %v985 = vunpack.c.l.b16 %v465
    %v986 = vunpack.c.h.b16 %v465
    %v987 = vunpack.c.l.b16 %v466
    %v988 = vunpack.c.h.b16 %v466
    %v989 = vunpack.c.l.b16 %v467
    %v990 = vunpack.c.h.b16 %v467
    %v991 = vunpack.c.l.b16 %v468
    %v992 = vunpack.c.h.b16 %v468
    %v993 = vunpack.c.l.b16 %v469
    %v994 = vunpack.c.h.b16 %v469
    %v995 = vunpack.c.l.b16 %v470
    %v996 = vunpack.c.h.b16 %v470
    %v997 = vunpack.c.l.b16 %v471
    %v998 = vunpack.c.h.b16 %v471
    %v999 = vunpack.c.l.b16 %v472
    %v1000 = vunpack.c.h.b16 %v472
    %v1001 = vunpack.c.l.b16 %v473
    %v1002 = vunpack.c.h.b16 %v473
    %v1003 = vunpack.c.l.b16 %v474
    %v1004 = vunpack.c.h.b16 %v474
    %v1005 = vunpack.c.l.b16 %v475
    %v1006 = vunpack.c.h.b16 %v475
    %v1007 = vunpack.c.l.b16 %v476
    %v1008 = vunpack.c.h.b16 %v476
    %v1009 = vunpack.c.l.b16 %v477
    %v1010 = vunpack.c.h.b16 %v477
    %v1011 = vunpack.c.l.b16 %v478
    %v1012 = vunpack.c.h.b16 %v478
    %v1013 = vunpack.c.l.b16 %v479
    %v1014 = vunpack.c.h.b16 %v479
    %v1015 = vunpack.c.l.b16 %v480
    %v1016 = vunpack.c.h.b16 %v480
    %v1017 = vunpack.c.l.b16 %v481
    %v1018 = vunpack.c.h.b16 %v481
    %v1019 = vunpack.c.l.b16 %v482
    %v1020 = vunpack.c.h.b16 %v482
    %v1021 = vunpack.c.l.b16 %v483
    %v1022 = vunpack.c.h.b16 %v483
    %v1023 = vunpack.c.l.b16 %v484
    %v1024 = vunpack.c.h.b16 %v484
    %v1025 = vunpack.c.l.b16 %v485
    %v1026 = vunpack.c.h.b16 %v485
    %v1027 = vunpack.c.l.b16 %v486
    %v1028 = vunpack.c.h.b16 %v486
    %v1029 = vunpack.c.l.b16 %v487
    %v1030 = vunpack.c.h.b16 %v487
    %v1031 = vunpack.c.l.b16 %v488
    %v1032 = vunpack.c.h.b16 %v488
    %v1033 = vunpack.c.l.b16 %v489
    %v1034 = vunpack.c.h.b16 %v489
    %v1035 = vunpack.c.l.b16 %v490
    %v1036 = vunpack.c.h.b16 %v490
    %v1037 = vunpack.c.l.b16 %v491
    %v1038 = vunpack.c.h.b16 %v491
    %v1039 = vunpack.c.l.b16 %v492
    %v1040 = vunpack.c.h.b16 %v492
    %v1041 = vunpack.c.l.b16 %v493
    %v1042 = vunpack.c.h.b16 %v493
    %v1043 = vunpack.c.l.b16 %v494
    %v1044 = vunpack.c.h.b16 %v494
    %v1045 = vunpack.c.l.b16 %v495
    %v1046 = vunpack.c.h.b16 %v495
    %v1047 = vunpack.c.l.b16 %v496
    %v1048 = vunpack.c.h.b16 %v496
    %v1049 = vunpack.c.l.b16 %v497
    %v1050 = vunpack.c.h.b16 %v497
    %v1051 = vunpack.c.l.b16 %v498
    %v1052 = vunpack.c.h.b16 %v498
    %v1053 = vunpack.c.l.b16 %v499
    %v1054 = vunpack.c.h.b16 %v499
    %v1055 = vunpack.c.l.b16 %v500
    %v1056 = vunpack.c.h.b16 %v500
    %v1057 = vunpack.c.l.b16 %v501
    %v1058 = vunpack.c.h.b16 %v501
    %v1059 = vunpack.c.l.b16 %v502
    %v1060 = vunpack.c.h.b16 %v502
    %v1061 = vunpack.c.l.b16 %v503
    %v1062 = vunpack.c.h.b16 %v503
    %v1063 = vunpack.c.l.b16 %v504
    %v1064 = vunpack.c.h.b16 %v504
    %v1065 = vunpack.c.l.b16 %v505
    %v1066 = vunpack.c.h.b16 %v505
    %v1067 = vunpack.c.l.b16 %v506
    %v1068 = vunpack.c.h.b16 %v506
    %v1069 = vunpack.c.l.b16 %v507
    %v1070 = vunpack.c.h.b16 %v507
    %v1071 = vunpack.c.l.b16 %v508
    %v1072 = vunpack.c.h.b16 %v508
    %v1073 = vunpack.c.l.b16 %v509
    %v1074 = vunpack.c.h.b16 %v509
    %v1075 = vunpack.c.l.b16 %v510
    %v1076 = vunpack.c.h.b16 %v510
    %v1077 = vunpack.c.l.b16 %v511
    %v1078 = vunpack.c.h.b16 %v511
    %v1079 = vunpack.c.l.b16 %v512
    %v1080 = vunpack.c.h.b16 %v512
    %v1081 = vunpack.c.l.b16 %v513
    %v1082 = vunpack.c.h.b16 %v513
    %v1083 = vunpack.c.l.b16 %v514
    %v1084 = vunpack.c.h.b16 %v514
    %v1085 = vunpack.c.l.b16 %v515
    %v1086 = vunpack.c.h.b16 %v515
    %v1087 = vunpack.c.l.b16 %v516
    %v1088 = vunpack.c.h.b16 %v516
    %v1089 = vunpack.c.l.b16 %v517
    %v1090 = vunpack.c.h.b16 %v517
    %v1091 = vunpack.c.l.b16 %v518
    %v1092 = vunpack.c.h.b16 %v518
    %v1093 = vunpack.c.l.b16 %v519
    %v1094 = vunpack.c.h.b16 %v519
    %v1095 = vunpack.c.l.b16 %v520
    %v1096 = vunpack.c.h.b16 %v520
    %v1097 = vunpack.c.l.b16 %v521
    %v1098 = vunpack.c.h.b16 %v521
    %v1099 = vunpack.c.l.b16 %v522
    %v1100 = vunpack.c.h.b16 %v522
    %v1101 = vunpack.c.l.b16 %v523
    %v1102 = vunpack.c.h.b16 %v523
    %v1103 = vunpack.c.l.b16 %v524
    %v1104 = vunpack.c.h.b16 %v524
    %v1105 = vunpack.c.l.b16 %v525
    %v1106 = vunpack.c.h.b16 %v525
    %v1107 = vunpack.c.l.b16 %v526
    %v1108 = vunpack.c.h.b16 %v526
    %v1109 = vunpack.c.l.b16 %v527
    %v1110 = vunpack.c.h.b16 %v527
    %v1111 = vunpack.c.l.b16 %v528
    %v1112 = vunpack.c.h.b16 %v528
    %v1113 = vunpack.c.l.b16 %v529
    %v1114 = vunpack.c.h.b16 %v529
    %v1115 = vunpack.c.l.b16 %v530
    %v1116 = vunpack.c.h.b16 %v530
    %v1117 = vunpack.c.l.b16 %v531
    %v1118 = vunpack.c.h.b16 %v531
    %v1119 = vunpack.c.l.b16 %v532
    %v1120 = vunpack.c.h.b16 %v532
    %v1121 = vunpack.c.l.b16 %v533
    %v1122 = vunpack.c.h.b16 %v533
    %v1123 = vunpack.c.l.b16 %v534
    %v1124 = vunpack.c.h.b16 %v534
    %v1125 = vunpack.c.l.b16 %v535
    %v1126 = vunpack.c.h.b16 %v535
    %v1127 = vunpack.c.l.b16 %v536
    %v1128 = vunpack.c.h.b16 %v536
    %v1129 = vunpack.c.l.b16 %v537
    %v1130 = vunpack.c.h.b16 %v537
    %v1131 = vunpack.c.l.b16 %v538
    %v1132 = vunpack.c.h.b16 %v538
    %v1133 = vunpack.c.l.b16 %v539
    %v1134 = vunpack.c.h.b16 %v539
    %v1135 = vunpack.c.l.b16 %v540
    %v1136 = vunpack.c.h.b16 %v540
    %v1137 = vunpack.c.l.b16 %v541
    %v1138 = vunpack.c.h.b16 %v541
    %v1139 = vunpack.c.l.b16 %v542
    %v1140 = vunpack.c.h.b16 %v542
    %v1141 = vunpack.c.l.b16 %v543
    %v1142 = vunpack.c.h.b16 %v543
    %v1143 = vunpack.c.l.b16 %v544
    %v1144 = vunpack.c.h.b16 %v544
    %v1145 = vunpack.c.l.b16 %v545
    %v1146 = vunpack.c.h.b16 %v545
    %v1147 = vunpack.c.l.b16 %v546
    %v1148 = vunpack.c.h.b16 %v546
    %v1149 = vunpack.c.l.b16 %v547
    %v1150 = vunpack.c.h.b16 %v547
    %v1151 = vunpack.c.l.b16 %v548
    %v1152 = vunpack.c.h.b16 %v548
    %v1153 = vunpack.c.l.b16 %v549
    %v1154 = vunpack.c.h.b16 %v549
    %v1155 = vunpack.c.l.b16 %v550
    %v1156 = vunpack.c.h.b16 %v550
    %v1157 = vunpack.c.l.b16 %v551
    %v1158 = vunpack.c.h.b16 %v551
    %v1159 = vunpack.c.l.b16 %v552
    %v1160 = vunpack.c.h.b16 %v552
    %v1161 = vunpack.c.l.b16 %v553
    %v1162 = vunpack.c.h.b16 %v553
    %v1163 = vunpack.c.l.b16 %v554
    %v1164 = vunpack.c.h.b16 %v554
    %v1165 = vpack.c.b16 %v777, %v773
    %v1166 = vpack.c.b16 %v778, %v774
    %v1167 = vpack.c.b16 %v779, %v775
    %v1168 = vpack.c.b16 %v780, %v776
    %v1169 = vpack.c.b16 %v785, %v781
    %v1170 = vpack.c.b16 %v786, %v782
    %v1171 = vpack.c.b16 %v787, %v783
    %v1172 = vpack.c.b16 %v788, %v784
    %v1173 = vpack.c.b16 %v793, %v789
    %v1174 = vpack.c.b16 %v794, %v790
    %v1175 = vpack.c.b16 %v795, %v791
    %v1176 = vpack.c.b16 %v796, %v792
    %v1177 = vpack.c.b16 %v801, %v797
    %v1178 = vpack.c.b16 %v802, %v798
    %v1179 = vpack.c.b16 %v803, %v799
    %v1180 = vpack.c.b16 %v804, %v800
    %v1181 = vpack.c.b16 %v809, %v805
    %v1182 = vpack.c.b16 %v810, %v806
    %v1183 = vpack.c.b16 %v811, %v807
    %v1184 = vpack.c.b16 %v812, %v808
    %v1185 = vpack.c.b16 %v817, %v813
    %v1186 = vpack.c.b16 %v818, %v814
    %v1187 = vpack.c.b16 %v819, %v815
    %v1188 = vpack.c.b16 %v820, %v816
    %v1189 = vpack.c.b16 %v825, %v821
    %v1190 = vpack.c.b16 %v826, %v822
    %v1191 = vpack.c.b16 %v827, %v823
    %v1192 = vpack.c.b16 %v828, %v824
    %v1193 = vpack.c.b16 %v833, %v829
    %v1194 = vpack.c.b16 %v834, %v830
    %v1195 = vpack.c.b16 %v835, %v831
    %v1196 = vpack.c.b16 %v836, %v832
    %v1197 = vpack.c.b16 %v841, %v837
    %v1198 = vpack.c.b16 %v842, %v838
    %v1199 = vpack.c.b16 %v843, %v839
    %v1200 = vpack.c.b16 %v844, %v840
    %v1201 = vpack.c.b16 %v849, %v845
    %v1202 = vpack.c.b16 %v850, %v846
    %v1203 = vpack.c.b16 %v851, %v847
    %v1204 = vpack.c.b16 %v852, %v848
    %v1205 = vpack.c.b16 %v857, %v853
    %v1206 = vpack.c.b16 %v858, %v854
    %v1207 = vpack.c.b16 %v859, %v855
    %v1208 = vpack.c.b16 %v860, %v856
    %v1209 = vpack.c.b16 %v865, %v861
    %v1210 = vpack.c.b16 %v866, %v862
    %v1211 = vpack.c.b16 %v867, %v863
    %v1212 = vpack.c.b16 %v868, %v864
    %v1213 = vpack.c.b16 %v873, %v869
    %v1214 = vpack.c.b16 %v874, %v870
    %v1215 = vpack.c.b16 %v875, %v871
    %v1216 = vpack.c.b16 %v876, %v872
    %v1217 = vpack.c.b16 %v881, %v877
    %v1218 = vpack.c.b16 %v882, %v878
    %v1219 = vpack.c.b16 %v883, %v879
    %v1220 = vpack.c.b16 %v884, %v880
    %v1221 = vpack.c.b16 %v889, %v885
    %v1222 = vpack.c.b16 %v890, %v886
    %v1223 = vpack.c.b16 %v891, %v887
    %v1224 = vpack.c.b16 %v892, %v888
    %v1225 = vpack.c.b16 %v897, %v893
    %v1226 = vpack.c.b16 %v898, %v894
    %v1227 = vpack.c.b16 %v899, %v895
    %v1228 = vpack.c.b16 %v900, %v896
    %v1229 = vpack.c.b16 %v905, %v901
    %v1230 = vpack.c.b16 %v906, %v902
    %v1231 = vpack.c.b16 %v907, %v903
    %v1232 = vpack.c.b16 %v908, %v904
    %v1233 = vpack.c.b16 %v913, %v909
    %v1234 = vpack.c.b16 %v914, %v910
    %v1235 = vpack.c.b16 %v915, %v911
    %v1236 = vpack.c.b16 %v916, %v912
    %v1237 = vpack.c.b16 %v921, %v917
    %v1238 = vpack.c.b16 %v922, %v918
    %v1239 = vpack.c.b16 %v923, %v919
    %v1240 = vpack.c.b16 %v924, %v920
    %v1241 = vpack.c.b16 %v929, %v925
    %v1242 = vpack.c.b16 %v930, %v926
    %v1243 = vpack.c.b16 %v931, %v927
    %v1244 = vpack.c.b16 %v932, %v928
    %v1245 = vpack.c.b16 %v937, %v933
    %v1246 = vpack.c.b16 %v938, %v934
    %v1247 = vpack.c.b16 %v939, %v935
    %v1248 = vpack.c.b16 %v940, %v936
    %v1249 = vpack.c.b16 %v945, %v941
    %v1250 = vpack.c.b16 %v946, %v942
    %v1251 = vpack.c.b16 %v947, %v943
    %v1252 = vpack.c.b16 %v948, %v944
    %v1253 = vpack.c.b16 %v953, %v949
    %v1254 = vpack.c.b16 %v954, %v950
    %v1255 = vpack.c.b16 %v955, %v951
    %v1256 = vpack.c.b16 %v956, %v952
    %v1257 = vpack.c.b16 %v961, %v957
    %v1258 = vpack.c.b16 %v962, %v958
    %v1259 = vpack.c.b16 %v963, %v959
    %v1260 = vpack.c.b16 %v964, %v960
    %v1261 = vpack.c.b16 %v969, %v965
    %v1262 = vpack.c.b16 %v970, %v966
    %v1263 = vpack.c.b16 %v971, %v967
    %v1264 = vpack.c.b16 %v972, %v968
    %v1265 = vpack.c.b16 %v977, %v973
    %v1266 = vpack.c.b16 %v978, %v974
    %v1267 = vpack.c.b16 %v979, %v975
    %v1268 = vpack.c.b16 %v980, %v976
    %v1269 = vpack.c.b16 %v985, %v981
    %v1270 = vpack.c.b16 %v986, %v982
    %v1271 = vpack.c.b16 %v987, %v983
    %v1272 = vpack.c.b16 %v988, %v984
    %v1273 = vpack.c.b16 %v993, %v989
    %v1274 = vpack.c.b16 %v994, %v990
    %v1275 = vpack.c.b16 %v995, %v991
    %v1276 = vpack.c.b16 %v996, %v992
    %v1277 = vpack.c.b16 %v1001, %v997
    %v1278 = vpack.c.b16 %v1002, %v998
    %v1279 = vpack.c.b16 %v1003, %v999
    %v1280 = vpack.c.b16 %v1004, %v1000
    %v1281 = vpack.c.b16 %v1009, %v1005
    %v1282 = vpack.c.b16 %v1010, %v1006
    %v1283 = vpack.c.b16 %v1011, %v1007
    %v1284 = vpack.c.b16 %v1012, %v1008
    %v1285 = vpack.c.b16 %v1017, %v1013
    %v1286 = vpack.c.b16 %v1018, %v1014
    %v1287 = vpack.c.b16 %v1019, %v1015
    %v1288 = vpack.c.b16 %v1020, %v1016
    %v1289 = vpack.c.b16 %v1025, %v1021
    %v1290 = vpack.c.b16 %v1026, %v1022
    %v1291 = vpack.c.b16 %v1027, %v1023
    %v1292 = vpack.c.b16 %v1028, %v1024
    %v1293 = vpack.c.b16 %v1033, %v1029
    %v1294 = vpack.c.b16 %v1034, %v1030
    %v1295 = vpack.c.b16 %v1035, %v1031
    %v1296 = vpack.c.b16 %v1036, %v1032
    %v1297 = vpack.c.b16 %v1041, %v1037
    %v1298 = vpack.c.b16 %v1042, %v1038
    %v1299 = vpack.c.b16 %v1043, %v1039
    %v1300 = vpack.c.b16 %v1044, %v1040
    %v1301 = vpack.c.b16 %v1049, %v1045
    %v1302 = vpack.c.b16 %v1050, %v1046
    %v1303 = vpack.c.b16 %v1051, %v1047
    %v1304 = vpack.c.b16 %v1052, %v1048
    %v1305 = vpack.c.b16 %v1057, %v1053
    %v1306 = vpack.c.b16 %v1058, %v1054
    %v1307 = vpack.c.b16 %v1059, %v1055
    %v1308 = vpack.c.b16 %v1060, %v1056
    %v1309 = vpack.c.b16 %v1065, %v1061
    %v1310 = vpack.c.b16 %v1066, %v1062
    %v1311 = vpack.c.b16 %v1067, %v1063
    %v1312 = vpack.c.b16 %v1068, %v1064
    %v1313 = vpack.c.b16 %v1073, %v1069
    %v1314 = vpack.c.b16 %v1074, %v1070
    %v1315 = vpack.c.b16 %v1075, %v1071
    %v1316 = vpack.c.b16 %v1076, %v1072
    %v1317 = vpack.c.b16 %v1081, %v1077
    %v1318 = vpack.c.b16 %v1082, %v1078
    %v1319 = vpack.c.b16 %v1083, %v1079
    %v1320 = vpack.c.b16 %v1084, %v1080
    %v1321 = vpack.c.b16 %v1089, %v1085
    %v1322 = vpack.c.b16 %v1090, %v1086
    %v1323 = vpack.c.b16 %v1091, %v1087
    %v1324 = vpack.c.b16 %v1092, %v1088
    %v1325 = vpack.c.b16 %v1097, %v1093
    %v1326 = vpack.c.b16 %v1098, %v1094
    %v1327 = vpack.c.b16 %v1099, %v1095
    %v1328 = vpack.c.b16 %v1100, %v1096
    %v1329 = vpack.c.b16 %v1105, %v1101
    %v1330 = vpack.c.b16 %v1106, %v1102
    %v1331 = vpack.c.b16 %v1107, %v1103
    %v1332 = vpack.c.b16 %v1108, %v1104
    %v1333 = vpack.c.b16 %v1113, %v1109
    %v1334 = vpack.c.b16 %v1114, %v1110
    %v1335 = vpack.c.b16 %v1115, %v1111
    %v1336 = vpack.c.b16 %v1116, %v1112
    %v1337 = vpack.c.b16 %v1121, %v1117
    %v1338 = vpack.c.b16 %v1122, %v1118
    %v1339 = vpack.c.b16 %v1123, %v1119
    %v1340 = vpack.c.b16 %v1124, %v1120
    %v1341 = vpack.c.b16 %v1129, %v1125
    %v1342 = vpack.c.b16 %v1130, %v1126
    %v1343 = vpack.c.b16 %v1131, %v1127
    %v1344 = vpack.c.b16 %v1132, %v1128
    %v1345 = vpack.c.b16 %v1137, %v1133
    %v1346 = vpack.c.b16 %v1138, %v1134
    %v1347 = vpack.c.b16 %v1139, %v1135
    %v1348 = vpack.c.b16 %v1140, %v1136
    %v1349 = vpack.c.b16 %v1145, %v1141
    %v1350 = vpack.c.b16 %v1146, %v1142
    %v1351 = vpack.c.b16 %v1147, %v1143
    %v1352 = vpack.c.b16 %v1148, %v1144
    %v1353 = vpack.c.b16 %v1153, %v1149
    %v1354 = vpack.c.b16 %v1154, %v1150
    %v1355 = vpack.c.b16 %v1155, %v1151
    %v1356 = vpack.c.b16 %v1156, %v1152
    %v1357 = vpack.c.b16 %v1161, %v1157
    %v1358 = vpack.c.b16 %v1162, %v1158
    %v1359 = vpack.c.b16 %v1163, %v1159
    %v1360 = vpack.c.b16 %v1164, %v1160
    %vm1557 = vcmask 130048
    %v1559 = vsel %vm1557, %v358, 0
    %1561 = vmatprep.subr.bf16.mxu0 %v1166
    %1562 = vmatpush1.bf16.msra.mxu0 %v1165
    %1563 = vmatprep.subr.bf16.mxu0 %v1170
    %1564 = vmatpush1.bf16.msra.mxu0 %v1169
    %1565 = vmatprep.subr.bf16.mxu0 %v1174
    %1566 = vmatpush1.bf16.msra.mxu0 %v1173
    %1567 = vmatprep.subr.bf16.mxu0 %v1178
    %1568 = vmatpush1.bf16.msra.mxu0 %v1177
    %1569 = vmatprep.subr.bf16.mxu0 %v1182
    %1570 = vmatpush1.bf16.msra.mxu0 %v1181
    %1571 = vmatprep.subr.bf16.mxu0 %v1186
    %1572 = vmatpush1.bf16.msra.mxu0 %v1185
    %1573 = vmatprep.subr.bf16.mxu0 %v1190
    %1574 = vmatpush1.bf16.msra.mxu0 %v1189
    %1575 = vmatprep.subr.bf16.mxu0 %v1194
    %1576 = vmatpush1.bf16.msra.mxu0 %v1193
    %1577 = vmatprep.subr.bf16.mxu0 %v1198
    %1578 = vmatpush1.bf16.msra.mxu0 %v1197
    %1579 = vmatprep.subr.bf16.mxu0 %v1202
    %1580 = vmatpush1.bf16.msra.mxu0 %v1201
    %1581 = vmatprep.subr.bf16.mxu0 %v1206
    %1582 = vmatpush1.bf16.msra.mxu0 %v1205
    %1583 = vmatprep.subr.bf16.mxu0 %v1210
    %1584 = vmatpush1.bf16.msra.mxu0 %v1209
    %1585 = vmatprep.subr.bf16.mxu0 %v1214
    %1586 = vmatpush1.bf16.msra.mxu0 %v1213
    %1587 = vmatprep.subr.bf16.mxu0 %v1218
    %1588 = vmatpush1.bf16.msra.mxu0 %v1217
    %1589 = vmatprep.subr.bf16.mxu0 %v1222
    %1590 = vmatpush1.bf16.msra.mxu0 %v1221
    %1591 = vmatprep.subr.bf16.mxu0 %v1226
    %1592 = vmatpush1.bf16.msra.mxu0 %v1225
    %1593 = vmatprep.mubr.bf16.mxu0 %v353
    %1594 = vmatmul.mubr.bf16.gmra.mrb[0].mxu0 %v352
    %v1595 = vpop.f32.mrb[0].mxu0
    %v1596 = vadd.f32 %v560, %v1595
    %v1597 = vpop.f32.mrb[0].mxu0
    %v1598 = vadd.f32 %v564, %v1597
    %v1599 = vpop.f32.mrb[0].mxu0
    %v1600 = vpop.f32.mrb[0].mxu0
    %1601 = vdwg.mxu0
    %1602 = vmatprep.subr.bf16.mxu0 %v1230
    %1603 = vmatpush1.bf16.msra.mxu0 %v1229
    %1604 = vmatprep.subr.bf16.mxu0 %v1234
    %1605 = vmatpush1.bf16.msra.mxu0 %v1233
    %1606 = vmatprep.subr.bf16.mxu0 %v1238
    %1607 = vmatpush1.bf16.msra.mxu0 %v1237
    %1608 = vmatprep.subr.bf16.mxu0 %v1242
    %1609 = vmatpush1.bf16.msra.mxu0 %v1241
    %1610 = vmatprep.subr.bf16.mxu0 %v1246
    %1611 = vmatpush1.bf16.msra.mxu0 %v1245
    %1612 = vmatprep.subr.bf16.mxu0 %v1250
    %1613 = vmatpush1.bf16.msra.mxu0 %v1249
    %1614 = vmatprep.subr.bf16.mxu0 %v1254
    %1615 = vmatpush1.bf16.msra.mxu0 %v1253
    %1616 = vmatprep.subr.bf16.mxu0 %v1258
    %1617 = vmatpush1.bf16.msra.mxu0 %v1257
    %1618 = vmatprep.subr.bf16.mxu0 %v1262
    %1619 = vmatpush1.bf16.msra.mxu0 %v1261
    %1620 = vmatprep.subr.bf16.mxu0 %v1266
    %1621 = vmatpush1.bf16.msra.mxu0 %v1265
    %1622 = vmatprep.subr.bf16.mxu0 %v1270
    %1623 = vmatpush1.bf16.msra.mxu0 %v1269
    %1624 = vmatprep.subr.bf16.mxu0 %v1274
    %1625 = vmatpush1.bf16.msra.mxu0 %v1273
    %1626 = vmatprep.subr.bf16.mxu0 %v1278
    %1627 = vmatpush1.bf16.msra.mxu0 %v1277
    %1628 = vmatprep.subr.bf16.mxu0 %v1282
    %1629 = vmatpush1.bf16.msra.mxu0 %v1281
    %1630 = vmatprep.subr.bf16.mxu0 %v1286
    %1631 = vmatpush1.bf16.msra.mxu0 %v1285
    %1632 = vmatprep.subr.bf16.mxu0 %v1290
    %1633 = vmatpush1.bf16.msra.mxu0 %v1289
    %1634 = vmatprep.mubr.bf16.mxu0 %v355
    %1635 = vmatmul.mubr.bf16.gmra.mrb[0].mxu0 %v354
    %v1636 = vpop.f32.mrb[0].mxu0
    %v1637 = vadd.f32 %v1596, %v1636
    %v1638 = vpop.f32.mrb[0].mxu0
    %v1639 = vadd.f32 %v1598, %v1638
    %v1640 = vpop.f32.mrb[0].mxu0
    %v1641 = vpop.f32.mrb[0].mxu0
    %1642 = vdwg.mxu0
    %1643 = vmatprep.subr.bf16.mxu0 %v1294
    %1644 = vmatpush1.bf16.msra.mxu0 %v1293
    %1645 = vmatprep.subr.bf16.mxu0 %v1298
    %1646 = vmatpush1.bf16.msra.mxu0 %v1297
    %1647 = vmatprep.subr.bf16.mxu0 %v1302
    %1648 = vmatpush1.bf16.msra.mxu0 %v1301
    %1649 = vmatprep.subr.bf16.mxu0 %v1306
    %1650 = vmatpush1.bf16.msra.mxu0 %v1305
    %1651 = vmatprep.subr.bf16.mxu0 %v1310
    %1652 = vmatpush1.bf16.msra.mxu0 %v1309
    %1653 = vmatprep.subr.bf16.mxu0 %v1314
    %1654 = vmatpush1.bf16.msra.mxu0 %v1313
    %1655 = vmatprep.subr.bf16.mxu0 %v1318
    %1656 = vmatpush1.bf16.msra.mxu0 %v1317
    %1657 = vmatprep.subr.bf16.mxu0 %v1322
    %1658 = vmatpush1.bf16.msra.mxu0 %v1321
    %1659 = vmatprep.subr.bf16.mxu0 %v1326
    %1660 = vmatpush1.bf16.msra.mxu0 %v1325
    %1661 = vmatprep.subr.bf16.mxu0 %v1330
    %1662 = vmatpush1.bf16.msra.mxu0 %v1329
    %1663 = vmatprep.subr.bf16.mxu0 %v1334
    %1664 = vmatpush1.bf16.msra.mxu0 %v1333
    %1665 = vmatprep.subr.bf16.mxu0 %v1338
    %1666 = vmatpush1.bf16.msra.mxu0 %v1337
    %1667 = vmatprep.subr.bf16.mxu0 %v1342
    %1668 = vmatpush1.bf16.msra.mxu0 %v1341
    %1669 = vmatprep.subr.bf16.mxu0 %v1346
    %1670 = vmatpush1.bf16.msra.mxu0 %v1345
    %1671 = vmatprep.subr.bf16.mxu0 %v1350
    %1672 = vmatpush1.bf16.msra.mxu0 %v1349
    %1673 = vmatprep.subr.bf16.mxu0 %v1354
    %1674 = vmatpush1.bf16.msra.mxu0 %v1353
    %1675 = vmatprep.mubr.bf16.mxu0 %v357
    %1676 = vmatmul.mubr.bf16.gmra.mrb[0].mxu0 %v356
    %v1677 = vpop.f32.mrb[0].mxu0
    %v1678 = vadd.f32 %v1637, %v1677
    %v1679 = vpop.f32.mrb[0].mxu0
    %v1680 = vadd.f32 %v1639, %v1679
    %v1681 = vpop.f32.mrb[0].mxu0
    %v1682 = vpop.f32.mrb[0].mxu0
    %1683 = vdwg.mxu0
    %1684 = vmatprep.subr.bf16.mxu0 %v1358
    %1685 = vmatpush1.bf16.msra.mxu0 %v1357
    %1686 = vmatprep.subr.bf16.mxu0 0
    %1687 = vmatpush1.bf16.msra.mxu0 0
    %1688 = vmatprep.subr.bf16.mxu0 0
    %1689 = vmatpush1.bf16.msra.mxu0 0
    %1690 = vmatprep.subr.bf16.mxu0 0
    %1691 = vmatpush1.bf16.msra.mxu0 0
    %1692 = vmatprep.subr.bf16.mxu0 0
    %1693 = vmatpush1.bf16.msra.mxu0 0
    %1694 = vmatprep.subr.bf16.mxu0 0
    %1695 = vmatpush1.bf16.msra.mxu0 0
    %1696 = vmatprep.subr.bf16.mxu0 0
    %1697 = vmatpush1.bf16.msra.mxu0 0
    %1698 = vmatprep.subr.bf16.mxu0 0
    %1699 = vmatpush1.bf16.msra.mxu0 0
    %1700 = vmatprep.subr.bf16.mxu0 0
    %1701 = vmatpush1.bf16.msra.mxu0 0
    %1702 = vmatprep.subr.bf16.mxu0 0
    %1703 = vmatpush1.bf16.msra.mxu0 0
    %1704 = vmatprep.subr.bf16.mxu0 0
    %1705 = vmatpush1.bf16.msra.mxu0 0
    %1706 = vmatprep.subr.bf16.mxu0 0
    %1707 = vmatpush1.bf16.msra.mxu0 0
    %1708 = vmatprep.subr.bf16.mxu0 0
    %1709 = vmatpush1.bf16.msra.mxu0 0
    %1710 = vmatprep.subr.bf16.mxu0 0
    %1711 = vmatpush1.bf16.msra.mxu0 0
    %1712 = vmatprep.subr.bf16.mxu0 0
    %1713 = vmatpush1.bf16.msra.mxu0 0
    %1714 = vmatprep.subr.bf16.mxu0 0
    %1715 = vmatpush1.bf16.msra.mxu0 0
    %1716 = vmatprep.mubr.bf16.mxu0 0
    %1717 = vmatmul.mubr.bf16.gmra.mrb[0].mxu0 %v1559
    %v1718 = vpop.f32.mrb[0].mxu0
    %v1719 = vadd.f32 %v1678, %v1718
    %v1720 = vpop.f32.mrb[0].mxu0
    %v1721 = vadd.f32 %v1680, %v1720
    %v1722 = vpop.f32.mrb[0].mxu0
    %v1723 = vpop.f32.mrb[0].mxu0
    %1724 = vdwg.mxu0
    %1725 = vmatprep.subr.bf16.mxu0 %v1168
    %1726 = vmatpush1.bf16.msra.mxu0 %v1167
    %1727 = vmatprep.subr.bf16.mxu0 %v1172
    %1728 = vmatpush1.bf16.msra.mxu0 %v1171
    %1729 = vmatprep.subr.bf16.mxu0 %v1176
    %1730 = vmatpush1.bf16.msra.mxu0 %v1175
    %1731 = vmatprep.subr.bf16.mxu0 %v1180
    %1732 = vmatpush1.bf16.msra.mxu0 %v1179
    %1733 = vmatprep.subr.bf16.mxu0 %v1184
    %1734 = vmatpush1.bf16.msra.mxu0 %v1183
    %1735 = vmatprep.subr.bf16.mxu0 %v1188
    %1736 = vmatpush1.bf16.msra.mxu0 %v1187
    %1737 = vmatprep.subr.bf16.mxu0 %v1192
    %1738 = vmatpush1.bf16.msra.mxu0 %v1191
    %1739 = vmatprep.subr.bf16.mxu0 %v1196
    %1740 = vmatpush1.bf16.msra.mxu0 %v1195
    %1741 = vmatprep.subr.bf16.mxu0 %v1200
    %1742 = vmatpush1.bf16.msra.mxu0 %v1199
    %1743 = vmatprep.subr.bf16.mxu0 %v1204
    %1744 = vmatpush1.bf16.msra.mxu0 %v1203
    %1745 = vmatprep.subr.bf16.mxu0 %v1208
    %1746 = vmatpush1.bf16.msra.mxu0 %v1207
    %1747 = vmatprep.subr.bf16.mxu0 %v1212
    %1748 = vmatpush1.bf16.msra.mxu0 %v1211
    %1749 = vmatprep.subr.bf16.mxu0 %v1216
    %1750 = vmatpush1.bf16.msra.mxu0 %v1215
    %1751 = vmatprep.subr.bf16.mxu0 %v1220
    %1752 = vmatpush1.bf16.msra.mxu0 %v1219
    %1753 = vmatprep.subr.bf16.mxu0 %v1224
    %1754 = vmatpush1.bf16.msra.mxu0 %v1223
    %1755 = vmatprep.subr.bf16.mxu0 %v1228
    %1756 = vmatpush1.bf16.msra.mxu0 %v1227
    %1757 = vmatprep.mubr.bf16.mxu0 %v353
    %1758 = vmatmul.mubr.bf16.gmra.mrb[0].mxu0 %v352
    %v1759 = vpop.f32.mrb[0].mxu0
    %v1760 = vadd.f32 %v568, %v1759
    %v1761 = vpop.f32.mrb[0].mxu0
    %v1762 = vadd.f32 %v572, %v1761
    %v1763 = vpop.f32.mrb[0].mxu0
    %v1764 = vpop.f32.mrb[0].mxu0
    %1765 = vdwg.mxu0
    %1766 = vmatprep.subr.bf16.mxu0 %v1232
    %1767 = vmatpush1.bf16.msra.mxu0 %v1231
    %1768 = vmatprep.subr.bf16.mxu0 %v1236
    %1769 = vmatpush1.bf16.msra.mxu0 %v1235
    %1770 = vmatprep.subr.bf16.mxu0 %v1240
    %1771 = vmatpush1.bf16.msra.mxu0 %v1239
    %1772 = vmatprep.subr.bf16.mxu0 %v1244
    %1773 = vmatpush1.bf16.msra.mxu0 %v1243
    %1774 = vmatprep.subr.bf16.mxu0 %v1248
    %1775 = vmatpush1.bf16.msra.mxu0 %v1247
    %1776 = vmatprep.subr.bf16.mxu0 %v1252
    %1777 = vmatpush1.bf16.msra.mxu0 %v1251
    %1778 = vmatprep.subr.bf16.mxu0 %v1256
    %1779 = vmatpush1.bf16.msra.mxu0 %v1255
    %1780 = vmatprep.subr.bf16.mxu0 %v1260
    %1781 = vmatpush1.bf16.msra.mxu0 %v1259
    %1782 = vmatprep.subr.bf16.mxu0 %v1264
    %1783 = vmatpush1.bf16.msra.mxu0 %v1263
    %1784 = vmatprep.subr.bf16.mxu0 %v1268
    %1785 = vmatpush1.bf16.msra.mxu0 %v1267
    %1786 = vmatprep.subr.bf16.mxu0 %v1272
    %1787 = vmatpush1.bf16.msra.mxu0 %v1271
    %1788 = vmatprep.subr.bf16.mxu0 %v1276
    %1789 = vmatpush1.bf16.msra.mxu0 %v1275
    %1790 = vmatprep.subr.bf16.mxu0 %v1280
    %1791 = vmatpush1.bf16.msra.mxu0 %v1279
    %1792 = vmatprep.subr.bf16.mxu0 %v1284
    %1793 = vmatpush1.bf16.msra.mxu0 %v1283
    %1794 = vmatprep.subr.bf16.mxu0 %v1288
    %1795 = vmatpush1.bf16.msra.mxu0 %v1287
    %1796 = vmatprep.subr.bf16.mxu0 %v1292
    %1797 = vmatpush1.bf16.msra.mxu0 %v1291
    %1798 = vmatprep.mubr.bf16.mxu0 %v355
    %1799 = vmatmul.mubr.bf16.gmra.mrb[0].mxu0 %v354
    %v1800 = vpop.f32.mrb[0].mxu0
    %v1801 = vadd.f32 %v1760, %v1800
    %v1802 = vpop.f32.mrb[0].mxu0
    %v1803 = vadd.f32 %v1762, %v1802
    %v1804 = vpop.f32.mrb[0].mxu0
    %v1805 = vpop.f32.mrb[0].mxu0
    %1806 = vdwg.mxu0
    %1807 = vmatprep.subr.bf16.mxu0 %v1296
    %1808 = vmatpush1.bf16.msra.mxu0 %v1295
    %1809 = vmatprep.subr.bf16.mxu0 %v1300
    %1810 = vmatpush1.bf16.msra.mxu0 %v1299
    %1811 = vmatprep.subr.bf16.mxu0 %v1304
    %1812 = vmatpush1.bf16.msra.mxu0 %v1303
    %1813 = vmatprep.subr.bf16.mxu0 %v1308
    %1814 = vmatpush1.bf16.msra.mxu0 %v1307
    %1815 = vmatprep.subr.bf16.mxu0 %v1312
    %1816 = vmatpush1.bf16.msra.mxu0 %v1311
    %1817 = vmatprep.subr.bf16.mxu0 %v1316
    %1818 = vmatpush1.bf16.msra.mxu0 %v1315
    %1819 = vmatprep.subr.bf16.mxu0 %v1320
    %1820 = vmatpush1.bf16.msra.mxu0 %v1319
    %1821 = vmatprep.subr.bf16.mxu0 %v1324
    %1822 = vmatpush1.bf16.msra.mxu0 %v1323
    %1823 = vmatprep.subr.bf16.mxu0 %v1328
    %1824 = vmatpush1.bf16.msra.mxu0 %v1327
    %1825 = vmatprep.subr.bf16.mxu0 %v1332
    %1826 = vmatpush1.bf16.msra.mxu0 %v1331
    %1827 = vmatprep.subr.bf16.mxu0 %v1336
    %1828 = vmatpush1.bf16.msra.mxu0 %v1335
    %1829 = vmatprep.subr.bf16.mxu0 %v1340
    %1830 = vmatpush1.bf16.msra.mxu0 %v1339
    %1831 = vmatprep.subr.bf16.mxu0 %v1344
    %1832 = vmatpush1.bf16.msra.mxu0 %v1343
    %1833 = vmatprep.subr.bf16.mxu0 %v1348
    %1834 = vmatpush1.bf16.msra.mxu0 %v1347
    %1835 = vmatprep.subr.bf16.mxu0 %v1352
    %1836 = vmatpush1.bf16.msra.mxu0 %v1351
    %1837 = vmatprep.subr.bf16.mxu0 %v1356
    %1838 = vmatpush1.bf16.msra.mxu0 %v1355
    %1839 = vmatprep.mubr.bf16.mxu0 %v357
    %1840 = vmatmul.mubr.bf16.gmra.mrb[0].mxu0 %v356
    %v1841 = vpop.f32.mrb[0].mxu0
    %v1842 = vadd.f32 %v1801, %v1841
    %v1843 = vpop.f32.mrb[0].mxu0
    %v1844 = vadd.f32 %v1803, %v1843
    %v1845 = vpop.f32.mrb[0].mxu0
    %v1846 = vpop.f32.mrb[0].mxu0
    %1847 = vdwg.mxu0
    %1848 = vmatprep.subr.bf16.mxu0 %v1360
    %1849 = vmatpush1.bf16.msra.mxu0 %v1359
    %1850 = vmatprep.subr.bf16.mxu0 0
    %1851 = vmatpush1.bf16.msra.mxu0 0
    %1852 = vmatprep.subr.bf16.mxu0 0
    %1853 = vmatpush1.bf16.msra.mxu0 0
    %1854 = vmatprep.subr.bf16.mxu0 0
    %1855 = vmatpush1.bf16.msra.mxu0 0
    %1856 = vmatprep.subr.bf16.mxu0 0
    %1857 = vmatpush1.bf16.msra.mxu0 0
    %1858 = vmatprep.subr.bf16.mxu0 0
    %1859 = vmatpush1.bf16.msra.mxu0 0
    %1860 = vmatprep.subr.bf16.mxu0 0
    %1861 = vmatpush1.bf16.msra.mxu0 0
    %1862 = vmatprep.subr.bf16.mxu0 0
    %1863 = vmatpush1.bf16.msra.mxu0 0
    %1864 = vmatprep.subr.bf16.mxu0 0
    %1865 = vmatpush1.bf16.msra.mxu0 0
    %1866 = vmatprep.subr.bf16.mxu0 0
    %1867 = vmatpush1.bf16.msra.mxu0 0
    %1868 = vmatprep.subr.bf16.mxu0 0
    %1869 = vmatpush1.bf16.msra.mxu0 0
    %1870 = vmatprep.subr.bf16.mxu0 0
    %1871 = vmatpush1.bf16.msra.mxu0 0
    %1872 = vmatprep.subr.bf16.mxu0 0
    %1873 = vmatpush1.bf16.msra.mxu0 0
    %1874 = vmatprep.subr.bf16.mxu0 0
    %1875 = vmatpush1.bf16.msra.mxu0 0
    %1876 = vmatprep.subr.bf16.mxu0 0
    %1877 = vmatpush1.bf16.msra.mxu0 0
    %1878 = vmatprep.subr.bf16.mxu0 0
    %1879 = vmatpush1.bf16.msra.mxu0 0
    %1880 = vmatprep.mubr.bf16.mxu0 0
    %1881 = vmatmul.mubr.bf16.gmra.mrb[0].mxu0 %v1559
    %v1882 = vpop.f32.mrb[0].mxu0
    %v1883 = vadd.f32 %v1842, %v1882
    %v1884 = vpop.f32.mrb[0].mxu0
    %v1885 = vadd.f32 %v1844, %v1884
    %v1886 = vpop.f32.mrb[0].mxu0
    %v1887 = vpop.f32.mrb[0].mxu0
    %1888 = vdwg.mxu0
    %v1889 = vmax.f32 %v1719, 0.0
    %v1890 = vmax.f32 %v1721, 0.0
    %v1891 = vmax.f32 %v1883, 0.0
    %v1892 = vmax.f32 %v1885, 0.0
    %s1893 = sadd.s32 %s122, 2242054355
    %v1894 = vmul.u32 %v129, 512
    %v1895 = vadd.s32 %v1894, %v131
    %v1896 = vadd.s32 %v1894, %v132
    %v1897 = vadd.s32 %v1894, %v133
    %v1898 = vadd.s32 %v1894, %v134
    %v1899 = vstv %s1893
    %v1900 = vadd.s32 %v1899, %v1895
    %v1901 = vadd.s32 %v1899, %v1896
    %v1902 = vadd.s32 %v1899, %v1897
    %v1903 = vadd.s32 %v1899, %v1898
    %v1904 = vshrl.u32 %v1900, 16
    %v1905 = vshrl.u32 %v1901, 16
    %v1906 = vshrl.u32 %v1902, 16
    %v1907 = vshrl.u32 %v1903, 16
    %v1908 = vxor.u32 %v1900, %v1904
    %v1909 = vxor.u32 %v1901, %v1905
    %v1910 = vxor.u32 %v1902, %v1906
    %v1911 = vxor.u32 %v1903, %v1907
    %v1912 = vmul.u32 %v1908, 2146121005
    %v1913 = vmul.u32 %v1909, 2146121005
    %v1914 = vmul.u32 %v1910, 2146121005
    %v1915 = vmul.u32 %v1911, 2146121005
    %v1916 = vshrl.u32 %v1912, 15
    %v1917 = vshrl.u32 %v1913, 15
    %v1918 = vshrl.u32 %v1914, 15
    %v1919 = vshrl.u32 %v1915, 15
    %v1920 = vxor.u32 %v1912, %v1916
    %v1921 = vxor.u32 %v1913, %v1917
    %v1922 = vxor.u32 %v1914, %v1918
    %v1923 = vxor.u32 %v1915, %v1919
    %v1924 = vmul.u32 %v1920, 2221713035
    %v1925 = vmul.u32 %v1921, 2221713035
    %v1926 = vmul.u32 %v1922, 2221713035
    %v1927 = vmul.u32 %v1923, 2221713035
    %v1928 = vshrl.u32 %v1924, 16
    %v1929 = vshrl.u32 %v1925, 16
    %v1930 = vshrl.u32 %v1926, 16
    %v1931 = vshrl.u32 %v1927, 16
    %v1932 = vxor.u32 %v1924, %v1928
    %v1933 = vxor.u32 %v1925, %v1929
    %v1934 = vxor.u32 %v1926, %v1930
    %v1935 = vxor.u32 %v1927, %v1931
    %v1936 = vshrl.u32 %v1932, 9
    %v1937 = vshrl.u32 %v1933, 9
    %v1938 = vshrl.u32 %v1934, 9
    %v1939 = vshrl.u32 %v1935, 9
    %v1940 = vcvt.s32.f32 %v1936
    %v1941 = vcvt.s32.f32 %v1937
    %v1942 = vcvt.s32.f32 %v1938
    %v1943 = vcvt.s32.f32 %v1939
    %v1944 = vmul.f32 %v1940, 1.1920929e-07
    %v1945 = vmul.f32 %v1941, 1.1920929e-07
    %v1946 = vmul.f32 %v1942, 1.1920929e-07
    %v1947 = vmul.f32 %v1943, 1.1920929e-07
    %s1948 = sld [smem:[#allocation3 + $0x1]]
    %v1949 = vadd.f32 %v1944, 1e-07
    %v1950 = vadd.f32 %v1945, 1e-07
    %v1951 = vadd.f32 %v1946, 1e-07
    %v1952 = vadd.f32 %v1947, 1e-07
    %v1953 = vsub.f32 1.0, %v1944
    %v1954 = vsub.f32 1.0, %v1945
    %v1955 = vsub.f32 1.0, %v1946
    %v1956 = vsub.f32 1.0, %v1947
    %v1957 = vadd.f32 %v1953, 1e-07
    %v1958 = vadd.f32 %v1954, 1e-07
    %v1959 = vadd.f32 %v1955, 1e-07
    %v1960 = vadd.f32 %v1956, 1e-07
    %v1961 = vmul.f32 %v1949, %v1949
    %v1962 = vmul.f32 %v1950, %v1950
    %v1963 = vmul.f32 %v1951, %v1951
    %v1964 = vmul.f32 %v1952, %v1952
    %v1965 = vmul.f32 %v1961, %v1961
    %v1966 = vmul.f32 %v1962, %v1962
    %v1967 = vmul.f32 %v1963, %v1963
    %v1968 = vmul.f32 %v1964, %v1964
    %v1969 = vmul.f32 %v1965, %v1965
    %v1970 = vmul.f32 %v1966, %v1966
    %v1971 = vmul.f32 %v1967, %v1967
    %v1972 = vmul.f32 %v1968, %v1968
    %v1973 = vmul.f32 %v1969, %v1961
    %v1974 = vmul.f32 %v1970, %v1962
    %v1975 = vmul.f32 %v1971, %v1963
    %v1976 = vmul.f32 %v1972, %v1964
    %v1977 = vmul.f32 %v1957, %v1957
    %v1978 = vmul.f32 %v1958, %v1958
    %v1979 = vmul.f32 %v1959, %v1959
    %v1980 = vmul.f32 %v1960, %v1960
    %v1981 = vmul.f32 %v1977, %v1977
    %v1982 = vmul.f32 %v1978, %v1978
    %v1983 = vmul.f32 %v1979, %v1979
    %v1984 = vmul.f32 %v1980, %v1980
    %v1985 = vmul.f32 %v1981, %v1981
    %v1986 = vmul.f32 %v1982, %v1982
    %v1987 = vmul.f32 %v1983, %v1983
    %v1988 = vmul.f32 %v1984, %v1984
    %v1989 = vmul.f32 %v1985, %v1977
    %v1990 = vmul.f32 %v1986, %v1978
    %v1991 = vmul.f32 %v1987, %v1979
    %v1992 = vmul.f32 %v1988, %v1980
    %v1993 = vstv %s1948
    %v1994 = vmul.f32 %v1993, %v1989
    %v1995 = vmul.f32 %v1993, %v1990
    %v1996 = vmul.f32 %v1993, %v1991
    %v1997 = vmul.f32 %v1993, %v1992
    %v1998 = vadd.f32 %v1973, %v1994
    %v1999 = vadd.f32 %v1974, %v1995
    %v2000 = vadd.f32 %v1975, %v1996
    %v2001 = vadd.f32 %v1976, %v1997
    %v2002 = vrcp.pop %v1998
    %v2003 = vmul.f32 %v1994, %v2002
    %v2004 = vrcp.pop %v1999
    %v2005 = vmul.f32 %v1995, %v2004
    %v2006 = vrcp.pop %v2000
    %v2007 = vmul.f32 %v1996, %v2006
    %v2008 = vrcp.pop %v2001
    %v2009 = vmul.f32 %v1997, %v2008
    %v2010 = vmul.f32 %v1889, %v2003
    %v2011 = vmul.f32 %v1890, %v2005
    %v2012 = vmul.f32 %v1891, %v2007
    %v2013 = vmul.f32 %v1892, %v2009
    %v2014 = vpack.c.bf16 %v2010, %v2010
    %v2015 = vpack.c.bf16 %v2011, %v2011
    %v2016 = vpack.c.bf16 %v2012, %v2012
    %v2017 = vpack.c.bf16 %v2013, %v2013
    %v2018 = vld [vmem:[#allocation10] sm:$0xff]
    %v2019 = vld [vmem:[#allocation10 + $0x8] sm:$0xff]
    %v2020 = vld [vmem:[#allocation10 + $0x10] sm:$0xff]
    %v2021 = vld [vmem:[#allocation10 + $0x18] sm:$0xff]
    %v2022 = vld [vmem:[#allocation10 + $0x20] sm:$0xff]
    %v2023 = vld [vmem:[#allocation10 + $0x28] sm:$0xff]
    %v2024 = vld [vmem:[#allocation10 + $0x30] sm:$0xff]
    %v2025 = vld [vmem:[#allocation10 + $0x38] sm:$0xff]
    %v2026 = vld [vmem:[#allocation10 + $0x40] sm:$0xff]
    %v2027 = vld [vmem:[#allocation10 + $0x48] sm:$0xff]
    %v2028 = vld [vmem:[#allocation10 + $0x50] sm:$0xff]
    %v2029 = vld [vmem:[#allocation10 + $0x58] sm:$0xff]
    %v2030 = vld [vmem:[#allocation10 + $0x60] sm:$0xff]
    %v2031 = vld [vmem:[#allocation10 + $0x68] sm:$0xff]
    %v2032 = vld [vmem:[#allocation10 + $0x70] sm:$0xff]
    %v2033 = vld [vmem:[#allocation10 + $0x78] sm:$0xff]
    %v2034 = vld [vmem:[#allocation10 + $0x80] sm:$0xff]
    %v2035 = vld [vmem:[#allocation10 + $0x88] sm:$0xff]
    %v2036 = vld [vmem:[#allocation10 + $0x90] sm:$0xff]
    %v2037 = vld [vmem:[#allocation10 + $0x98] sm:$0xff]
    %v2038 = vld [vmem:[#allocation10 + $0xa0] sm:$0xff]
    %v2039 = vld [vmem:[#allocation10 + $0xa8] sm:$0xff]
    %v2040 = vld [vmem:[#allocation10 + $0xb0] sm:$0xff]
    %v2041 = vld [vmem:[#allocation10 + $0xb8] sm:$0xff]
    %v2042 = vld [vmem:[#allocation10 + $0xc0] sm:$0xff]
    %v2043 = vld [vmem:[#allocation10 + $0xc8] sm:$0xff]
    %v2044 = vld [vmem:[#allocation10 + $0xd0] sm:$0xff]
    %v2045 = vld [vmem:[#allocation10 + $0xd8] sm:$0xff]
    %v2046 = vld [vmem:[#allocation10 + $0xe0] sm:$0xff]
    %v2047 = vld [vmem:[#allocation10 + $0xe8] sm:$0xff]
    %v2048 = vld [vmem:[#allocation10 + $0xf0] sm:$0xff]
    %v2049 = vld [vmem:[#allocation10 + $0xf8] sm:$0xff]
    %v2050 = vld [vmem:[#allocation10 + $0x100] sm:$0xff]
    %v2051 = vld [vmem:[#allocation10 + $0x108] sm:$0xff]
    %v2052 = vld [vmem:[#allocation10 + $0x110] sm:$0xff]
    %v2053 = vld [vmem:[#allocation10 + $0x118] sm:$0xff]
    %v2054 = vld [vmem:[#allocation10 + $0x120] sm:$0xff]
    %v2055 = vld [vmem:[#allocation10 + $0x128] sm:$0xff]
    %v2056 = vld [vmem:[#allocation10 + $0x130] sm:$0xff]
    %v2057 = vld [vmem:[#allocation10 + $0x138] sm:$0xff]
    %v2058 = vld [vmem:[#allocation10 + $0x140] sm:$0xff]
    %v2059 = vld [vmem:[#allocation10 + $0x148] sm:$0xff]
    %v2060 = vld [vmem:[#allocation10 + $0x150] sm:$0xff]
    %v2061 = vld [vmem:[#allocation10 + $0x158] sm:$0xff]
    %v2062 = vld [vmem:[#allocation10 + $0x160] sm:$0xff]
    %v2063 = vld [vmem:[#allocation10 + $0x168] sm:$0xff]
    %v2064 = vld [vmem:[#allocation10 + $0x170] sm:$0xff]
    %v2065 = vld [vmem:[#allocation10 + $0x178] sm:$0xff]
    %v2066 = vld [vmem:[#allocation10 + $0x180] sm:$0xff]
    %v2067 = vld [vmem:[#allocation10 + $0x188] sm:$0xff]
    %v2068 = vld [vmem:[#allocation10 + $0x190] sm:$0xff]
    %v2069 = vld [vmem:[#allocation10 + $0x198] sm:$0xff]
    %v2070 = vld [vmem:[#allocation10 + $0x1a0] sm:$0xff]
    %v2071 = vld [vmem:[#allocation10 + $0x1a8] sm:$0xff]
    %v2072 = vld [vmem:[#allocation10 + $0x1b0] sm:$0xff]
    %v2073 = vld [vmem:[#allocation10 + $0x1b8] sm:$0xff]
    %v2074 = vld [vmem:[#allocation10 + $0x1c0] sm:$0xff]
    %v2075 = vld [vmem:[#allocation10 + $0x1c8] sm:$0xff]
    %v2076 = vld [vmem:[#allocation10 + $0x1d0] sm:$0xff]
    %v2077 = vld [vmem:[#allocation10 + $0x1d8] sm:$0xff]
    %v2078 = vld [vmem:[#allocation10 + $0x1e0] sm:$0xff]
    %v2079 = vld [vmem:[#allocation10 + $0x1e8] sm:$0xff]
    %v2080 = vld [vmem:[#allocation10 + $0x1f0] sm:$0xff]
    %v2081 = vld [vmem:[#allocation10 + $0x1f8] sm:$0xff]
    %v2082 = vld [vmem:[#allocation10 + $0x200] sm:$0xff]
    %v2083 = vld [vmem:[#allocation10 + $0x208] sm:$0xff]
    %v2084 = vld [vmem:[#allocation10 + $0x210] sm:$0xff]
    %v2085 = vld [vmem:[#allocation10 + $0x218] sm:$0xff]
    %v2086 = vld [vmem:[#allocation10 + $0x220] sm:$0xff]
    %v2087 = vld [vmem:[#allocation10 + $0x228] sm:$0xff]
    %v2088 = vld [vmem:[#allocation10 + $0x230] sm:$0xff]
    %v2089 = vld [vmem:[#allocation10 + $0x238] sm:$0xff]
    %v2090 = vld [vmem:[#allocation10 + $0x240] sm:$0xff]
    %v2091 = vld [vmem:[#allocation10 + $0x248] sm:$0xff]
    %v2092 = vld [vmem:[#allocation10 + $0x250] sm:$0xff]
    %v2093 = vld [vmem:[#allocation10 + $0x258] sm:$0xff]
    %v2094 = vld [vmem:[#allocation10 + $0x260] sm:$0xff]
    %v2095 = vld [vmem:[#allocation10 + $0x268] sm:$0xff]
    %v2096 = vld [vmem:[#allocation10 + $0x270] sm:$0xff]
    %v2097 = vld [vmem:[#allocation10 + $0x278] sm:$0xff]
    %v2098 = vld [vmem:[#allocation10 + $0x280] sm:$0xff]
    %v2099 = vld [vmem:[#allocation10 + $0x288] sm:$0xff]
    %v2100 = vld [vmem:[#allocation10 + $0x290] sm:$0xff]
    %v2101 = vld [vmem:[#allocation10 + $0x298] sm:$0xff]
    %v2102 = vld [vmem:[#allocation10 + $0x2a0] sm:$0xff]
    %v2103 = vld [vmem:[#allocation10 + $0x2a8] sm:$0xff]
    %v2104 = vld [vmem:[#allocation10 + $0x2b0] sm:$0xff]
    %v2105 = vld [vmem:[#allocation10 + $0x2b8] sm:$0xff]
    %v2106 = vld [vmem:[#allocation10 + $0x2c0] sm:$0xff]
    %v2107 = vld [vmem:[#allocation10 + $0x2c8] sm:$0xff]
    %v2108 = vld [vmem:[#allocation10 + $0x2d0] sm:$0xff]
    %v2109 = vld [vmem:[#allocation10 + $0x2d8] sm:$0xff]
    %v2110 = vld [vmem:[#allocation10 + $0x2e0] sm:$0xff]
    %v2111 = vld [vmem:[#allocation10 + $0x2e8] sm:$0xff]
    %v2112 = vld [vmem:[#allocation10 + $0x2f0] sm:$0xff]
    %v2113 = vld [vmem:[#allocation10 + $0x2f8] sm:$0xff]
    %v2114 = vld [vmem:[#allocation10 + $0x300] sm:$0xff]
    %v2115 = vld [vmem:[#allocation10 + $0x308] sm:$0xff]
    %v2116 = vld [vmem:[#allocation10 + $0x310] sm:$0xff]
    %v2117 = vld [vmem:[#allocation10 + $0x318] sm:$0xff]
    %v2118 = vld [vmem:[#allocation10 + $0x320] sm:$0xff]
    %v2119 = vld [vmem:[#allocation10 + $0x328] sm:$0xff]
    %v2120 = vld [vmem:[#allocation10 + $0x330] sm:$0xff]
    %v2121 = vld [vmem:[#allocation10 + $0x338] sm:$0xff]
    %v2122 = vld [vmem:[#allocation10 + $0x340] sm:$0xff]
    %v2123 = vld [vmem:[#allocation10 + $0x348] sm:$0xff]
    %v2124 = vld [vmem:[#allocation10 + $0x350] sm:$0xff]
    %v2125 = vld [vmem:[#allocation10 + $0x358] sm:$0xff]
    %v2126 = vld [vmem:[#allocation10 + $0x360] sm:$0xff]
    %v2127 = vld [vmem:[#allocation10 + $0x368] sm:$0xff]
    %v2128 = vld [vmem:[#allocation10 + $0x370] sm:$0xff]
    %v2129 = vld [vmem:[#allocation10 + $0x378] sm:$0xff]
    %v2130 = vld [vmem:[#allocation10 + $0x380] sm:$0xff]
    %v2131 = vld [vmem:[#allocation10 + $0x388] sm:$0xff]
    %v2132 = vld [vmem:[#allocation10 + $0x390] sm:$0xff]
    %v2133 = vld [vmem:[#allocation10 + $0x398] sm:$0xff]
    %v2134 = vld [vmem:[#allocation10 + $0x3a0] sm:$0xff]
    %v2135 = vld [vmem:[#allocation10 + $0x3a8] sm:$0xff]
    %v2136 = vld [vmem:[#allocation10 + $0x3b0] sm:$0xff]
    %v2137 = vld [vmem:[#allocation10 + $0x3b8] sm:$0xff]
    %v2138 = vld [vmem:[#allocation10 + $0x3c0] sm:$0xff]
    %v2139 = vld [vmem:[#allocation10 + $0x3c8] sm:$0xff]
    %v2140 = vld [vmem:[#allocation10 + $0x3d0] sm:$0xff]
    %v2141 = vld [vmem:[#allocation10 + $0x3d8] sm:$0xff]
    %v2142 = vld [vmem:[#allocation10 + $0x3e0] sm:$0xff]
    %v2143 = vld [vmem:[#allocation10 + $0x3e8] sm:$0xff]
    %v2144 = vld [vmem:[#allocation10 + $0x3f0] sm:$0xff]
    %v2145 = vld [vmem:[#allocation10 + $0x3f8] sm:$0xff]
    %v2146 = vld [vmem:[%s6] sm:$0xf]
    %v2148 = vlaneseq
    %v2149 = vshrl.u32 %v2148, 7
    %v2150 = vsub.s32 0, %v2149
    %v2151 = vrot.slane %v2146, %v2150
    %v2152 = vlaneseq
    %v2153 = vshrl.u32 %v2152, 7
    %v2154 = vsub.s32 1, %v2153
    %v2155 = vrot.slane %v2146, %v2154
    %v2156 = vlaneseq
    %v2157 = vshrl.u32 %v2156, 7
    %v2158 = vsub.s32 2, %v2157
    %v2159 = vrot.slane %v2146, %v2158
    %v2160 = vlaneseq
    %v2161 = vshrl.u32 %v2160, 7
    %v2162 = vsub.s32 3, %v2161
    %v2163 = vrot.slane %v2146, %v2162
    %v2296 = vunpack.c.l.b16 %v2018
    %v2297 = vunpack.c.h.b16 %v2018
    %v2298 = vunpack.c.l.b16 %v2019
    %v2299 = vunpack.c.h.b16 %v2019
    %v2300 = vunpack.c.l.b16 %v2020
    %v2301 = vunpack.c.h.b16 %v2020
    %v2302 = vunpack.c.l.b16 %v2021
    %v2303 = vunpack.c.h.b16 %v2021
    %v2304 = vunpack.c.l.b16 %v2022
    %v2305 = vunpack.c.h.b16 %v2022
    %v2306 = vunpack.c.l.b16 %v2023
    %v2307 = vunpack.c.h.b16 %v2023
    %v2308 = vunpack.c.l.b16 %v2024
    %v2309 = vunpack.c.h.b16 %v2024
    %v2310 = vunpack.c.l.b16 %v2025
    %v2311 = vunpack.c.h.b16 %v2025
    %v2312 = vunpack.c.l.b16 %v2026
    %v2313 = vunpack.c.h.b16 %v2026
    %v2314 = vunpack.c.l.b16 %v2027
    %v2315 = vunpack.c.h.b16 %v2027
    %v2316 = vunpack.c.l.b16 %v2028
    %v2317 = vunpack.c.h.b16 %v2028
    %v2318 = vunpack.c.l.b16 %v2029
    %v2319 = vunpack.c.h.b16 %v2029
    %v2320 = vunpack.c.l.b16 %v2030
    %v2321 = vunpack.c.h.b16 %v2030
    %v2322 = vunpack.c.l.b16 %v2031
    %v2323 = vunpack.c.h.b16 %v2031
    %v2324 = vunpack.c.l.b16 %v2032
    %v2325 = vunpack.c.h.b16 %v2032
    %v2326 = vunpack.c.l.b16 %v2033
    %v2327 = vunpack.c.h.b16 %v2033
    %v2328 = vunpack.c.l.b16 %v2034
    %v2329 = vunpack.c.h.b16 %v2034
    %v2330 = vunpack.c.l.b16 %v2035
    %v2331 = vunpack.c.h.b16 %v2035
    %v2332 = vunpack.c.l.b16 %v2036
    %v2333 = vunpack.c.h.b16 %v2036
    %v2334 = vunpack.c.l.b16 %v2037
    %v2335 = vunpack.c.h.b16 %v2037
    %v2336 = vunpack.c.l.b16 %v2038
    %v2337 = vunpack.c.h.b16 %v2038
    %v2338 = vunpack.c.l.b16 %v2039
    %v2339 = vunpack.c.h.b16 %v2039
    %v2340 = vunpack.c.l.b16 %v2040
    %v2341 = vunpack.c.h.b16 %v2040
    %v2342 = vunpack.c.l.b16 %v2041
    %v2343 = vunpack.c.h.b16 %v2041
    %v2344 = vunpack.c.l.b16 %v2042
    %v2345 = vunpack.c.h.b16 %v2042
    %v2346 = vunpack.c.l.b16 %v2043
    %v2347 = vunpack.c.h.b16 %v2043
    %v2348 = vunpack.c.l.b16 %v2044
    %v2349 = vunpack.c.h.b16 %v2044
    %v2350 = vunpack.c.l.b16 %v2045
    %v2351 = vunpack.c.h.b16 %v2045
    %v2352 = vunpack.c.l.b16 %v2046
    %v2353 = vunpack.c.h.b16 %v2046
    %v2354 = vunpack.c.l.b16 %v2047
    %v2355 = vunpack.c.h.b16 %v2047
    %v2356 = vunpack.c.l.b16 %v2048
    %v2357 = vunpack.c.h.b16 %v2048
    %v2358 = vunpack.c.l.b16 %v2049
    %v2359 = vunpack.c.h.b16 %v2049
    %v2360 = vunpack.c.l.b16 %v2050
    %v2361 = vunpack.c.h.b16 %v2050
    %v2362 = vunpack.c.l.b16 %v2051
    %v2363 = vunpack.c.h.b16 %v2051
    %v2364 = vunpack.c.l.b16 %v2052
    %v2365 = vunpack.c.h.b16 %v2052
    %v2366 = vunpack.c.l.b16 %v2053
    %v2367 = vunpack.c.h.b16 %v2053
    %v2368 = vunpack.c.l.b16 %v2054
    %v2369 = vunpack.c.h.b16 %v2054
    %v2370 = vunpack.c.l.b16 %v2055
    %v2371 = vunpack.c.h.b16 %v2055
    %v2372 = vunpack.c.l.b16 %v2056
    %v2373 = vunpack.c.h.b16 %v2056
    %v2374 = vunpack.c.l.b16 %v2057
    %v2375 = vunpack.c.h.b16 %v2057
    %v2376 = vunpack.c.l.b16 %v2058
    %v2377 = vunpack.c.h.b16 %v2058
    %v2378 = vunpack.c.l.b16 %v2059
    %v2379 = vunpack.c.h.b16 %v2059
    %v2380 = vunpack.c.l.b16 %v2060
    %v2381 = vunpack.c.h.b16 %v2060
    %v2382 = vunpack.c.l.b16 %v2061
    %v2383 = vunpack.c.h.b16 %v2061
    %v2384 = vunpack.c.l.b16 %v2062
    %v2385 = vunpack.c.h.b16 %v2062
    %v2386 = vunpack.c.l.b16 %v2063
    %v2387 = vunpack.c.h.b16 %v2063
    %v2388 = vunpack.c.l.b16 %v2064
    %v2389 = vunpack.c.h.b16 %v2064
    %v2390 = vunpack.c.l.b16 %v2065
    %v2391 = vunpack.c.h.b16 %v2065
    %v2392 = vunpack.c.l.b16 %v2066
    %v2393 = vunpack.c.h.b16 %v2066
    %v2394 = vunpack.c.l.b16 %v2067
    %v2395 = vunpack.c.h.b16 %v2067
    %v2396 = vunpack.c.l.b16 %v2068
    %v2397 = vunpack.c.h.b16 %v2068
    %v2398 = vunpack.c.l.b16 %v2069
    %v2399 = vunpack.c.h.b16 %v2069
    %v2400 = vunpack.c.l.b16 %v2070
    %v2401 = vunpack.c.h.b16 %v2070
    %v2402 = vunpack.c.l.b16 %v2071
    %v2403 = vunpack.c.h.b16 %v2071
    %v2404 = vunpack.c.l.b16 %v2072
    %v2405 = vunpack.c.h.b16 %v2072
    %v2406 = vunpack.c.l.b16 %v2073
    %v2407 = vunpack.c.h.b16 %v2073
    %v2408 = vunpack.c.l.b16 %v2074
    %v2409 = vunpack.c.h.b16 %v2074
    %v2410 = vunpack.c.l.b16 %v2075
    %v2411 = vunpack.c.h.b16 %v2075
    %v2412 = vunpack.c.l.b16 %v2076
    %v2413 = vunpack.c.h.b16 %v2076
    %v2414 = vunpack.c.l.b16 %v2077
    %v2415 = vunpack.c.h.b16 %v2077
    %v2416 = vunpack.c.l.b16 %v2078
    %v2417 = vunpack.c.h.b16 %v2078
    %v2418 = vunpack.c.l.b16 %v2079
    %v2419 = vunpack.c.h.b16 %v2079
    %v2420 = vunpack.c.l.b16 %v2080
    %v2421 = vunpack.c.h.b16 %v2080
    %v2422 = vunpack.c.l.b16 %v2081
    %v2423 = vunpack.c.h.b16 %v2081
    %v2424 = vunpack.c.l.b16 %v2082
    %v2425 = vunpack.c.h.b16 %v2082
    %v2426 = vunpack.c.l.b16 %v2083
    %v2427 = vunpack.c.h.b16 %v2083
    %v2428 = vunpack.c.l.b16 %v2084
    %v2429 = vunpack.c.h.b16 %v2084
    %v2430 = vunpack.c.l.b16 %v2085
    %v2431 = vunpack.c.h.b16 %v2085
    %v2432 = vunpack.c.l.b16 %v2086
    %v2433 = vunpack.c.h.b16 %v2086
    %v2434 = vunpack.c.l.b16 %v2087
    %v2435 = vunpack.c.h.b16 %v2087
    %v2436 = vunpack.c.l.b16 %v2088
    %v2437 = vunpack.c.h.b16 %v2088
    %v2438 = vunpack.c.l.b16 %v2089
    %v2439 = vunpack.c.h.b16 %v2089
    %v2440 = vunpack.c.l.b16 %v2090
    %v2441 = vunpack.c.h.b16 %v2090
    %v2442 = vunpack.c.l.b16 %v2091
    %v2443 = vunpack.c.h.b16 %v2091
    %v2444 = vunpack.c.l.b16 %v2092
    %v2445 = vunpack.c.h.b16 %v2092
    %v2446 = vunpack.c.l.b16 %v2093
    %v2447 = vunpack.c.h.b16 %v2093
    %v2448 = vunpack.c.l.b16 %v2094
    %v2449 = vunpack.c.h.b16 %v2094
    %v2450 = vunpack.c.l.b16 %v2095
    %v2451 = vunpack.c.h.b16 %v2095
    %v2452 = vunpack.c.l.b16 %v2096
    %v2453 = vunpack.c.h.b16 %v2096
    %v2454 = vunpack.c.l.b16 %v2097
    %v2455 = vunpack.c.h.b16 %v2097
    %v2456 = vunpack.c.l.b16 %v2098
    %v2457 = vunpack.c.h.b16 %v2098
    %v2458 = vunpack.c.l.b16 %v2099
    %v2459 = vunpack.c.h.b16 %v2099
    %v2460 = vunpack.c.l.b16 %v2100
    %v2461 = vunpack.c.h.b16 %v2100
    %v2462 = vunpack.c.l.b16 %v2101
    %v2463 = vunpack.c.h.b16 %v2101
    %v2464 = vunpack.c.l.b16 %v2102
    %v2465 = vunpack.c.h.b16 %v2102
    %v2466 = vunpack.c.l.b16 %v2103
    %v2467 = vunpack.c.h.b16 %v2103
    %v2468 = vunpack.c.l.b16 %v2104
    %v2469 = vunpack.c.h.b16 %v2104
    %v2470 = vunpack.c.l.b16 %v2105
    %v2471 = vunpack.c.h.b16 %v2105
    %v2472 = vunpack.c.l.b16 %v2106
    %v2473 = vunpack.c.h.b16 %v2106
    %v2474 = vunpack.c.l.b16 %v2107
    %v2475 = vunpack.c.h.b16 %v2107
    %v2476 = vunpack.c.l.b16 %v2108
    %v2477 = vunpack.c.h.b16 %v2108
    %v2478 = vunpack.c.l.b16 %v2109
    %v2479 = vunpack.c.h.b16 %v2109
    %v2480 = vunpack.c.l.b16 %v2110
    %v2481 = vunpack.c.h.b16 %v2110
    %v2482 = vunpack.c.l.b16 %v2111
    %v2483 = vunpack.c.h.b16 %v2111
    %v2484 = vunpack.c.l.b16 %v2112
    %v2485 = vunpack.c.h.b16 %v2112
    %v2486 = vunpack.c.l.b16 %v2113
    %v2487 = vunpack.c.h.b16 %v2113
    %v2488 = vunpack.c.l.b16 %v2114
    %v2489 = vunpack.c.h.b16 %v2114
    %v2490 = vunpack.c.l.b16 %v2115
    %v2491 = vunpack.c.h.b16 %v2115
    %v2492 = vunpack.c.l.b16 %v2116
    %v2493 = vunpack.c.h.b16 %v2116
    %v2494 = vunpack.c.l.b16 %v2117
    %v2495 = vunpack.c.h.b16 %v2117
    %v2496 = vunpack.c.l.b16 %v2118
    %v2497 = vunpack.c.h.b16 %v2118
    %v2498 = vunpack.c.l.b16 %v2119
    %v2499 = vunpack.c.h.b16 %v2119
    %v2500 = vunpack.c.l.b16 %v2120
    %v2501 = vunpack.c.h.b16 %v2120
    %v2502 = vunpack.c.l.b16 %v2121
    %v2503 = vunpack.c.h.b16 %v2121
    %v2504 = vunpack.c.l.b16 %v2122
    %v2505 = vunpack.c.h.b16 %v2122
    %v2506 = vunpack.c.l.b16 %v2123
    %v2507 = vunpack.c.h.b16 %v2123
    %v2508 = vunpack.c.l.b16 %v2124
    %v2509 = vunpack.c.h.b16 %v2124
    %v2510 = vunpack.c.l.b16 %v2125
    %v2511 = vunpack.c.h.b16 %v2125
    %v2512 = vunpack.c.l.b16 %v2126
    %v2513 = vunpack.c.h.b16 %v2126
    %v2514 = vunpack.c.l.b16 %v2127
    %v2515 = vunpack.c.h.b16 %v2127
    %v2516 = vunpack.c.l.b16 %v2128
    %v2517 = vunpack.c.h.b16 %v2128
    %v2518 = vunpack.c.l.b16 %v2129
    %v2519 = vunpack.c.h.b16 %v2129
    %v2520 = vunpack.c.l.b16 %v2130
    %v2521 = vunpack.c.h.b16 %v2130
    %v2522 = vunpack.c.l.b16 %v2131
    %v2523 = vunpack.c.h.b16 %v2131
    %v2524 = vunpack.c.l.b16 %v2132
    %v2525 = vunpack.c.h.b16 %v2132
    %v2526 = vunpack.c.l.b16 %v2133
    %v2527 = vunpack.c.h.b16 %v2133
    %v2528 = vunpack.c.l.b16 %v2134
    %v2529 = vunpack.c.h.b16 %v2134
    %v2530 = vunpack.c.l.b16 %v2135
    %v2531 = vunpack.c.h.b16 %v2135
    %v2532 = vunpack.c.l.b16 %v2136
    %v2533 = vunpack.c.h.b16 %v2136
    %v2534 = vunpack.c.l.b16 %v2137
    %v2535 = vunpack.c.h.b16 %v2137
    %v2536 = vunpack.c.l.b16 %v2138
    %v2537 = vunpack.c.h.b16 %v2138
    %v2538 = vunpack.c.l.b16 %v2139
    %v2539 = vunpack.c.h.b16 %v2139
    %v2540 = vunpack.c.l.b16 %v2140
    %v2541 = vunpack.c.h.b16 %v2140
    %v2542 = vunpack.c.l.b16 %v2141
    %v2543 = vunpack.c.h.b16 %v2141
    %v2544 = vunpack.c.l.b16 %v2142
    %v2545 = vunpack.c.h.b16 %v2142
    %v2546 = vunpack.c.l.b16 %v2143
    %v2547 = vunpack.c.h.b16 %v2143
    %v2548 = vunpack.c.l.b16 %v2144
    %v2549 = vunpack.c.h.b16 %v2144
    %v2550 = vunpack.c.l.b16 %v2145
    %v2551 = vunpack.c.h.b16 %v2145
    %v2552 = vpack.c.b16 %v2300, %v2296
    %v2553 = vpack.c.b16 %v2301, %v2297
    %v2554 = vpack.c.b16 %v2302, %v2298
    %v2555 = vpack.c.b16 %v2303, %v2299
    %v2556 = vpack.c.b16 %v2308, %v2304
    %v2557 = vpack.c.b16 %v2309, %v2305
    %v2558 = vpack.c.b16 %v2310, %v2306
    %v2559 = vpack.c.b16 %v2311, %v2307
    %v2560 = vpack.c.b16 %v2316, %v2312
    %v2561 = vpack.c.b16 %v2317, %v2313
    %v2562 = vpack.c.b16 %v2318, %v2314
    %v2563 = vpack.c.b16 %v2319, %v2315
    %v2564 = vpack.c.b16 %v2324, %v2320
    %v2565 = vpack.c.b16 %v2325, %v2321
    %v2566 = vpack.c.b16 %v2326, %v2322
    %v2567 = vpack.c.b16 %v2327, %v2323
    %v2568 = vpack.c.b16 %v2332, %v2328
    %v2569 = vpack.c.b16 %v2333, %v2329
    %v2570 = vpack.c.b16 %v2334, %v2330
    %v2571 = vpack.c.b16 %v2335, %v2331
    %v2572 = vpack.c.b16 %v2340, %v2336
    %v2573 = vpack.c.b16 %v2341, %v2337
    %v2574 = vpack.c.b16 %v2342, %v2338
    %v2575 = vpack.c.b16 %v2343, %v2339
    %v2576 = vpack.c.b16 %v2348, %v2344
    %v2577 = vpack.c.b16 %v2349, %v2345
    %v2578 = vpack.c.b16 %v2350, %v2346
    %v2579 = vpack.c.b16 %v2351, %v2347
    %v2580 = vpack.c.b16 %v2356, %v2352
    %v2581 = vpack.c.b16 %v2357, %v2353
    %v2582 = vpack.c.b16 %v2358, %v2354
    %v2583 = vpack.c.b16 %v2359, %v2355
    %v2584 = vpack.c.b16 %v2364, %v2360
    %v2585 = vpack.c.b16 %v2365, %v2361
    %v2586 = vpack.c.b16 %v2366, %v2362
    %v2587 = vpack.c.b16 %v2367, %v2363
    %v2588 = vpack.c.b16 %v2372, %v2368
    %v2589 = vpack.c.b16 %v2373, %v2369
    %v2590 = vpack.c.b16 %v2374, %v2370
    %v2591 = vpack.c.b16 %v2375, %v2371
    %v2592 = vpack.c.b16 %v2380, %v2376
    %v2593 = vpack.c.b16 %v2381, %v2377
    %v2594 = vpack.c.b16 %v2382, %v2378
    %v2595 = vpack.c.b16 %v2383, %v2379
    %v2596 = vpack.c.b16 %v2388, %v2384
    %v2597 = vpack.c.b16 %v2389, %v2385
    %v2598 = vpack.c.b16 %v2390, %v2386
    %v2599 = vpack.c.b16 %v2391, %v2387
    %v2600 = vpack.c.b16 %v2396, %v2392
    %v2601 = vpack.c.b16 %v2397, %v2393
    %v2602 = vpack.c.b16 %v2398, %v2394
    %v2603 = vpack.c.b16 %v2399, %v2395
    %v2604 = vpack.c.b16 %v2404, %v2400
    %v2605 = vpack.c.b16 %v2405, %v2401
    %v2606 = vpack.c.b16 %v2406, %v2402
    %v2607 = vpack.c.b16 %v2407, %v2403
    %v2608 = vpack.c.b16 %v2412, %v2408
    %v2609 = vpack.c.b16 %v2413, %v2409
    %v2610 = vpack.c.b16 %v2414, %v2410
    %v2611 = vpack.c.b16 %v2415, %v2411
    %v2612 = vpack.c.b16 %v2420, %v2416
    %v2613 = vpack.c.b16 %v2421, %v2417
    %v2614 = vpack.c.b16 %v2422, %v2418
    %v2615 = vpack.c.b16 %v2423, %v2419
    %v2616 = vpack.c.b16 %v2428, %v2424
    %v2617 = vpack.c.b16 %v2429, %v2425
    %v2618 = vpack.c.b16 %v2430, %v2426
    %v2619 = vpack.c.b16 %v2431, %v2427
    %v2620 = vpack.c.b16 %v2436, %v2432
    %v2621 = vpack.c.b16 %v2437, %v2433
    %v2622 = vpack.c.b16 %v2438, %v2434
    %v2623 = vpack.c.b16 %v2439, %v2435
    %v2624 = vpack.c.b16 %v2444, %v2440
    %v2625 = vpack.c.b16 %v2445, %v2441
    %v2626 = vpack.c.b16 %v2446, %v2442
    %v2627 = vpack.c.b16 %v2447, %v2443
    %v2628 = vpack.c.b16 %v2452, %v2448
    %v2629 = vpack.c.b16 %v2453, %v2449
    %v2630 = vpack.c.b16 %v2454, %v2450
    %v2631 = vpack.c.b16 %v2455, %v2451
    %v2632 = vpack.c.b16 %v2460, %v2456
    %v2633 = vpack.c.b16 %v2461, %v2457
    %v2634 = vpack.c.b16 %v2462, %v2458
    %v2635 = vpack.c.b16 %v2463, %v2459
    %v2636 = vpack.c.b16 %v2468, %v2464
    %v2637 = vpack.c.b16 %v2469, %v2465
    %v2638 = vpack.c.b16 %v2470, %v2466
    %v2639 = vpack.c.b16 %v2471, %v2467
    %v2640 = vpack.c.b16 %v2476, %v2472
    %v2641 = vpack.c.b16 %v2477, %v2473
    %v2642 = vpack.c.b16 %v2478, %v2474
    %v2643 = vpack.c.b16 %v2479, %v2475
    %v2644 = vpack.c.b16 %v2484, %v2480
    %v2645 = vpack.c.b16 %v2485, %v2481
    %v2646 = vpack.c.b16 %v2486, %v2482
    %v2647 = vpack.c.b16 %v2487, %v2483
    %v2648 = vpack.c.b16 %v2492, %v2488
    %v2649 = vpack.c.b16 %v2493, %v2489
    %v2650 = vpack.c.b16 %v2494, %v2490
    %v2651 = vpack.c.b16 %v2495, %v2491
    %v2652 = vpack.c.b16 %v2500, %v2496
    %v2653 = vpack.c.b16 %v2501, %v2497
    %v2654 = vpack.c.b16 %v2502, %v2498
    %v2655 = vpack.c.b16 %v2503, %v2499
    %v2656 = vpack.c.b16 %v2508, %v2504
    %v2657 = vpack.c.b16 %v2509, %v2505
    %v2658 = vpack.c.b16 %v2510, %v2506
    %v2659 = vpack.c.b16 %v2511, %v2507
    %v2660 = vpack.c.b16 %v2516, %v2512
    %v2661 = vpack.c.b16 %v2517, %v2513
    %v2662 = vpack.c.b16 %v2518, %v2514
    %v2663 = vpack.c.b16 %v2519, %v2515
    %v2664 = vpack.c.b16 %v2524, %v2520
    %v2665 = vpack.c.b16 %v2525, %v2521
    %v2666 = vpack.c.b16 %v2526, %v2522
    %v2667 = vpack.c.b16 %v2527, %v2523
    %v2668 = vpack.c.b16 %v2532, %v2528
    %v2669 = vpack.c.b16 %v2533, %v2529
    %v2670 = vpack.c.b16 %v2534, %v2530
    %v2671 = vpack.c.b16 %v2535, %v2531
    %v2672 = vpack.c.b16 %v2540, %v2536
    %v2673 = vpack.c.b16 %v2541, %v2537
    %v2674 = vpack.c.b16 %v2542, %v2538
    %v2675 = vpack.c.b16 %v2543, %v2539
    %v2676 = vpack.c.b16 %v2548, %v2544
    %v2677 = vpack.c.b16 %v2549, %v2545
    %v2678 = vpack.c.b16 %v2550, %v2546
    %v2679 = vpack.c.b16 %v2551, %v2547
    %2808 = vmatprep.subr.bf16.mxu0 %v2553
    %2809 = vmatpush1.bf16.msra.mxu0 %v2552
    %2810 = vmatprep.subr.bf16.mxu0 %v2557
    %2811 = vmatpush1.bf16.msra.mxu0 %v2556
    %2812 = vmatprep.subr.bf16.mxu0 %v2561
    %2813 = vmatpush1.bf16.msra.mxu0 %v2560
    %2814 = vmatprep.subr.bf16.mxu0 %v2565
    %2815 = vmatpush1.bf16.msra.mxu0 %v2564
    %2816 = vmatprep.subr.bf16.mxu0 %v2569
    %2817 = vmatpush1.bf16.msra.mxu0 %v2568
    %2818 = vmatprep.subr.bf16.mxu0 %v2573
    %2819 = vmatpush1.bf16.msra.mxu0 %v2572
    %2820 = vmatprep.subr.bf16.mxu0 %v2577
    %2821 = vmatpush1.bf16.msra.mxu0 %v2576
    %2822 = vmatprep.subr.bf16.mxu0 %v2581
    %2823 = vmatpush1.bf16.msra.mxu0 %v2580
    %2824 = vmatprep.subr.bf16.mxu0 %v2585
    %2825 = vmatpush1.bf16.msra.mxu0 %v2584
    %2826 = vmatprep.subr.bf16.mxu0 %v2589
    %2827 = vmatpush1.bf16.msra.mxu0 %v2588
    %2828 = vmatprep.subr.bf16.mxu0 %v2593
    %2829 = vmatpush1.bf16.msra.mxu0 %v2592
    %2830 = vmatprep.subr.bf16.mxu0 %v2597
    %2831 = vmatpush1.bf16.msra.mxu0 %v2596
    %2832 = vmatprep.subr.bf16.mxu0 %v2601
    %2833 = vmatpush1.bf16.msra.mxu0 %v2600
    %2834 = vmatprep.subr.bf16.mxu0 %v2605
    %2835 = vmatpush1.bf16.msra.mxu0 %v2604
    %2836 = vmatprep.subr.bf16.mxu0 %v2609
    %2837 = vmatpush1.bf16.msra.mxu0 %v2608
    %2838 = vmatprep.subr.bf16.mxu0 %v2613
    %2839 = vmatpush1.bf16.msra.mxu0 %v2612
    %2840 = vmatprep.mubr.bf16.mxu0 %v2015
    %2841 = vmatmul.mubr.bf16.gmra.mrb[0].mxu0 %v2014
    %v2842 = vpop.f32.mrb[0].mxu0
    %v2843 = vadd.f32 %v2151, %v2842
    %v2844 = vpop.f32.mrb[0].mxu0
    %v2845 = vadd.f32 %v2155, %v2844
    %v2846 = vpop.f32.mrb[0].mxu0
    %v2847 = vpop.f32.mrb[0].mxu0
    %2848 = vdwg.mxu0
    %2849 = vmatprep.subr.bf16.mxu0 %v2617
    %2850 = vmatpush1.bf16.msra.mxu0 %v2616
    %2851 = vmatprep.subr.bf16.mxu0 %v2621
    %2852 = vmatpush1.bf16.msra.mxu0 %v2620
    %2853 = vmatprep.subr.bf16.mxu0 %v2625
    %2854 = vmatpush1.bf16.msra.mxu0 %v2624
    %2855 = vmatprep.subr.bf16.mxu0 %v2629
    %2856 = vmatpush1.bf16.msra.mxu0 %v2628
    %2857 = vmatprep.subr.bf16.mxu0 %v2633
    %2858 = vmatpush1.bf16.msra.mxu0 %v2632
    %2859 = vmatprep.subr.bf16.mxu0 %v2637
    %2860 = vmatpush1.bf16.msra.mxu0 %v2636
    %2861 = vmatprep.subr.bf16.mxu0 %v2641
    %2862 = vmatpush1.bf16.msra.mxu0 %v2640
    %2863 = vmatprep.subr.bf16.mxu0 %v2645
    %2864 = vmatpush1.bf16.msra.mxu0 %v2644
    %2865 = vmatprep.subr.bf16.mxu0 %v2649
    %2866 = vmatpush1.bf16.msra.mxu0 %v2648
    %2867 = vmatprep.subr.bf16.mxu0 %v2653
    %2868 = vmatpush1.bf16.msra.mxu0 %v2652
    %2869 = vmatprep.subr.bf16.mxu0 %v2657
    %2870 = vmatpush1.bf16.msra.mxu0 %v2656
    %2871 = vmatprep.subr.bf16.mxu0 %v2661
    %2872 = vmatpush1.bf16.msra.mxu0 %v2660
    %2873 = vmatprep.subr.bf16.mxu0 %v2665
    %2874 = vmatpush1.bf16.msra.mxu0 %v2664
    %2875 = vmatprep.subr.bf16.mxu0 %v2669
    %2876 = vmatpush1.bf16.msra.mxu0 %v2668
    %2877 = vmatprep.subr.bf16.mxu0 %v2673
    %2878 = vmatpush1.bf16.msra.mxu0 %v2672
    %2879 = vmatprep.subr.bf16.mxu0 %v2677
    %2880 = vmatpush1.bf16.msra.mxu0 %v2676
    %2881 = vmatprep.mubr.bf16.mxu0 %v2017
    %2882 = vmatmul.mubr.bf16.gmra.mrb[0].mxu0 %v2016
    %v2883 = vpop.f32.mrb[0].mxu0
    %v2884 = vadd.f32 %v2843, %v2883
    %v2885 = vpop.f32.mrb[0].mxu0
    %v2886 = vadd.f32 %v2845, %v2885
    %v2887 = vpop.f32.mrb[0].mxu0
    %v2888 = vpop.f32.mrb[0].mxu0
    %2889 = vdwg.mxu0
    %2890 = vmatprep.subr.bf16.mxu0 %v2555
    %2891 = vmatpush1.bf16.msra.mxu0 %v2554
    %2892 = vmatprep.subr.bf16.mxu0 %v2559
    %2893 = vmatpush1.bf16.msra.mxu0 %v2558
    %2894 = vmatprep.subr.bf16.mxu0 %v2563
    %2895 = vmatpush1.bf16.msra.mxu0 %v2562
    %2896 = vmatprep.subr.bf16.mxu0 %v2567
    %2897 = vmatpush1.bf16.msra.mxu0 %v2566
    %2898 = vmatprep.subr.bf16.mxu0 %v2571
    %2899 = vmatpush1.bf16.msra.mxu0 %v2570
    %2900 = vmatprep.subr.bf16.mxu0 %v2575
    %2901 = vmatpush1.bf16.msra.mxu0 %v2574
    %2902 = vmatprep.subr.bf16.mxu0 %v2579
    %2903 = vmatpush1.bf16.msra.mxu0 %v2578
    %2904 = vmatprep.subr.bf16.mxu0 %v2583
    %2905 = vmatpush1.bf16.msra.mxu0 %v2582
    %2906 = vmatprep.subr.bf16.mxu0 %v2587
    %2907 = vmatpush1.bf16.msra.mxu0 %v2586
    %2908 = vmatprep.subr.bf16.mxu0 %v2591
    %2909 = vmatpush1.bf16.msra.mxu0 %v2590
    %2910 = vmatprep.subr.bf16.mxu0 %v2595
    %2911 = vmatpush1.bf16.msra.mxu0 %v2594
    %2912 = vmatprep.subr.bf16.mxu0 %v2599
    %2913 = vmatpush1.bf16.msra.mxu0 %v2598
    %2914 = vmatprep.subr.bf16.mxu0 %v2603
    %2915 = vmatpush1.bf16.msra.mxu0 %v2602
    %2916 = vmatprep.subr.bf16.mxu0 %v2607
    %2917 = vmatpush1.bf16.msra.mxu0 %v2606
    %2918 = vmatprep.subr.bf16.mxu0 %v2611
    %2919 = vmatpush1.bf16.msra.mxu0 %v2610
    %2920 = vmatprep.subr.bf16.mxu0 %v2615
    %2921 = vmatpush1.bf16.msra.mxu0 %v2614
    %2922 = vmatprep.mubr.bf16.mxu0 %v2015
    %2923 = vmatmul.mubr.bf16.gmra.mrb[0].mxu0 %v2014
    %v2924 = vpop.f32.mrb[0].mxu0
    %v2925 = vadd.f32 %v2159, %v2924
    %v2926 = vpop.f32.mrb[0].mxu0
    %v2927 = vadd.f32 %v2163, %v2926
    %v2928 = vpop.f32.mrb[0].mxu0
    %v2929 = vpop.f32.mrb[0].mxu0
    %2930 = vdwg.mxu0
    %2931 = vmatprep.subr.bf16.mxu0 %v2619
    %2932 = vmatpush1.bf16.msra.mxu0 %v2618
    %2933 = vmatprep.subr.bf16.mxu0 %v2623
    %2934 = vmatpush1.bf16.msra.mxu0 %v2622
    %2935 = vmatprep.subr.bf16.mxu0 %v2627
    %2936 = vmatpush1.bf16.msra.mxu0 %v2626
    %2937 = vmatprep.subr.bf16.mxu0 %v2631
    %2938 = vmatpush1.bf16.msra.mxu0 %v2630
    %2939 = vmatprep.subr.bf16.mxu0 %v2635
    %2940 = vmatpush1.bf16.msra.mxu0 %v2634
    %2941 = vmatprep.subr.bf16.mxu0 %v2639
    %2942 = vmatpush1.bf16.msra.mxu0 %v2638
    %2943 = vmatprep.subr.bf16.mxu0 %v2643
    %2944 = vmatpush1.bf16.msra.mxu0 %v2642
    %2945 = vmatprep.subr.bf16.mxu0 %v2647
    %2946 = vmatpush1.bf16.msra.mxu0 %v2646
    %2947 = vmatprep.subr.bf16.mxu0 %v2651
    %2948 = vmatpush1.bf16.msra.mxu0 %v2650
    %2949 = vmatprep.subr.bf16.mxu0 %v2655
    %2950 = vmatpush1.bf16.msra.mxu0 %v2654
    %2951 = vmatprep.subr.bf16.mxu0 %v2659
    %2952 = vmatpush1.bf16.msra.mxu0 %v2658
    %2953 = vmatprep.subr.bf16.mxu0 %v2663
    %2954 = vmatpush1.bf16.msra.mxu0 %v2662
    %2955 = vmatprep.subr.bf16.mxu0 %v2667
    %2956 = vmatpush1.bf16.msra.mxu0 %v2666
    %2957 = vmatprep.subr.bf16.mxu0 %v2671
    %2958 = vmatpush1.bf16.msra.mxu0 %v2670
    %2959 = vmatprep.subr.bf16.mxu0 %v2675
    %2960 = vmatpush1.bf16.msra.mxu0 %v2674
    %2961 = vmatprep.subr.bf16.mxu0 %v2679
    %2962 = vmatpush1.bf16.msra.mxu0 %v2678
    %2963 = vmatprep.mubr.bf16.mxu0 %v2017
    %2964 = vmatmul.mubr.bf16.gmra.mrb[0].mxu0 %v2016
    %v2965 = vpop.f32.mrb[0].mxu0
    %v2966 = vadd.f32 %v2925, %v2965
    %v2967 = vpop.f32.mrb[0].mxu0
    %v2968 = vadd.f32 %v2927, %v2967
    %v2969 = vpop.f32.mrb[0].mxu0
    %v2970 = vpop.f32.mrb[0].mxu0
    %2971 = vdwg.mxu0
    %v2972 = vmax.f32 %v2884, 0.0
    %v2973 = vmax.f32 %v2886, 0.0
    %v2974 = vmax.f32 %v2966, 0.0
    %v2975 = vmax.f32 %v2968, 0.0
    %s2976 = sadd.s32 %s122, 320440878
    %v2977 = vstv %s2976
    %v2978 = vadd.s32 %v2977, %v1895
    %v2979 = vadd.s32 %v2977, %v1896
    %v2980 = vadd.s32 %v2977, %v1897
    %v2981 = vadd.s32 %v2977, %v1898
    %v2982 = vshrl.u32 %v2978, 16
    %v2983 = vshrl.u32 %v2979, 16
    %v2984 = vshrl.u32 %v2980, 16
    %v2985 = vshrl.u32 %v2981, 16
    %v2986 = vxor.u32 %v2978, %v2982
    %v2987 = vxor.u32 %v2979, %v2983
    %v2988 = vxor.u32 %v2980, %v2984
    %v2989 = vxor.u32 %v2981, %v2985
    %v2990 = vmul.u32 %v2986, 2146121005
    %v2991 = vmul.u32 %v2987, 2146121005
    %v2992 = vmul.u32 %v2988, 2146121005
    %v2993 = vmul.u32 %v2989, 2146121005
    %v2994 = vshrl.u32 %v2990, 15
    %v2995 = vshrl.u32 %v2991, 15
    %v2996 = vshrl.u32 %v2992, 15
    %v2997 = vshrl.u32 %v2993, 15
    %v2998 = vxor.u32 %v2990, %v2994
    %v2999 = vxor.u32 %v2991, %v2995
    %v3000 = vxor.u32 %v2992, %v2996
    %v3001 = vxor.u32 %v2993, %v2997
    %v3002 = vmul.u32 %v2998, 2221713035
    %v3003 = vmul.u32 %v2999, 2221713035
    %v3004 = vmul.u32 %v3000, 2221713035
    %v3005 = vmul.u32 %v3001, 2221713035
    %v3006 = vshrl.u32 %v3002, 16
    %v3007 = vshrl.u32 %v3003, 16
    %v3008 = vshrl.u32 %v3004, 16
    %v3009 = vshrl.u32 %v3005, 16
    %v3010 = vxor.u32 %v3002, %v3006
    %v3011 = vxor.u32 %v3003, %v3007
    %v3012 = vxor.u32 %v3004, %v3008
    %v3013 = vxor.u32 %v3005, %v3009
    %v3014 = vshrl.u32 %v3010, 9
    %v3015 = vshrl.u32 %v3011, 9
    %v3016 = vshrl.u32 %v3012, 9
    %v3017 = vshrl.u32 %v3013, 9
    %v3018 = vcvt.s32.f32 %v3014
    %v3019 = vcvt.s32.f32 %v3015
    %v3020 = vcvt.s32.f32 %v3016
    %v3021 = vcvt.s32.f32 %v3017
    %v3022 = vmul.f32 %v3018, 1.1920929e-07
    %v3023 = vmul.f32 %v3019, 1.1920929e-07
    %v3024 = vmul.f32 %v3020, 1.1920929e-07
    %v3025 = vmul.f32 %v3021, 1.1920929e-07
    %s3026 = sld [smem:[#allocation3 + $0x2]]
    %v3027 = vadd.f32 %v3022, 1e-07
    %v3028 = vadd.f32 %v3023, 1e-07
    %v3029 = vadd.f32 %v3024, 1e-07
    %v3030 = vadd.f32 %v3025, 1e-07
    %v3031 = vsub.f32 1.0, %v3022
    %v3032 = vsub.f32 1.0, %v3023
    %v3033 = vsub.f32 1.0, %v3024
    %v3034 = vsub.f32 1.0, %v3025
    %v3035 = vadd.f32 %v3031, 1e-07
    %v3036 = vadd.f32 %v3032, 1e-07
    %v3037 = vadd.f32 %v3033, 1e-07
    %v3038 = vadd.f32 %v3034, 1e-07
    %v3039 = vmul.f32 %v3027, %v3027
    %v3040 = vmul.f32 %v3028, %v3028
    %v3041 = vmul.f32 %v3029, %v3029
    %v3042 = vmul.f32 %v3030, %v3030
    %v3043 = vmul.f32 %v3039, %v3039
    %v3044 = vmul.f32 %v3040, %v3040
    %v3045 = vmul.f32 %v3041, %v3041
    %v3046 = vmul.f32 %v3042, %v3042
    %v3047 = vmul.f32 %v3043, %v3043
    %v3048 = vmul.f32 %v3044, %v3044
    %v3049 = vmul.f32 %v3045, %v3045
    %v3050 = vmul.f32 %v3046, %v3046
    %v3051 = vmul.f32 %v3047, %v3039
    %v3052 = vmul.f32 %v3048, %v3040
    %v3053 = vmul.f32 %v3049, %v3041
    %v3054 = vmul.f32 %v3050, %v3042
    %v3055 = vmul.f32 %v3035, %v3035
    %v3056 = vmul.f32 %v3036, %v3036
    %v3057 = vmul.f32 %v3037, %v3037
    %v3058 = vmul.f32 %v3038, %v3038
    %v3059 = vmul.f32 %v3055, %v3055
    %v3060 = vmul.f32 %v3056, %v3056
    %v3061 = vmul.f32 %v3057, %v3057
    %v3062 = vmul.f32 %v3058, %v3058
    %v3063 = vmul.f32 %v3059, %v3059
    %v3064 = vmul.f32 %v3060, %v3060
    %v3065 = vmul.f32 %v3061, %v3061
    %v3066 = vmul.f32 %v3062, %v3062
    %v3067 = vmul.f32 %v3063, %v3055
    %v3068 = vmul.f32 %v3064, %v3056
    %v3069 = vmul.f32 %v3065, %v3057
    %v3070 = vmul.f32 %v3066, %v3058
    %v3071 = vstv %s3026
    %v3072 = vmul.f32 %v3071, %v3067
    %v3073 = vmul.f32 %v3071, %v3068
    %v3074 = vmul.f32 %v3071, %v3069
    %v3075 = vmul.f32 %v3071, %v3070
    %v3076 = vadd.f32 %v3051, %v3072
    %v3077 = vadd.f32 %v3052, %v3073
    %v3078 = vadd.f32 %v3053, %v3074
    %v3079 = vadd.f32 %v3054, %v3075
    %v3080 = vrcp.pop %v3076
    %v3081 = vmul.f32 %v3072, %v3080
    %v3082 = vrcp.pop %v3077
    %v3083 = vmul.f32 %v3073, %v3082
    %v3084 = vrcp.pop %v3078
    %v3085 = vmul.f32 %v3074, %v3084
    %v3086 = vrcp.pop %v3079
    %v3087 = vmul.f32 %v3075, %v3086
    %v3088 = vmul.f32 %v2972, %v3081
    %v3089 = vmul.f32 %v2973, %v3083
    %v3090 = vmul.f32 %v2974, %v3085
    %v3091 = vmul.f32 %v2975, %v3087
    %v3092 = vpack.c.bf16 %v3088, %v3088
    %v3093 = vpack.c.bf16 %v3089, %v3089
    %v3094 = vpack.c.bf16 %v3090, %v3090
    %v3095 = vpack.c.bf16 %v3091, %v3091
    %v3096 = vld [vmem:[#allocation11] sm:$0xff]
    %v3097 = vld [vmem:[#allocation11 + $0x8] sm:$0xff]
    %v3098 = vld [vmem:[#allocation11 + $0x10] sm:$0xff]
    %v3099 = vld [vmem:[#allocation11 + $0x18] sm:$0xff]
    %v3100 = vld [vmem:[#allocation11 + $0x20] sm:$0xff]
    %v3101 = vld [vmem:[#allocation11 + $0x28] sm:$0xff]
    %v3102 = vld [vmem:[#allocation11 + $0x30] sm:$0xff]
    %v3103 = vld [vmem:[#allocation11 + $0x38] sm:$0xff]
    %v3104 = vld [vmem:[#allocation11 + $0x40] sm:$0xff]
    %v3105 = vld [vmem:[#allocation11 + $0x48] sm:$0xff]
    %v3106 = vld [vmem:[#allocation11 + $0x50] sm:$0xff]
    %v3107 = vld [vmem:[#allocation11 + $0x58] sm:$0xff]
    %v3108 = vld [vmem:[#allocation11 + $0x60] sm:$0xff]
    %v3109 = vld [vmem:[#allocation11 + $0x68] sm:$0xff]
    %v3110 = vld [vmem:[#allocation11 + $0x70] sm:$0xff]
    %v3111 = vld [vmem:[#allocation11 + $0x78] sm:$0xff]
    %v3112 = vld [vmem:[#allocation11 + $0x80] sm:$0xff]
    %v3113 = vld [vmem:[#allocation11 + $0x88] sm:$0xff]
    %v3114 = vld [vmem:[#allocation11 + $0x90] sm:$0xff]
    %v3115 = vld [vmem:[#allocation11 + $0x98] sm:$0xff]
    %v3116 = vld [vmem:[#allocation11 + $0xa0] sm:$0xff]
    %v3117 = vld [vmem:[#allocation11 + $0xa8] sm:$0xff]
    %v3118 = vld [vmem:[#allocation11 + $0xb0] sm:$0xff]
    %v3119 = vld [vmem:[#allocation11 + $0xb8] sm:$0xff]
    %v3120 = vld [vmem:[#allocation11 + $0xc0] sm:$0xff]
    %v3121 = vld [vmem:[#allocation11 + $0xc8] sm:$0xff]
    %v3122 = vld [vmem:[#allocation11 + $0xd0] sm:$0xff]
    %v3123 = vld [vmem:[#allocation11 + $0xd8] sm:$0xff]
    %v3124 = vld [vmem:[#allocation11 + $0xe0] sm:$0xff]
    %v3125 = vld [vmem:[#allocation11 + $0xe8] sm:$0xff]
    %v3126 = vld [vmem:[#allocation11 + $0xf0] sm:$0xff]
    %v3127 = vld [vmem:[#allocation11 + $0xf8] sm:$0xff]
    %v3128 = vld [vmem:[#allocation11 + $0x100] sm:$0xff]
    %v3129 = vld [vmem:[#allocation11 + $0x108] sm:$0xff]
    %v3130 = vld [vmem:[#allocation11 + $0x110] sm:$0xff]
    %v3131 = vld [vmem:[#allocation11 + $0x118] sm:$0xff]
    %v3132 = vld [vmem:[#allocation11 + $0x120] sm:$0xff]
    %v3133 = vld [vmem:[#allocation11 + $0x128] sm:$0xff]
    %v3134 = vld [vmem:[#allocation11 + $0x130] sm:$0xff]
    %v3135 = vld [vmem:[#allocation11 + $0x138] sm:$0xff]
    %v3136 = vld [vmem:[#allocation11 + $0x140] sm:$0xff]
    %v3137 = vld [vmem:[#allocation11 + $0x148] sm:$0xff]
    %v3138 = vld [vmem:[#allocation11 + $0x150] sm:$0xff]
    %v3139 = vld [vmem:[#allocation11 + $0x158] sm:$0xff]
    %v3140 = vld [vmem:[#allocation11 + $0x160] sm:$0xff]
    %v3141 = vld [vmem:[#allocation11 + $0x168] sm:$0xff]
    %v3142 = vld [vmem:[#allocation11 + $0x170] sm:$0xff]
    %v3143 = vld [vmem:[#allocation11 + $0x178] sm:$0xff]
    %v3144 = vld [vmem:[#allocation11 + $0x180] sm:$0xff]
    %v3145 = vld [vmem:[#allocation11 + $0x188] sm:$0xff]
    %v3146 = vld [vmem:[#allocation11 + $0x190] sm:$0xff]
    %v3147 = vld [vmem:[#allocation11 + $0x198] sm:$0xff]
    %v3148 = vld [vmem:[#allocation11 + $0x1a0] sm:$0xff]
    %v3149 = vld [vmem:[#allocation11 + $0x1a8] sm:$0xff]
    %v3150 = vld [vmem:[#allocation11 + $0x1b0] sm:$0xff]
    %v3151 = vld [vmem:[#allocation11 + $0x1b8] sm:$0xff]
    %v3152 = vld [vmem:[#allocation11 + $0x1c0] sm:$0xff]
    %v3153 = vld [vmem:[#allocation11 + $0x1c8] sm:$0xff]
    %v3154 = vld [vmem:[#allocation11 + $0x1d0] sm:$0xff]
    %v3155 = vld [vmem:[#allocation11 + $0x1d8] sm:$0xff]
    %v3156 = vld [vmem:[#allocation11 + $0x1e0] sm:$0xff]
    %v3157 = vld [vmem:[#allocation11 + $0x1e8] sm:$0xff]
    %v3158 = vld [vmem:[#allocation11 + $0x1f0] sm:$0xff]
    %v3159 = vld [vmem:[#allocation11 + $0x1f8] sm:$0xff]
    %v3160 = vld [vmem:[#allocation11 + $0x200] sm:$0xff]
    %v3161 = vld [vmem:[#allocation11 + $0x208] sm:$0xff]
    %v3162 = vld [vmem:[#allocation11 + $0x210] sm:$0xff]
    %v3163 = vld [vmem:[#allocation11 + $0x218] sm:$0xff]
    %v3164 = vld [vmem:[#allocation11 + $0x220] sm:$0xff]
    %v3165 = vld [vmem:[#allocation11 + $0x228] sm:$0xff]
    %v3166 = vld [vmem:[#allocation11 + $0x230] sm:$0xff]
    %v3167 = vld [vmem:[#allocation11 + $0x238] sm:$0xff]
    %v3168 = vld [vmem:[#allocation11 + $0x240] sm:$0xff]
    %v3169 = vld [vmem:[#allocation11 + $0x248] sm:$0xff]
    %v3170 = vld [vmem:[#allocation11 + $0x250] sm:$0xff]
    %v3171 = vld [vmem:[#allocation11 + $0x258] sm:$0xff]
    %v3172 = vld [vmem:[#allocation11 + $0x260] sm:$0xff]
    %v3173 = vld [vmem:[#allocation11 + $0x268] sm:$0xff]
    %v3174 = vld [vmem:[#allocation11 + $0x270] sm:$0xff]
    %v3175 = vld [vmem:[#allocation11 + $0x278] sm:$0xff]
    %v3176 = vld [vmem:[#allocation11 + $0x280] sm:$0xff]
    %v3177 = vld [vmem:[#allocation11 + $0x288] sm:$0xff]
    %v3178 = vld [vmem:[#allocation11 + $0x290] sm:$0xff]
    %v3179 = vld [vmem:[#allocation11 + $0x298] sm:$0xff]
    %v3180 = vld [vmem:[#allocation11 + $0x2a0] sm:$0xff]
    %v3181 = vld [vmem:[#allocation11 + $0x2a8] sm:$0xff]
    %v3182 = vld [vmem:[#allocation11 + $0x2b0] sm:$0xff]
    %v3183 = vld [vmem:[#allocation11 + $0x2b8] sm:$0xff]
    %v3184 = vld [vmem:[#allocation11 + $0x2c0] sm:$0xff]
    %v3185 = vld [vmem:[#allocation11 + $0x2c8] sm:$0xff]
    %v3186 = vld [vmem:[#allocation11 + $0x2d0] sm:$0xff]
    %v3187 = vld [vmem:[#allocation11 + $0x2d8] sm:$0xff]
    %v3188 = vld [vmem:[#allocation11 + $0x2e0] sm:$0xff]
    %v3189 = vld [vmem:[#allocation11 + $0x2e8] sm:$0xff]
    %v3190 = vld [vmem:[#allocation11 + $0x2f0] sm:$0xff]
    %v3191 = vld [vmem:[#allocation11 + $0x2f8] sm:$0xff]
    %v3192 = vld [vmem:[#allocation11 + $0x300] sm:$0xff]
    %v3193 = vld [vmem:[#allocation11 + $0x308] sm:$0xff]
    %v3194 = vld [vmem:[#allocation11 + $0x310] sm:$0xff]
    %v3195 = vld [vmem:[#allocation11 + $0x318] sm:$0xff]
    %v3196 = vld [vmem:[#allocation11 + $0x320] sm:$0xff]
    %v3197 = vld [vmem:[#allocation11 + $0x328] sm:$0xff]
    %v3198 = vld [vmem:[#allocation11 + $0x330] sm:$0xff]
    %v3199 = vld [vmem:[#allocation11 + $0x338] sm:$0xff]
    %v3200 = vld [vmem:[#allocation11 + $0x340] sm:$0xff]
    %v3201 = vld [vmem:[#allocation11 + $0x348] sm:$0xff]
    %v3202 = vld [vmem:[#allocation11 + $0x350] sm:$0xff]
    %v3203 = vld [vmem:[#allocation11 + $0x358] sm:$0xff]
    %v3204 = vld [vmem:[#allocation11 + $0x360] sm:$0xff]
    %v3205 = vld [vmem:[#allocation11 + $0x368] sm:$0xff]
    %v3206 = vld [vmem:[#allocation11 + $0x370] sm:$0xff]
    %v3207 = vld [vmem:[#allocation11 + $0x378] sm:$0xff]
    %v3208 = vld [vmem:[#allocation11 + $0x380] sm:$0xff]
    %v3209 = vld [vmem:[#allocation11 + $0x388] sm:$0xff]
    %v3210 = vld [vmem:[#allocation11 + $0x390] sm:$0xff]
    %v3211 = vld [vmem:[#allocation11 + $0x398] sm:$0xff]
    %v3212 = vld [vmem:[#allocation11 + $0x3a0] sm:$0xff]
    %v3213 = vld [vmem:[#allocation11 + $0x3a8] sm:$0xff]
    %v3214 = vld [vmem:[#allocation11 + $0x3b0] sm:$0xff]
    %v3215 = vld [vmem:[#allocation11 + $0x3b8] sm:$0xff]
    %v3216 = vld [vmem:[#allocation11 + $0x3c0] sm:$0xff]
    %v3217 = vld [vmem:[#allocation11 + $0x3c8] sm:$0xff]
    %v3218 = vld [vmem:[#allocation11 + $0x3d0] sm:$0xff]
    %v3219 = vld [vmem:[#allocation11 + $0x3d8] sm:$0xff]
    %v3220 = vld [vmem:[#allocation11 + $0x3e0] sm:$0xff]
    %v3221 = vld [vmem:[#allocation11 + $0x3e8] sm:$0xff]
    %v3222 = vld [vmem:[#allocation11 + $0x3f0] sm:$0xff]
    %v3223 = vld [vmem:[#allocation11 + $0x3f8] sm:$0xff]
    %v3224 = vld [vmem:[%s8] sm:$0xf]
    %v3226 = vlaneseq
    %v3227 = vshrl.u32 %v3226, 7
    %v3228 = vsub.s32 0, %v3227
    %v3229 = vrot.slane %v3224, %v3228
    %v3230 = vlaneseq
    %v3231 = vshrl.u32 %v3230, 7
    %v3232 = vsub.s32 1, %v3231
    %v3233 = vrot.slane %v3224, %v3232
    %v3234 = vlaneseq
    %v3235 = vshrl.u32 %v3234, 7
    %v3236 = vsub.s32 2, %v3235
    %v3237 = vrot.slane %v3224, %v3236
    %v3238 = vlaneseq
    %v3239 = vshrl.u32 %v3238, 7
    %v3240 = vsub.s32 3, %v3239
    %v3241 = vrot.slane %v3224, %v3240
    %v3374 = vunpack.c.l.b16 %v3096
    %v3375 = vunpack.c.h.b16 %v3096
    %v3376 = vunpack.c.l.b16 %v3097
    %v3377 = vunpack.c.h.b16 %v3097
    %v3378 = vunpack.c.l.b16 %v3098
    %v3379 = vunpack.c.h.b16 %v3098
    %v3380 = vunpack.c.l.b16 %v3099
    %v3381 = vunpack.c.h.b16 %v3099
    %v3382 = vunpack.c.l.b16 %v3100
    %v3383 = vunpack.c.h.b16 %v3100
    %v3384 = vunpack.c.l.b16 %v3101
    %v3385 = vunpack.c.h.b16 %v3101
    %v3386 = vunpack.c.l.b16 %v3102
    %v3387 = vunpack.c.h.b16 %v3102
    %v3388 = vunpack.c.l.b16 %v3103
    %v3389 = vunpack.c.h.b16 %v3103
    %v3390 = vunpack.c.l.b16 %v3104
    %v3391 = vunpack.c.h.b16 %v3104
    %v3392 = vunpack.c.l.b16 %v3105
    %v3393 = vunpack.c.h.b16 %v3105
    %v3394 = vunpack.c.l.b16 %v3106
    %v3395 = vunpack.c.h.b16 %v3106
    %v3396 = vunpack.c.l.b16 %v3107
    %v3397 = vunpack.c.h.b16 %v3107
    %v3398 = vunpack.c.l.b16 %v3108
    %v3399 = vunpack.c.h.b16 %v3108
    %v3400 = vunpack.c.l.b16 %v3109
    %v3401 = vunpack.c.h.b16 %v3109
    %v3402 = vunpack.c.l.b16 %v3110
    %v3403 = vunpack.c.h.b16 %v3110
    %v3404 = vunpack.c.l.b16 %v3111
    %v3405 = vunpack.c.h.b16 %v3111
    %v3406 = vunpack.c.l.b16 %v3112
    %v3407 = vunpack.c.h.b16 %v3112
    %v3408 = vunpack.c.l.b16 %v3113
    %v3409 = vunpack.c.h.b16 %v3113
    %v3410 = vunpack.c.l.b16 %v3114
    %v3411 = vunpack.c.h.b16 %v3114
    %v3412 = vunpack.c.l.b16 %v3115
    %v3413 = vunpack.c.h.b16 %v3115
    %v3414 = vunpack.c.l.b16 %v3116
    %v3415 = vunpack.c.h.b16 %v3116
    %v3416 = vunpack.c.l.b16 %v3117
    %v3417 = vunpack.c.h.b16 %v3117
    %v3418 = vunpack.c.l.b16 %v3118
    %v3419 = vunpack.c.h.b16 %v3118
    %v3420 = vunpack.c.l.b16 %v3119
    %v3421 = vunpack.c.h.b16 %v3119
    %v3422 = vunpack.c.l.b16 %v3120
    %v3423 = vunpack.c.h.b16 %v3120
    %v3424 = vunpack.c.l.b16 %v3121
    %v3425 = vunpack.c.h.b16 %v3121
    %v3426 = vunpack.c.l.b16 %v3122
    %v3427 = vunpack.c.h.b16 %v3122
    %v3428 = vunpack.c.l.b16 %v3123
    %v3429 = vunpack.c.h.b16 %v3123
    %v3430 = vunpack.c.l.b16 %v3124
    %v3431 = vunpack.c.h.b16 %v3124
    %v3432 = vunpack.c.l.b16 %v3125
    %v3433 = vunpack.c.h.b16 %v3125
    %v3434 = vunpack.c.l.b16 %v3126
    %v3435 = vunpack.c.h.b16 %v3126
    %v3436 = vunpack.c.l.b16 %v3127
    %v3437 = vunpack.c.h.b16 %v3127
    %v3438 = vunpack.c.l.b16 %v3128
    %v3439 = vunpack.c.h.b16 %v3128
    %v3440 = vunpack.c.l.b16 %v3129
    %v3441 = vunpack.c.h.b16 %v3129
    %v3442 = vunpack.c.l.b16 %v3130
    %v3443 = vunpack.c.h.b16 %v3130
    %v3444 = vunpack.c.l.b16 %v3131
    %v3445 = vunpack.c.h.b16 %v3131
    %v3446 = vunpack.c.l.b16 %v3132
    %v3447 = vunpack.c.h.b16 %v3132
    %v3448 = vunpack.c.l.b16 %v3133
    %v3449 = vunpack.c.h.b16 %v3133
    %v3450 = vunpack.c.l.b16 %v3134
    %v3451 = vunpack.c.h.b16 %v3134
    %v3452 = vunpack.c.l.b16 %v3135
    %v3453 = vunpack.c.h.b16 %v3135
    %v3454 = vunpack.c.l.b16 %v3136
    %v3455 = vunpack.c.h.b16 %v3136
    %v3456 = vunpack.c.l.b16 %v3137
    %v3457 = vunpack.c.h.b16 %v3137
    %v3458 = vunpack.c.l.b16 %v3138
    %v3459 = vunpack.c.h.b16 %v3138
    %v3460 = vunpack.c.l.b16 %v3139
    %v3461 = vunpack.c.h.b16 %v3139
    %v3462 = vunpack.c.l.b16 %v3140
    %v3463 = vunpack.c.h.b16 %v3140
    %v3464 = vunpack.c.l.b16 %v3141
    %v3465 = vunpack.c.h.b16 %v3141
    %v3466 = vunpack.c.l.b16 %v3142
    %v3467 = vunpack.c.h.b16 %v3142
    %v3468 = vunpack.c.l.b16 %v3143
    %v3469 = vunpack.c.h.b16 %v3143
    %v3470 = vunpack.c.l.b16 %v3144
    %v3471 = vunpack.c.h.b16 %v3144
    %v3472 = vunpack.c.l.b16 %v3145
    %v3473 = vunpack.c.h.b16 %v3145
    %v3474 = vunpack.c.l.b16 %v3146
    %v3475 = vunpack.c.h.b16 %v3146
    %v3476 = vunpack.c.l.b16 %v3147
    %v3477 = vunpack.c.h.b16 %v3147
    %v3478 = vunpack.c.l.b16 %v3148
    %v3479 = vunpack.c.h.b16 %v3148
    %v3480 = vunpack.c.l.b16 %v3149
    %v3481 = vunpack.c.h.b16 %v3149
    %v3482 = vunpack.c.l.b16 %v3150
    %v3483 = vunpack.c.h.b16 %v3150
    %v3484 = vunpack.c.l.b16 %v3151
    %v3485 = vunpack.c.h.b16 %v3151
    %v3486 = vunpack.c.l.b16 %v3152
    %v3487 = vunpack.c.h.b16 %v3152
    %v3488 = vunpack.c.l.b16 %v3153
    %v3489 = vunpack.c.h.b16 %v3153
    %v3490 = vunpack.c.l.b16 %v3154
    %v3491 = vunpack.c.h.b16 %v3154
    %v3492 = vunpack.c.l.b16 %v3155
    %v3493 = vunpack.c.h.b16 %v3155
    %v3494 = vunpack.c.l.b16 %v3156
    %v3495 = vunpack.c.h.b16 %v3156
    %v3496 = vunpack.c.l.b16 %v3157
    %v3497 = vunpack.c.h.b16 %v3157
    %v3498 = vunpack.c.l.b16 %v3158
    %v3499 = vunpack.c.h.b16 %v3158
    %v3500 = vunpack.c.l.b16 %v3159
    %v3501 = vunpack.c.h.b16 %v3159
    %v3502 = vunpack.c.l.b16 %v3160
    %v3503 = vunpack.c.h.b16 %v3160
    %v3504 = vunpack.c.l.b16 %v3161
    %v3505 = vunpack.c.h.b16 %v3161
    %v3506 = vunpack.c.l.b16 %v3162
    %v3507 = vunpack.c.h.b16 %v3162
    %v3508 = vunpack.c.l.b16 %v3163
    %v3509 = vunpack.c.h.b16 %v3163
    %v3510 = vunpack.c.l.b16 %v3164
    %v3511 = vunpack.c.h.b16 %v3164
    %v3512 = vunpack.c.l.b16 %v3165
    %v3513 = vunpack.c.h.b16 %v3165
    %v3514 = vunpack.c.l.b16 %v3166
    %v3515 = vunpack.c.h.b16 %v3166
    %v3516 = vunpack.c.l.b16 %v3167
    %v3517 = vunpack.c.h.b16 %v3167
    %v3518 = vunpack.c.l.b16 %v3168
    %v3519 = vunpack.c.h.b16 %v3168
    %v3520 = vunpack.c.l.b16 %v3169
    %v3521 = vunpack.c.h.b16 %v3169
    %v3522 = vunpack.c.l.b16 %v3170
    %v3523 = vunpack.c.h.b16 %v3170
    %v3524 = vunpack.c.l.b16 %v3171
    %v3525 = vunpack.c.h.b16 %v3171
    %v3526 = vunpack.c.l.b16 %v3172
    %v3527 = vunpack.c.h.b16 %v3172
    %v3528 = vunpack.c.l.b16 %v3173
    %v3529 = vunpack.c.h.b16 %v3173
    %v3530 = vunpack.c.l.b16 %v3174
    %v3531 = vunpack.c.h.b16 %v3174
    %v3532 = vunpack.c.l.b16 %v3175
    %v3533 = vunpack.c.h.b16 %v3175
    %v3534 = vunpack.c.l.b16 %v3176
    %v3535 = vunpack.c.h.b16 %v3176
    %v3536 = vunpack.c.l.b16 %v3177
    %v3537 = vunpack.c.h.b16 %v3177
    %v3538 = vunpack.c.l.b16 %v3178
    %v3539 = vunpack.c.h.b16 %v3178
    %v3540 = vunpack.c.l.b16 %v3179
    %v3541 = vunpack.c.h.b16 %v3179
    %v3542 = vunpack.c.l.b16 %v3180
    %v3543 = vunpack.c.h.b16 %v3180
    %v3544 = vunpack.c.l.b16 %v3181
    %v3545 = vunpack.c.h.b16 %v3181
    %v3546 = vunpack.c.l.b16 %v3182
    %v3547 = vunpack.c.h.b16 %v3182
    %v3548 = vunpack.c.l.b16 %v3183
    %v3549 = vunpack.c.h.b16 %v3183
    %v3550 = vunpack.c.l.b16 %v3184
    %v3551 = vunpack.c.h.b16 %v3184
    %v3552 = vunpack.c.l.b16 %v3185
    %v3553 = vunpack.c.h.b16 %v3185
    %v3554 = vunpack.c.l.b16 %v3186
    %v3555 = vunpack.c.h.b16 %v3186
    %v3556 = vunpack.c.l.b16 %v3187
    %v3557 = vunpack.c.h.b16 %v3187
    %v3558 = vunpack.c.l.b16 %v3188
    %v3559 = vunpack.c.h.b16 %v3188
    %v3560 = vunpack.c.l.b16 %v3189
    %v3561 = vunpack.c.h.b16 %v3189
    %v3562 = vunpack.c.l.b16 %v3190
    %v3563 = vunpack.c.h.b16 %v3190
    %v3564 = vunpack.c.l.b16 %v3191
    %v3565 = vunpack.c.h.b16 %v3191
    %v3566 = vunpack.c.l.b16 %v3192
    %v3567 = vunpack.c.h.b16 %v3192
    %v3568 = vunpack.c.l.b16 %v3193
    %v3569 = vunpack.c.h.b16 %v3193
    %v3570 = vunpack.c.l.b16 %v3194
    %v3571 = vunpack.c.h.b16 %v3194
    %v3572 = vunpack.c.l.b16 %v3195
    %v3573 = vunpack.c.h.b16 %v3195
    %v3574 = vunpack.c.l.b16 %v3196
    %v3575 = vunpack.c.h.b16 %v3196
    %v3576 = vunpack.c.l.b16 %v3197
    %v3577 = vunpack.c.h.b16 %v3197
    %v3578 = vunpack.c.l.b16 %v3198
    %v3579 = vunpack.c.h.b16 %v3198
    %v3580 = vunpack.c.l.b16 %v3199
    %v3581 = vunpack.c.h.b16 %v3199
    %v3582 = vunpack.c.l.b16 %v3200
    %v3583 = vunpack.c.h.b16 %v3200
    %v3584 = vunpack.c.l.b16 %v3201
    %v3585 = vunpack.c.h.b16 %v3201
    %v3586 = vunpack.c.l.b16 %v3202
    %v3587 = vunpack.c.h.b16 %v3202
    %v3588 = vunpack.c.l.b16 %v3203
    %v3589 = vunpack.c.h.b16 %v3203
    %v3590 = vunpack.c.l.b16 %v3204
    %v3591 = vunpack.c.h.b16 %v3204
    %v3592 = vunpack.c.l.b16 %v3205
    %v3593 = vunpack.c.h.b16 %v3205
    %v3594 = vunpack.c.l.b16 %v3206
    %v3595 = vunpack.c.h.b16 %v3206
    %v3596 = vunpack.c.l.b16 %v3207
    %v3597 = vunpack.c.h.b16 %v3207
    %v3598 = vunpack.c.l.b16 %v3208
    %v3599 = vunpack.c.h.b16 %v3208
    %v3600 = vunpack.c.l.b16 %v3209
    %v3601 = vunpack.c.h.b16 %v3209
    %v3602 = vunpack.c.l.b16 %v3210
    %v3603 = vunpack.c.h.b16 %v3210
    %v3604 = vunpack.c.l.b16 %v3211
    %v3605 = vunpack.c.h.b16 %v3211
    %v3606 = vunpack.c.l.b16 %v3212
    %v3607 = vunpack.c.h.b16 %v3212
    %v3608 = vunpack.c.l.b16 %v3213
    %v3609 = vunpack.c.h.b16 %v3213
    %v3610 = vunpack.c.l.b16 %v3214
    %v3611 = vunpack.c.h.b16 %v3214
    %v3612 = vunpack.c.l.b16 %v3215
    %v3613 = vunpack.c.h.b16 %v3215
    %v3614 = vunpack.c.l.b16 %v3216
    %v3615 = vunpack.c.h.b16 %v3216
    %v3616 = vunpack.c.l.b16 %v3217
    %v3617 = vunpack.c.h.b16 %v3217
    %v3618 = vunpack.c.l.b16 %v3218
    %v3619 = vunpack.c.h.b16 %v3218
    %v3620 = vunpack.c.l.b16 %v3219
    %v3621 = vunpack.c.h.b16 %v3219
    %v3622 = vunpack.c.l.b16 %v3220
    %v3623 = vunpack.c.h.b16 %v3220
    %v3624 = vunpack.c.l.b16 %v3221
    %v3625 = vunpack.c.h.b16 %v3221
    %v3626 = vunpack.c.l.b16 %v3222
    %v3627 = vunpack.c.h.b16 %v3222
    %v3628 = vunpack.c.l.b16 %v3223
    %v3629 = vunpack.c.h.b16 %v3223
    %v3630 = vpack.c.b16 %v3378, %v3374
    %v3631 = vpack.c.b16 %v3379, %v3375
    %v3632 = vpack.c.b16 %v3380, %v3376
    %v3633 = vpack.c.b16 %v3381, %v3377
    %v3634 = vpack.c.b16 %v3386, %v3382
    %v3635 = vpack.c.b16 %v3387, %v3383
    %v3636 = vpack.c.b16 %v3388, %v3384
    %v3637 = vpack.c.b16 %v3389, %v3385
    %v3638 = vpack.c.b16 %v3394, %v3390
    %v3639 = vpack.c.b16 %v3395, %v3391
    %v3640 = vpack.c.b16 %v3396, %v3392
    %v3641 = vpack.c.b16 %v3397, %v3393
    %v3642 = vpack.c.b16 %v3402, %v3398
    %v3643 = vpack.c.b16 %v3403, %v3399
    %v3644 = vpack.c.b16 %v3404, %v3400
    %v3645 = vpack.c.b16 %v3405, %v3401
    %v3646 = vpack.c.b16 %v3410, %v3406
    %v3647 = vpack.c.b16 %v3411, %v3407
    %v3648 = vpack.c.b16 %v3412, %v3408
    %v3649 = vpack.c.b16 %v3413, %v3409
    %v3650 = vpack.c.b16 %v3418, %v3414
    %v3651 = vpack.c.b16 %v3419, %v3415
    %v3652 = vpack.c.b16 %v3420, %v3416
    %v3653 = vpack.c.b16 %v3421, %v3417
    %v3654 = vpack.c.b16 %v3426, %v3422
    %v3655 = vpack.c.b16 %v3427, %v3423
    %v3656 = vpack.c.b16 %v3428, %v3424
    %v3657 = vpack.c.b16 %v3429, %v3425
    %v3658 = vpack.c.b16 %v3434, %v3430
    %v3659 = vpack.c.b16 %v3435, %v3431
    %v3660 = vpack.c.b16 %v3436, %v3432
    %v3661 = vpack.c.b16 %v3437, %v3433
    %v3662 = vpack.c.b16 %v3442, %v3438
    %v3663 = vpack.c.b16 %v3443, %v3439
    %v3664 = vpack.c.b16 %v3444, %v3440
    %v3665 = vpack.c.b16 %v3445, %v3441
    %v3666 = vpack.c.b16 %v3450, %v3446
    %v3667 = vpack.c.b16 %v3451, %v3447
    %v3668 = vpack.c.b16 %v3452, %v3448
    %v3669 = vpack.c.b16 %v3453, %v3449
    %v3670 = vpack.c.b16 %v3458, %v3454
    %v3671 = vpack.c.b16 %v3459, %v3455
    %v3672 = vpack.c.b16 %v3460, %v3456
    %v3673 = vpack.c.b16 %v3461, %v3457
    %v3674 = vpack.c.b16 %v3466, %v3462
    %v3675 = vpack.c.b16 %v3467, %v3463
    %v3676 = vpack.c.b16 %v3468, %v3464
    %v3677 = vpack.c.b16 %v3469, %v3465
    %v3678 = vpack.c.b16 %v3474, %v3470
    %v3679 = vpack.c.b16 %v3475, %v3471
    %v3680 = vpack.c.b16 %v3476, %v3472
    %v3681 = vpack.c.b16 %v3477, %v3473
    %v3682 = vpack.c.b16 %v3482, %v3478
    %v3683 = vpack.c.b16 %v3483, %v3479
    %v3684 = vpack.c.b16 %v3484, %v3480
    %v3685 = vpack.c.b16 %v3485, %v3481
    %v3686 = vpack.c.b16 %v3490, %v3486
    %v3687 = vpack.c.b16 %v3491, %v3487
    %v3688 = vpack.c.b16 %v3492, %v3488
    %v3689 = vpack.c.b16 %v3493, %v3489
    %v3690 = vpack.c.b16 %v3498, %v3494
    %v3691 = vpack.c.b16 %v3499, %v3495
    %v3692 = vpack.c.b16 %v3500, %v3496
    %v3693 = vpack.c.b16 %v3501, %v3497
    %v3694 = vpack.c.b16 %v3506, %v3502
    %v3695 = vpack.c.b16 %v3507, %v3503
    %v3696 = vpack.c.b16 %v3508, %v3504
    %v3697 = vpack.c.b16 %v3509, %v3505
    %v3698 = vpack.c.b16 %v3514, %v3510
    %v3699 = vpack.c.b16 %v3515, %v3511
    %v3700 = vpack.c.b16 %v3516, %v3512
    %v3701 = vpack.c.b16 %v3517, %v3513
    %v3702 = vpack.c.b16 %v3522, %v3518
    %v3703 = vpack.c.b16 %v3523, %v3519
    %v3704 = vpack.c.b16 %v3524, %v3520
    %v3705 = vpack.c.b16 %v3525, %v3521
    %v3706 = vpack.c.b16 %v3530, %v3526
    %v3707 = vpack.c.b16 %v3531, %v3527
    %v3708 = vpack.c.b16 %v3532, %v3528
    %v3709 = vpack.c.b16 %v3533, %v3529
    %v3710 = vpack.c.b16 %v3538, %v3534
    %v3711 = vpack.c.b16 %v3539, %v3535
    %v3712 = vpack.c.b16 %v3540, %v3536
    %v3713 = vpack.c.b16 %v3541, %v3537
    %v3714 = vpack.c.b16 %v3546, %v3542
    %v3715 = vpack.c.b16 %v3547, %v3543
    %v3716 = vpack.c.b16 %v3548, %v3544
    %v3717 = vpack.c.b16 %v3549, %v3545
    %v3718 = vpack.c.b16 %v3554, %v3550
    %v3719 = vpack.c.b16 %v3555, %v3551
    %v3720 = vpack.c.b16 %v3556, %v3552
    %v3721 = vpack.c.b16 %v3557, %v3553
    %v3722 = vpack.c.b16 %v3562, %v3558
    %v3723 = vpack.c.b16 %v3563, %v3559
    %v3724 = vpack.c.b16 %v3564, %v3560
    %v3725 = vpack.c.b16 %v3565, %v3561
    %v3726 = vpack.c.b16 %v3570, %v3566
    %v3727 = vpack.c.b16 %v3571, %v3567
    %v3728 = vpack.c.b16 %v3572, %v3568
    %v3729 = vpack.c.b16 %v3573, %v3569
    %v3730 = vpack.c.b16 %v3578, %v3574
    %v3731 = vpack.c.b16 %v3579, %v3575
    %v3732 = vpack.c.b16 %v3580, %v3576
    %v3733 = vpack.c.b16 %v3581, %v3577
    %v3734 = vpack.c.b16 %v3586, %v3582
    %v3735 = vpack.c.b16 %v3587, %v3583
    %v3736 = vpack.c.b16 %v3588, %v3584
    %v3737 = vpack.c.b16 %v3589, %v3585
    %v3738 = vpack.c.b16 %v3594, %v3590
    %v3739 = vpack.c.b16 %v3595, %v3591
    %v3740 = vpack.c.b16 %v3596, %v3592
    %v3741 = vpack.c.b16 %v3597, %v3593
    %v3742 = vpack.c.b16 %v3602, %v3598
    %v3743 = vpack.c.b16 %v3603, %v3599
    %v3744 = vpack.c.b16 %v3604, %v3600
    %v3745 = vpack.c.b16 %v3605, %v3601
    %v3746 = vpack.c.b16 %v3610, %v3606
    %v3747 = vpack.c.b16 %v3611, %v3607
    %v3748 = vpack.c.b16 %v3612, %v3608
    %v3749 = vpack.c.b16 %v3613, %v3609
    %v3750 = vpack.c.b16 %v3618, %v3614
    %v3751 = vpack.c.b16 %v3619, %v3615
    %v3752 = vpack.c.b16 %v3620, %v3616
    %v3753 = vpack.c.b16 %v3621, %v3617
    %v3754 = vpack.c.b16 %v3626, %v3622
    %v3755 = vpack.c.b16 %v3627, %v3623
    %v3756 = vpack.c.b16 %v3628, %v3624
    %v3757 = vpack.c.b16 %v3629, %v3625
    %3886 = vmatprep.subr.bf16.mxu0 %v3631
    %3887 = vmatpush1.bf16.msra.mxu0 %v3630
    %3888 = vmatprep.subr.bf16.mxu0 %v3635
    %3889 = vmatpush1.bf16.msra.mxu0 %v3634
    %3890 = vmatprep.subr.bf16.mxu0 %v3639
    %3891 = vmatpush1.bf16.msra.mxu0 %v3638
    %3892 = vmatprep.subr.bf16.mxu0 %v3643
    %3893 = vmatpush1.bf16.msra.mxu0 %v3642
    %3894 = vmatprep.subr.bf16.mxu0 %v3647
    %3895 = vmatpush1.bf16.msra.mxu0 %v3646
    %3896 = vmatprep.subr.bf16.mxu0 %v3651
    %3897 = vmatpush1.bf16.msra.mxu0 %v3650
    %3898 = vmatprep.subr.bf16.mxu0 %v3655
    %3899 = vmatpush1.bf16.msra.mxu0 %v3654
    %3900 = vmatprep.subr.bf16.mxu0 %v3659
    %3901 = vmatpush1.bf16.msra.mxu0 %v3658
    %3902 = vmatprep.subr.bf16.mxu0 %v3663
    %3903 = vmatpush1.bf16.msra.mxu0 %v3662
    %3904 = vmatprep.subr.bf16.mxu0 %v3667
    %3905 = vmatpush1.bf16.msra.mxu0 %v3666
    %3906 = vmatprep.subr.bf16.mxu0 %v3671
    %3907 = vmatpush1.bf16.msra.mxu0 %v3670
    %3908 = vmatprep.subr.bf16.mxu0 %v3675
    %3909 = vmatpush1.bf16.msra.mxu0 %v3674
    %3910 = vmatprep.subr.bf16.mxu0 %v3679
    %3911 = vmatpush1.bf16.msra.mxu0 %v3678
    %3912 = vmatprep.subr.bf16.mxu0 %v3683
    %3913 = vmatpush1.bf16.msra.mxu0 %v3682
    %3914 = vmatprep.subr.bf16.mxu0 %v3687
    %3915 = vmatpush1.bf16.msra.mxu0 %v3686
    %3916 = vmatprep.subr.bf16.mxu0 %v3691
    %3917 = vmatpush1.bf16.msra.mxu0 %v3690
    %3918 = vmatprep.mubr.bf16.mxu0 %v3093
    %3919 = vmatmul.mubr.bf16.gmra.mrb[0].mxu0 %v3092
    %v3920 = vpop.f32.mrb[0].mxu0
    %v3921 = vadd.f32 %v3229, %v3920
    %v3922 = vpop.f32.mrb[0].mxu0
    %v3923 = vadd.f32 %v3233, %v3922
    %v3924 = vpop.f32.mrb[0].mxu0
    %v3925 = vpop.f32.mrb[0].mxu0
    %3926 = vdwg.mxu0
    %3927 = vmatprep.subr.bf16.mxu0 %v3695
    %3928 = vmatpush1.bf16.msra.mxu0 %v3694
    %3929 = vmatprep.subr.bf16.mxu0 %v3699
    %3930 = vmatpush1.bf16.msra.mxu0 %v3698
    %3931 = vmatprep.subr.bf16.mxu0 %v3703
    %3932 = vmatpush1.bf16.msra.mxu0 %v3702
    %3933 = vmatprep.subr.bf16.mxu0 %v3707
    %3934 = vmatpush1.bf16.msra.mxu0 %v3706
    %3935 = vmatprep.subr.bf16.mxu0 %v3711
    %3936 = vmatpush1.bf16.msra.mxu0 %v3710
    %3937 = vmatprep.subr.bf16.mxu0 %v3715
    %3938 = vmatpush1.bf16.msra.mxu0 %v3714
    %3939 = vmatprep.subr.bf16.mxu0 %v3719
    %3940 = vmatpush1.bf16.msra.mxu0 %v3718
    %3941 = vmatprep.subr.bf16.mxu0 %v3723
    %3942 = vmatpush1.bf16.msra.mxu0 %v3722
    %3943 = vmatprep.subr.bf16.mxu0 %v3727
    %3944 = vmatpush1.bf16.msra.mxu0 %v3726
    %3945 = vmatprep.subr.bf16.mxu0 %v3731
    %3946 = vmatpush1.bf16.msra.mxu0 %v3730
    %3947 = vmatprep.subr.bf16.mxu0 %v3735
    %3948 = vmatpush1.bf16.msra.mxu0 %v3734
    %3949 = vmatprep.subr.bf16.mxu0 %v3739
    %3950 = vmatpush1.bf16.msra.mxu0 %v3738
    %3951 = vmatprep.subr.bf16.mxu0 %v3743
    %3952 = vmatpush1.bf16.msra.mxu0 %v3742
    %3953 = vmatprep.subr.bf16.mxu0 %v3747
    %3954 = vmatpush1.bf16.msra.mxu0 %v3746
    %3955 = vmatprep.subr.bf16.mxu0 %v3751
    %3956 = vmatpush1.bf16.msra.mxu0 %v3750
    %3957 = vmatprep.subr.bf16.mxu0 %v3755
    %3958 = vmatpush1.bf16.msra.mxu0 %v3754
    %3959 = vmatprep.mubr.bf16.mxu0 %v3095
    %3960 = vmatmul.mubr.bf16.gmra.mrb[0].mxu0 %v3094
    %v3961 = vpop.f32.mrb[0].mxu0
    %v3962 = vadd.f32 %v3921, %v3961
    %v3963 = vpop.f32.mrb[0].mxu0
    %v3964 = vadd.f32 %v3923, %v3963
    %v3965 = vpop.f32.mrb[0].mxu0
    %v3966 = vpop.f32.mrb[0].mxu0
    %3967 = vdwg.mxu0
    %3968 = vmatprep.subr.bf16.mxu0 %v3633
    %3969 = vmatpush1.bf16.msra.mxu0 %v3632
    %3970 = vmatprep.subr.bf16.mxu0 %v3637
    %3971 = vmatpush1.bf16.msra.mxu0 %v3636
    %3972 = vmatprep.subr.bf16.mxu0 %v3641
    %3973 = vmatpush1.bf16.msra.mxu0 %v3640
    %3974 = vmatprep.subr.bf16.mxu0 %v3645
    %3975 = vmatpush1.bf16.msra.mxu0 %v3644
    %3976 = vmatprep.subr.bf16.mxu0 %v3649
    %3977 = vmatpush1.bf16.msra.mxu0 %v3648
    %3978 = vmatprep.subr.bf16.mxu0 %v3653
    %3979 = vmatpush1.bf16.msra.mxu0 %v3652
    %3980 = vmatprep.subr.bf16.mxu0 %v3657
    %3981 = vmatpush1.bf16.msra.mxu0 %v3656
    %3982 = vmatprep.subr.bf16.mxu0 %v3661
    %3983 = vmatpush1.bf16.msra.mxu0 %v3660
    %3984 = vmatprep.subr.bf16.mxu0 %v3665
    %3985 = vmatpush1.bf16.msra.mxu0 %v3664
    %3986 = vmatprep.subr.bf16.mxu0 %v3669
    %3987 = vmatpush1.bf16.msra.mxu0 %v3668
    %3988 = vmatprep.subr.bf16.mxu0 %v3673
    %3989 = vmatpush1.bf16.msra.mxu0 %v3672
    %3990 = vmatprep.subr.bf16.mxu0 %v3677
    %3991 = vmatpush1.bf16.msra.mxu0 %v3676
    %3992 = vmatprep.subr.bf16.mxu0 %v3681
    %3993 = vmatpush1.bf16.msra.mxu0 %v3680
    %3994 = vmatprep.subr.bf16.mxu0 %v3685
    %3995 = vmatpush1.bf16.msra.mxu0 %v3684
    %3996 = vmatprep.subr.bf16.mxu0 %v3689
    %3997 = vmatpush1.bf16.msra.mxu0 %v3688
    %3998 = vmatprep.subr.bf16.mxu0 %v3693
    %3999 = vmatpush1.bf16.msra.mxu0 %v3692
    %4000 = vmatprep.mubr.bf16.mxu0 %v3093
    %4001 = vmatmul.mubr.bf16.gmra.mrb[0].mxu0 %v3092
    %v4002 = vpop.f32.mrb[0].mxu0
    %v4003 = vadd.f32 %v3237, %v4002
    %v4004 = vpop.f32.mrb[0].mxu0
    %v4005 = vadd.f32 %v3241, %v4004
    %v4006 = vpop.f32.mrb[0].mxu0
    %v4007 = vpop.f32.mrb[0].mxu0
    %4008 = vdwg.mxu0
    %4009 = vmatprep.subr.bf16.mxu0 %v3697
    %4010 = vmatpush1.bf16.msra.mxu0 %v3696
    %4011 = vmatprep.subr.bf16.mxu0 %v3701
    %4012 = vmatpush1.bf16.msra.mxu0 %v3700
    %4013 = vmatprep.subr.bf16.mxu0 %v3705
    %4014 = vmatpush1.bf16.msra.mxu0 %v3704
    %4015 = vmatprep.subr.bf16.mxu0 %v3709
    %4016 = vmatpush1.bf16.msra.mxu0 %v3708
    %4017 = vmatprep.subr.bf16.mxu0 %v3713
    %4018 = vmatpush1.bf16.msra.mxu0 %v3712
    %4019 = vmatprep.subr.bf16.mxu0 %v3717
    %4020 = vmatpush1.bf16.msra.mxu0 %v3716
    %4021 = vmatprep.subr.bf16.mxu0 %v3721
    %4022 = vmatpush1.bf16.msra.mxu0 %v3720
    %4023 = vmatprep.subr.bf16.mxu0 %v3725
    %4024 = vmatpush1.bf16.msra.mxu0 %v3724
    %4025 = vmatprep.subr.bf16.mxu0 %v3729
    %4026 = vmatpush1.bf16.msra.mxu0 %v3728
    %4027 = vmatprep.subr.bf16.mxu0 %v3733
    %4028 = vmatpush1.bf16.msra.mxu0 %v3732
    %4029 = vmatprep.subr.bf16.mxu0 %v3737
    %4030 = vmatpush1.bf16.msra.mxu0 %v3736
    %4031 = vmatprep.subr.bf16.mxu0 %v3741
    %4032 = vmatpush1.bf16.msra.mxu0 %v3740
    %4033 = vmatprep.subr.bf16.mxu0 %v3745
    %4034 = vmatpush1.bf16.msra.mxu0 %v3744
    %4035 = vmatprep.subr.bf16.mxu0 %v3749
    %4036 = vmatpush1.bf16.msra.mxu0 %v3748
    %4037 = vmatprep.subr.bf16.mxu0 %v3753
    %4038 = vmatpush1.bf16.msra.mxu0 %v3752
    %4039 = vmatprep.subr.bf16.mxu0 %v3757
    %4040 = vmatpush1.bf16.msra.mxu0 %v3756
    %4041 = vmatprep.mubr.bf16.mxu0 %v3095
    %4042 = vmatmul.mubr.bf16.gmra.mrb[0].mxu0 %v3094
    %v4043 = vpop.f32.mrb[0].mxu0
    %v4044 = vadd.f32 %v4003, %v4043
    %v4045 = vpop.f32.mrb[0].mxu0
    %v4046 = vadd.f32 %v4005, %v4045
    %v4047 = vpop.f32.mrb[0].mxu0
    %v4048 = vpop.f32.mrb[0].mxu0
    %4049 = vdwg.mxu0
    %v4050 = vmax.f32 %v3962, 0.0
    %v4051 = vmax.f32 %v3964, 0.0
    %v4052 = vmax.f32 %v4044, 0.0
    %v4053 = vmax.f32 %v4046, 0.0
    %s4054 = sadd.s32 %s122, 57701188
    %v4055 = vstv %s4054
    %v4056 = vadd.s32 %v4055, %v1895
    %v4057 = vadd.s32 %v4055, %v1896
    %v4058 = vadd.s32 %v4055, %v1897
    %v4059 = vadd.s32 %v4055, %v1898
    %v4060 = vshrl.u32 %v4056, 16
    %v4061 = vshrl.u32 %v4057, 16
    %v4062 = vshrl.u32 %v4058, 16
    %v4063 = vshrl.u32 %v4059, 16
    %v4064 = vxor.u32 %v4056, %v4060
    %v4065 = vxor.u32 %v4057, %v4061
    %v4066 = vxor.u32 %v4058, %v4062
    %v4067 = vxor.u32 %v4059, %v4063
    %v4068 = vmul.u32 %v4064, 2146121005
    %v4069 = vmul.u32 %v4065, 2146121005
    %v4070 = vmul.u32 %v4066, 2146121005
    %v4071 = vmul.u32 %v4067, 2146121005
    %v4072 = vshrl.u32 %v4068, 15
    %v4073 = vshrl.u32 %v4069, 15
    %v4074 = vshrl.u32 %v4070, 15
    %v4075 = vshrl.u32 %v4071, 15
    %v4076 = vxor.u32 %v4068, %v4072
    %v4077 = vxor.u32 %v4069, %v4073
    %v4078 = vxor.u32 %v4070, %v4074
    %v4079 = vxor.u32 %v4071, %v4075
    %v4080 = vmul.u32 %v4076, 2221713035
    %v4081 = vmul.u32 %v4077, 2221713035
    %v4082 = vmul.u32 %v4078, 2221713035
    %v4083 = vmul.u32 %v4079, 2221713035
    %v4084 = vshrl.u32 %v4080, 16
    %v4085 = vshrl.u32 %v4081, 16
    %v4086 = vshrl.u32 %v4082, 16
    %v4087 = vshrl.u32 %v4083, 16
    %v4088 = vxor.u32 %v4080, %v4084
    %v4089 = vxor.u32 %v4081, %v4085
    %v4090 = vxor.u32 %v4082, %v4086
    %v4091 = vxor.u32 %v4083, %v4087
    %v4092 = vshrl.u32 %v4088, 9
    %v4093 = vshrl.u32 %v4089, 9
    %v4094 = vshrl.u32 %v4090, 9
    %v4095 = vshrl.u32 %v4091, 9
    %v4096 = vcvt.s32.f32 %v4092
    %v4097 = vcvt.s32.f32 %v4093
    %v4098 = vcvt.s32.f32 %v4094
    %v4099 = vcvt.s32.f32 %v4095
    %v4100 = vmul.f32 %v4096, 1.1920929e-07
    %v4101 = vmul.f32 %v4097, 1.1920929e-07
    %v4102 = vmul.f32 %v4098, 1.1920929e-07
    %v4103 = vmul.f32 %v4099, 1.1920929e-07
    %s4104 = sld [smem:[#allocation3 + $0x3]]
    %v4105 = vadd.f32 %v4100, 1e-07
    %v4106 = vadd.f32 %v4101, 1e-07
    %v4107 = vadd.f32 %v4102, 1e-07
    %v4108 = vadd.f32 %v4103, 1e-07
    %v4109 = vsub.f32 1.0, %v4100
    %v4110 = vsub.f32 1.0, %v4101
    %v4111 = vsub.f32 1.0, %v4102
    %v4112 = vsub.f32 1.0, %v4103
    %v4113 = vadd.f32 %v4109, 1e-07
    %v4114 = vadd.f32 %v4110, 1e-07
    %v4115 = vadd.f32 %v4111, 1e-07
    %v4116 = vadd.f32 %v4112, 1e-07
    %v4117 = vmul.f32 %v4105, %v4105
    %v4118 = vmul.f32 %v4106, %v4106
    %v4119 = vmul.f32 %v4107, %v4107
    %v4120 = vmul.f32 %v4108, %v4108
    %v4121 = vmul.f32 %v4117, %v4117
    %v4122 = vmul.f32 %v4118, %v4118
    %v4123 = vmul.f32 %v4119, %v4119
    %v4124 = vmul.f32 %v4120, %v4120
    %v4125 = vmul.f32 %v4121, %v4121
    %v4126 = vmul.f32 %v4122, %v4122
    %v4127 = vmul.f32 %v4123, %v4123
    %v4128 = vmul.f32 %v4124, %v4124
    %v4129 = vmul.f32 %v4125, %v4117
    %v4130 = vmul.f32 %v4126, %v4118
    %v4131 = vmul.f32 %v4127, %v4119
    %v4132 = vmul.f32 %v4128, %v4120
    %v4133 = vmul.f32 %v4113, %v4113
    %v4134 = vmul.f32 %v4114, %v4114
    %v4135 = vmul.f32 %v4115, %v4115
    %v4136 = vmul.f32 %v4116, %v4116
    %v4137 = vmul.f32 %v4133, %v4133
    %v4138 = vmul.f32 %v4134, %v4134
    %v4139 = vmul.f32 %v4135, %v4135
    %v4140 = vmul.f32 %v4136, %v4136
    %v4141 = vmul.f32 %v4137, %v4137
    %v4142 = vmul.f32 %v4138, %v4138
    %v4143 = vmul.f32 %v4139, %v4139
    %v4144 = vmul.f32 %v4140, %v4140
    %v4145 = vmul.f32 %v4141, %v4133
    %v4146 = vmul.f32 %v4142, %v4134
    %v4147 = vmul.f32 %v4143, %v4135
    %v4148 = vmul.f32 %v4144, %v4136
    %v4149 = vstv %s4104
    %v4150 = vmul.f32 %v4149, %v4145
    %v4151 = vmul.f32 %v4149, %v4146
    %v4152 = vmul.f32 %v4149, %v4147
    %v4153 = vmul.f32 %v4149, %v4148
    %v4154 = vadd.f32 %v4129, %v4150
    %v4155 = vadd.f32 %v4130, %v4151
    %v4156 = vadd.f32 %v4131, %v4152
    %v4157 = vadd.f32 %v4132, %v4153
    %v4158 = vrcp.pop %v4154
    %v4159 = vmul.f32 %v4150, %v4158
    %v4160 = vrcp.pop %v4155
    %v4161 = vmul.f32 %v4151, %v4160
    %v4162 = vrcp.pop %v4156
    %v4163 = vmul.f32 %v4152, %v4162
    %v4164 = vrcp.pop %v4157
    %v4165 = vmul.f32 %v4153, %v4164
    %v4166 = vmul.f32 %v4050, %v4159
    %v4167 = vmul.f32 %v4051, %v4161
    %v4168 = vmul.f32 %v4052, %v4163
    %v4169 = vmul.f32 %v4053, %v4165
    %v4170 = vpack.c.bf16 %v4166, %v4166
    %v4171 = vpack.c.bf16 %v4167, %v4167
    %v4172 = vpack.c.bf16 %v4168, %v4168
    %v4173 = vpack.c.bf16 %v4169, %v4169
    %v4174 = vld [vmem:[#allocation13] sm:$0xf]
    %v4175 = vld [vmem:[#allocation13 + $0x4] sm:$0xf]
    %v4176 = vld [vmem:[#allocation13 + $0x8] sm:$0xf]
    %v4177 = vld [vmem:[#allocation13 + $0xc] sm:$0xf]
    %v4178 = vld [vmem:[#allocation13 + $0x10] sm:$0xf]
    %v4179 = vld [vmem:[#allocation13 + $0x14] sm:$0xf]
    %v4180 = vld [vmem:[#allocation13 + $0x18] sm:$0xf]
    %v4181 = vld [vmem:[#allocation13 + $0x1c] sm:$0xf]
    %v4182 = vld [vmem:[#allocation13 + $0x20] sm:$0xf]
    %v4183 = vld [vmem:[#allocation13 + $0x24] sm:$0xf]
    %v4184 = vld [vmem:[#allocation13 + $0x28] sm:$0xf]
    %v4185 = vld [vmem:[#allocation13 + $0x2c] sm:$0xf]
    %v4186 = vld [vmem:[#allocation13 + $0x30] sm:$0xf]
    %v4187 = vld [vmem:[#allocation13 + $0x34] sm:$0xf]
    %v4188 = vld [vmem:[#allocation13 + $0x38] sm:$0xf]
    %v4189 = vld [vmem:[#allocation13 + $0x3c] sm:$0xf]
    %v4190 = vld [vmem:[#allocation13 + $0x40] sm:$0xf]
    %v4191 = vld [vmem:[#allocation13 + $0x44] sm:$0xf]
    %v4192 = vld [vmem:[#allocation13 + $0x48] sm:$0xf]
    %v4193 = vld [vmem:[#allocation13 + $0x4c] sm:$0xf]
    %v4194 = vld [vmem:[#allocation13 + $0x50] sm:$0xf]
    %v4195 = vld [vmem:[#allocation13 + $0x54] sm:$0xf]
    %v4196 = vld [vmem:[#allocation13 + $0x58] sm:$0xf]
    %v4197 = vld [vmem:[#allocation13 + $0x5c] sm:$0xf]
    %v4198 = vld [vmem:[#allocation13 + $0x60] sm:$0xf]
    %v4199 = vld [vmem:[#allocation13 + $0x64] sm:$0xf]
    %v4200 = vld [vmem:[#allocation13 + $0x68] sm:$0xf]
    %v4201 = vld [vmem:[#allocation13 + $0x6c] sm:$0xf]
    %v4202 = vld [vmem:[#allocation13 + $0x70] sm:$0xf]
    %v4203 = vld [vmem:[#allocation13 + $0x74] sm:$0xf]
    %v4204 = vld [vmem:[#allocation13 + $0x78] sm:$0xf]
    %v4205 = vld [vmem:[#allocation13 + $0x7c] sm:$0xf]
    %v4206 = vld [vmem:[#allocation13 + $0x80] sm:$0xf]
    %v4207 = vld [vmem:[#allocation13 + $0x84] sm:$0xf]
    %v4208 = vld [vmem:[#allocation13 + $0x88] sm:$0xf]
    %v4209 = vld [vmem:[#allocation13 + $0x8c] sm:$0xf]
    %v4210 = vld [vmem:[#allocation13 + $0x90] sm:$0xf]
    %v4211 = vld [vmem:[#allocation13 + $0x94] sm:$0xf]
    %v4212 = vld [vmem:[#allocation13 + $0x98] sm:$0xf]
    %v4213 = vld [vmem:[#allocation13 + $0x9c] sm:$0xf]
    %v4214 = vld [vmem:[#allocation13 + $0xa0] sm:$0xf]
    %v4215 = vld [vmem:[#allocation13 + $0xa4] sm:$0xf]
    %v4216 = vld [vmem:[#allocation13 + $0xa8] sm:$0xf]
    %v4217 = vld [vmem:[#allocation13 + $0xac] sm:$0xf]
    %v4218 = vld [vmem:[#allocation13 + $0xb0] sm:$0xf]
    %v4219 = vld [vmem:[#allocation13 + $0xb4] sm:$0xf]
    %v4220 = vld [vmem:[#allocation13 + $0xb8] sm:$0xf]
    %v4221 = vld [vmem:[#allocation13 + $0xbc] sm:$0xf]
    %v4222 = vld [vmem:[#allocation13 + $0xc0] sm:$0xf]
    %v4223 = vld [vmem:[#allocation13 + $0xc4] sm:$0xf]
    %v4224 = vld [vmem:[#allocation13 + $0xc8] sm:$0xf]
    %v4225 = vld [vmem:[#allocation13 + $0xcc] sm:$0xf]
    %v4226 = vld [vmem:[#allocation13 + $0xd0] sm:$0xf]
    %v4227 = vld [vmem:[#allocation13 + $0xd4] sm:$0xf]
    %v4228 = vld [vmem:[#allocation13 + $0xd8] sm:$0xf]
    %v4229 = vld [vmem:[#allocation13 + $0xdc] sm:$0xf]
    %v4230 = vld [vmem:[#allocation13 + $0xe0] sm:$0xf]
    %v4231 = vld [vmem:[#allocation13 + $0xe4] sm:$0xf]
    %v4232 = vld [vmem:[#allocation13 + $0xe8] sm:$0xf]
    %v4233 = vld [vmem:[#allocation13 + $0xec] sm:$0xf]
    %v4234 = vld [vmem:[#allocation13 + $0xf0] sm:$0xf]
    %v4235 = vld [vmem:[#allocation13 + $0xf4] sm:$0xf]
    %v4236 = vld [vmem:[#allocation13 + $0xf8] sm:$0xf]
    %v4237 = vld [vmem:[#allocation13 + $0xfc] sm:$0xf]
    %v4238 = vld [vmem:[%s10] sm:$0x1]
    %v4240 = vlaneseq
    %v4241 = vshrl.u32 %v4240, 7
    %v4242 = vsub.s32 0, %v4241
    %v4243 = vrot.slane %v4238, %v4242
    %v4309 = vunpack.c.l.b16 %v4174
    %v4310 = vunpack.c.l.b16 %v4175
    %v4311 = vunpack.c.l.b16 %v4176
    %v4312 = vunpack.c.l.b16 %v4177
    %v4313 = vunpack.c.l.b16 %v4178
    %v4314 = vunpack.c.l.b16 %v4179
    %v4315 = vunpack.c.l.b16 %v4180
    %v4316 = vunpack.c.l.b16 %v4181
    %v4317 = vunpack.c.l.b16 %v4182
    %v4318 = vunpack.c.l.b16 %v4183
    %v4319 = vunpack.c.l.b16 %v4184
    %v4320 = vunpack.c.l.b16 %v4185
    %v4321 = vunpack.c.l.b16 %v4186
    %v4322 = vunpack.c.l.b16 %v4187
    %v4323 = vunpack.c.l.b16 %v4188
    %v4324 = vunpack.c.l.b16 %v4189
    %v4325 = vunpack.c.l.b16 %v4190
    %v4326 = vunpack.c.l.b16 %v4191
    %v4327 = vunpack.c.l.b16 %v4192
    %v4328 = vunpack.c.l.b16 %v4193
    %v4329 = vunpack.c.l.b16 %v4194
    %v4330 = vunpack.c.l.b16 %v4195
    %v4331 = vunpack.c.l.b16 %v4196
    %v4332 = vunpack.c.l.b16 %v4197
    %v4333 = vunpack.c.l.b16 %v4198
    %v4334 = vunpack.c.l.b16 %v4199
    %v4335 = vunpack.c.l.b16 %v4200
    %v4336 = vunpack.c.l.b16 %v4201
    %v4337 = vunpack.c.l.b16 %v4202
    %v4338 = vunpack.c.l.b16 %v4203
    %v4339 = vunpack.c.l.b16 %v4204
    %v4340 = vunpack.c.l.b16 %v4205
    %v4341 = vunpack.c.l.b16 %v4206
    %v4342 = vunpack.c.l.b16 %v4207
    %v4343 = vunpack.c.l.b16 %v4208
    %v4344 = vunpack.c.l.b16 %v4209
    %v4345 = vunpack.c.l.b16 %v4210
    %v4346 = vunpack.c.l.b16 %v4211
    %v4347 = vunpack.c.l.b16 %v4212
    %v4348 = vunpack.c.l.b16 %v4213
    %v4349 = vunpack.c.l.b16 %v4214
    %v4350 = vunpack.c.l.b16 %v4215
    %v4351 = vunpack.c.l.b16 %v4216
    %v4352 = vunpack.c.l.b16 %v4217
    %v4353 = vunpack.c.l.b16 %v4218
    %v4354 = vunpack.c.l.b16 %v4219
    %v4355 = vunpack.c.l.b16 %v4220
    %v4356 = vunpack.c.l.b16 %v4221
    %v4357 = vunpack.c.l.b16 %v4222
    %v4358 = vunpack.c.l.b16 %v4223
    %v4359 = vunpack.c.l.b16 %v4224
    %v4360 = vunpack.c.l.b16 %v4225
    %v4361 = vunpack.c.l.b16 %v4226
    %v4362 = vunpack.c.l.b16 %v4227
    %v4363 = vunpack.c.l.b16 %v4228
    %v4364 = vunpack.c.l.b16 %v4229
    %v4365 = vunpack.c.l.b16 %v4230
    %v4366 = vunpack.c.l.b16 %v4231
    %v4367 = vunpack.c.l.b16 %v4232
    %v4368 = vunpack.c.l.b16 %v4233
    %v4369 = vunpack.c.l.b16 %v4234
    %v4370 = vunpack.c.l.b16 %v4235
    %v4371 = vunpack.c.l.b16 %v4236
    %v4372 = vunpack.c.l.b16 %v4237
    %v4373 = vpack.c.b16 %v4310, %v4309
    %v4374 = vpack.c.b16 %v4312, %v4311
    %v4375 = vpack.c.b16 %v4314, %v4313
    %v4376 = vpack.c.b16 %v4316, %v4315
    %v4377 = vpack.c.b16 %v4318, %v4317
    %v4378 = vpack.c.b16 %v4320, %v4319
    %v4379 = vpack.c.b16 %v4322, %v4321
    %v4380 = vpack.c.b16 %v4324, %v4323
    %v4381 = vpack.c.b16 %v4326, %v4325
    %v4382 = vpack.c.b16 %v4328, %v4327
    %v4383 = vpack.c.b16 %v4330, %v4329
    %v4384 = vpack.c.b16 %v4332, %v4331
    %v4385 = vpack.c.b16 %v4334, %v4333
    %v4386 = vpack.c.b16 %v4336, %v4335
    %v4387 = vpack.c.b16 %v4338, %v4337
    %v4388 = vpack.c.b16 %v4340, %v4339
    %v4389 = vpack.c.b16 %v4342, %v4341
    %v4390 = vpack.c.b16 %v4344, %v4343
    %v4391 = vpack.c.b16 %v4346, %v4345
    %v4392 = vpack.c.b16 %v4348, %v4347
    %v4393 = vpack.c.b16 %v4350, %v4349
    %v4394 = vpack.c.b16 %v4352, %v4351
    %v4395 = vpack.c.b16 %v4354, %v4353
    %v4396 = vpack.c.b16 %v4356, %v4355
    %v4397 = vpack.c.b16 %v4358, %v4357
    %v4398 = vpack.c.b16 %v4360, %v4359
    %v4399 = vpack.c.b16 %v4362, %v4361
    %v4400 = vpack.c.b16 %v4364, %v4363
    %v4401 = vpack.c.b16 %v4366, %v4365
    %v4402 = vpack.c.b16 %v4368, %v4367
    %v4403 = vpack.c.b16 %v4370, %v4369
    %v4404 = vpack.c.b16 %v4372, %v4371
    %4437 = vmatprep.subr.bf16.mxu0 0
    %4438 = vmatpush1.bf16.msra.mxu0 %v4373
    %4439 = vmatprep.subr.bf16.mxu0 0
    %4440 = vmatpush1.bf16.msra.mxu0 %v4374
    %4441 = vmatprep.subr.bf16.mxu0 0
    %4442 = vmatpush1.bf16.msra.mxu0 %v4375
    %4443 = vmatprep.subr.bf16.mxu0 0
    %4444 = vmatpush1.bf16.msra.mxu0 %v4376
    %4445 = vmatprep.subr.bf16.mxu0 0
    %4446 = vmatpush1.bf16.msra.mxu0 %v4377
    %4447 = vmatprep.subr.bf16.mxu0 0
    %4448 = vmatpush1.bf16.msra.mxu0 %v4378
    %4449 = vmatprep.subr.bf16.mxu0 0
    %4450 = vmatpush1.bf16.msra.mxu0 %v4379
    %4451 = vmatprep.subr.bf16.mxu0 0
    %4452 = vmatpush1.bf16.msra.mxu0 %v4380
    %4453 = vmatprep.subr.bf16.mxu0 0
    %4454 = vmatpush1.bf16.msra.mxu0 %v4381
    %4455 = vmatprep.subr.bf16.mxu0 0
    %4456 = vmatpush1.bf16.msra.mxu0 %v4382
    %4457 = vmatprep.subr.bf16.mxu0 0
    %4458 = vmatpush1.bf16.msra.mxu0 %v4383
    %4459 = vmatprep.subr.bf16.mxu0 0
    %4460 = vmatpush1.bf16.msra.mxu0 %v4384
    %4461 = vmatprep.subr.bf16.mxu0 0
    %4462 = vmatpush1.bf16.msra.mxu0 %v4385
    %4463 = vmatprep.subr.bf16.mxu0 0
    %4464 = vmatpush1.bf16.msra.mxu0 %v4386
    %4465 = vmatprep.subr.bf16.mxu0 0
    %4466 = vmatpush1.bf16.msra.mxu0 %v4387
    %4467 = vmatprep.subr.bf16.mxu0 0
    %4468 = vmatpush1.bf16.msra.mxu0 %v4388
    %4469 = vmatprep.mubr.bf16.mxu0 %v4171
    %4470 = vmatmul.mubr.bf16.gmra.mrb[0].mxu0 %v4170
    %v4471 = vpop.f32.mrb[0].mxu0
    %v4472 = vadd.f32 %v4243, %v4471
    %v4473 = vpop.f32.mrb[0].mxu0
    %v4474 = vpop.f32.mrb[0].mxu0
    %v4475 = vpop.f32.mrb[0].mxu0
    %4476 = vdwg.mxu0
    %4477 = vmatprep.subr.bf16.mxu0 0
    %4478 = vmatpush1.bf16.msra.mxu0 %v4389
    %4479 = vmatprep.subr.bf16.mxu0 0
    %4480 = vmatpush1.bf16.msra.mxu0 %v4390
    %4481 = vmatprep.subr.bf16.mxu0 0
    %4482 = vmatpush1.bf16.msra.mxu0 %v4391
    %4483 = vmatprep.subr.bf16.mxu0 0
    %4484 = vmatpush1.bf16.msra.mxu0 %v4392
    %4485 = vmatprep.subr.bf16.mxu0 0
    %4486 = vmatpush1.bf16.msra.mxu0 %v4393
    %4487 = vmatprep.subr.bf16.mxu0 0
    %4488 = vmatpush1.bf16.msra.mxu0 %v4394
    %4489 = vmatprep.subr.bf16.mxu0 0
    %4490 = vmatpush1.bf16.msra.mxu0 %v4395
    %4491 = vmatprep.subr.bf16.mxu0 0
    %4492 = vmatpush1.bf16.msra.mxu0 %v4396
    %4493 = vmatprep.subr.bf16.mxu0 0
    %4494 = vmatpush1.bf16.msra.mxu0 %v4397
    %4495 = vmatprep.subr.bf16.mxu0 0
    %4496 = vmatpush1.bf16.msra.mxu0 %v4398
    %4497 = vmatprep.subr.bf16.mxu0 0
    %4498 = vmatpush1.bf16.msra.mxu0 %v4399
    %4499 = vmatprep.subr.bf16.mxu0 0
    %4500 = vmatpush1.bf16.msra.mxu0 %v4400
    %4501 = vmatprep.subr.bf16.mxu0 0
    %4502 = vmatpush1.bf16.msra.mxu0 %v4401
    %4503 = vmatprep.subr.bf16.mxu0 0
    %4504 = vmatpush1.bf16.msra.mxu0 %v4402
    %4505 = vmatprep.subr.bf16.mxu0 0
    %4506 = vmatpush1.bf16.msra.mxu0 %v4403
    %4507 = vmatprep.subr.bf16.mxu0 0
    %4508 = vmatpush1.bf16.msra.mxu0 %v4404
    %4509 = vmatprep.mubr.bf16.mxu0 %v4173
    %4510 = vmatmul.mubr.bf16.gmra.mrb[0].mxu0 %v4172
    %v4511 = vpop.f32.mrb[0].mxu0
    %v4512 = vadd.f32 %v4472, %v4511
    %v4513 = vpop.f32.mrb[0].mxu0
    %v4514 = vpop.f32.mrb[0].mxu0
    %v4515 = vpop.f32.mrb[0].mxu0
    %4516 = vdwg.mxu0
    %vm4517 = vcmp.lt.s32.totalorder %v131, 10
    %v4518 = vsel %vm4517, %v4512, -1e+30
    %4519 = vmax.xlane.f32.xlu0 %v4518
    %v4520 = vpop.xlane.xlu0 %4519
    %v4521 = vsub.f32 %v4518, %v4520
    %v4522 = vmul.f32 %v4521, 1.442695
    %v4523 = vpow.pop %v4522
    %4524 = vadd.xlane.f32.xlu0 %v4523
    %v4525 = vpop.xlane.xlu0 %4524
    %v4526 = vrcp.pop %v4525
    %v4527 = vmul.f32 %v4523, %v4526
    %4528 = vst [vmem:[#allocation14] sm:$0xff] %v4527
    // Predicated region
    $region70: #{tpu_custom_call.1} parent=1 // pred_check
      _
    $region71: #{tpu_custom_call.1} parent=1 // pred_check_branch
      %4530 = sbr.rel (0) target = $region73
    $region72: #{tpu_custom_call.1} parent=1 // pred_region
      %s4532 = ssub.s32 128, 128
      %4533 = vsyncadd [#allocation5], %s4532
      %s4535 = sshll.u32 [#allocation14], 4
      %s4536 = int_to_ptr.vmem [resolvable:$true] %s4535
      %4538 = dma.vmem_to_hbm [thread:$0]  %s4536, 128, %s11, [#allocation5]
    $region73: #{tpu_custom_call.1} parent=1 // pred_fallthru
      _
    // Predicated region
    $region74: #{tpu_custom_call.1} parent=1 // pred_check
      _
    $region75: #{tpu_custom_call.1} parent=1 // pred_check_branch
      %4540 = sbr.rel (0) target = $region77
    $region76: #{tpu_custom_call.1} parent=1 // pred_region
      %4541 = dma.done [#allocation5], 128
    $region77: #{tpu_custom_call.1} parent=1 // pred_fallthru
      _
    %4542 = vsyncpa [#allocation4], 1
    %4543 = vsyncpa [#allocation9], 1
    %4544 = vsyncpa [#allocation12], 1
    %4545 = vsyncpa [#allocation5], 1
    %4546 = vsyncpa [#allocation6], 1

</llo_original>
